<compile_context>
chip_gen: v7x
topology: tpu7x:2x2x1
jax: 0.10.0
libtpu: 0.0.40
codegen_flags: <defaults>
</compile_context>

<pallas_src>
import jax
import jax.numpy as jnp
from jax.experimental import pallas as pl
from jax.experimental.pallas import tpu as pltpu


# ----------------------------------------------------------------------------
# Fused forward kernel: all 5 linears + ReLUs + reparameterization in one call
# ----------------------------------------------------------------------------
def _vae_fused_kernel(x_ref, eps_ref,
                      w1_ref, b1_ref,
                      wmu_ref, bmu_ref,
                      wsg_ref, bsg_ref,
                      wlat_ref, blat_ref,
                      wrec_ref, brec_ref,
                      o_ref):
    x = x_ref[...]                                                   # (bn, 784)

    # encoder: h = relu(x @ W1 + b1)
    h = jnp.dot(x, w1_ref[...], preferred_element_type=jnp.float32) + b1_ref[...]
    h = jnp.maximum(h, 0.0)                                          # (bn, 500)

    # mu / sigma heads
    mu = jnp.dot(h, wmu_ref[...], preferred_element_type=jnp.float32) + bmu_ref[...]
    sg = jnp.dot(h, wsg_ref[...], preferred_element_type=jnp.float32) + bsg_ref[...]

    # reparameterization: z = mu + sigma * eps
    z = mu + sg * eps_ref[...]                                       # (bn, 5)

    # decoder: relu(z @ Wlat + blat) -> relu(. @ Wrec + brec)
    h2 = jnp.dot(z, wlat_ref[...], preferred_element_type=jnp.float32) + blat_ref[...]
    h2 = jnp.maximum(h2, 0.0)                                        # (bn, 500)

    rec = jnp.dot(h2, wrec_ref[...], preferred_element_type=jnp.float32) + brec_ref[...]
    rec = jnp.maximum(rec, 0.0)                                      # (bn, 784)

    o_ref[...] = rec.astype(o_ref.dtype)


def vae_forward(params, x, eps):
    """x: (N, C, H, W) (flattened to 784 features), eps: (N, latent)."""
    N = x.shape[0]
    xf = x.reshape(N, -1).astype(jnp.float32)                        # nn.Flatten(start_dim=1)
    d_in = xf.shape[1]
    hid = params["w1"].shape[1]
    lat = params["wmu"].shape[1]
    d_out = params["wrec"].shape[1]

    # Batch tile: whole batch in one block if it is small / not a multiple of 8,
    # otherwise multiple-of-8 tiles so several grid steps can shard across TCs.
    bn = N
    if N > 8 and N % 8 == 0:
        bn = 8
        while bn * 2 <= min(N, 512) and N % (bn * 2) == 0:
            bn *= 2
    grid = (N // bn,)

    full = lambda shape: pl.BlockSpec(shape, lambda b: tuple(0 for _ in shape))

    return pl.pallas_call(
        _vae_fused_kernel,
        out_shape=jax.ShapeDtypeStruct((N, d_out), jnp.float32),
        grid=grid,
        in_specs=[
            pl.BlockSpec((bn, d_in), lambda b: (b, 0)),     # x
            pl.BlockSpec((bn, lat), lambda b: (b, 0)),      # eps
            full((d_in, hid)), full((1, hid)),              # W1, b1
            full((hid, lat)), full((1, lat)),               # Wmu, bmu
            full((hid, lat)), full((1, lat)),               # Wsigma, bsigma
            full((lat, hid)), full((1, hid)),               # Wlat, blat
            full((hid, d_out)), full((1, d_out)),           # Wrec, brec
        ],
        out_specs=pl.BlockSpec((bn, d_out), lambda b: (b, 0)),
        compiler_params=pltpu.CompilerParams(
            dimension_semantics=("parallel",)),
    )(xf, eps.astype(jnp.float32),
      params["w1"], params["b1"],
      params["wmu"], params["bmu"],
      params["wsg"], params["bsg"],
      params["wlat"], params["blat"],
      params["wrec"], params["brec"])


# ----------------------------------------------------------------------------
# Parameters (deterministic synthetic init matching nn.Linear's default;
# weights stored PRE-TRANSPOSED to (in_features, out_features))
# ----------------------------------------------------------------------------
def init_params(key, hidden_units=500, latent=5, img_feats=28 * 28):
    def lin(key, in_f, out_f):
        kw, kb = jax.random.split(key)
        bound = 1.0 / jnp.sqrt(float(in_f))
        w = jax.random.uniform(kw, (in_f, out_f), jnp.float32, -bound, bound)
        b = jax.random.uniform(kb, (1, out_f), jnp.float32, -bound, bound)
        return w, b

    k1, k2, k3, k4, k5 = jax.random.split(key, 5)
    p = {}
    p["w1"], p["b1"] = lin(k1, img_feats, hidden_units)      # img_to_hiden
    p["wmu"], p["bmu"] = lin(k2, hidden_units, latent)       # hiden_to_mu
    p["wsg"], p["bsg"] = lin(k3, hidden_units, latent)       # hiden_to_sigma
    p["wlat"], p["blat"] = lin(k4, latent, hidden_units)     # latent_to_hiden
    p["wrec"], p["brec"] = lin(k5, hidden_units, img_feats)  # hiden_to_rec_img
    return p


if __name__ == "__main__":
    key = jax.random.PRNGKey(0)
    pkey, xkey, ekey = jax.random.split(key, 3)

    hidden_units, latent = 500, 5
    params = init_params(pkey, hidden_units, latent)

    # nn.Linear(28*28, ...) after Flatten(start_dim=1) implies 28x28 images.
    N = 2
    x = jax.random.normal(xkey, (N, 1, 28, 28), jnp.float32)
    # torch.randn_like(sigma) -> explicit stateless eps (JAX RNG convention).
    eps = jax.random.normal(ekey, (N, latent), jnp.float32)

    fwd = jax.jit(vae_forward)
    out = jax.block_until_ready(fwd(params, x, eps))

    assert out.shape == (N, 28 * 28)
    assert bool(jnp.all(jnp.isfinite(out)))
    assert bool(jnp.all(out >= 0.0))   # final ReLU
    print("KERNEL_OK")
</pallas_src>

<mosaic_0001>
module attributes {stable_mosaic.version = 11 : i64} {
  func.func @_vae_fused_kernel(%arg0: i32, %arg1: memref<2x784xf32, #tpu.memory_space<vmem>>, %arg2: memref<2x5xf32, #tpu.memory_space<vmem>>, %arg3: memref<784x500xf32, #tpu.memory_space<vmem>>, %arg4: memref<1x500xf32, #tpu.memory_space<vmem>>, %arg5: memref<500x5xf32, #tpu.memory_space<vmem>>, %arg6: memref<1x5xf32, #tpu.memory_space<vmem>>, %arg7: memref<500x5xf32, #tpu.memory_space<vmem>>, %arg8: memref<1x5xf32, #tpu.memory_space<vmem>>, %arg9: memref<5x500xf32, #tpu.memory_space<vmem>>, %arg10: memref<1x500xf32, #tpu.memory_space<vmem>>, %arg11: memref<500x784xf32, #tpu.memory_space<vmem>>, %arg12: memref<1x784xf32, #tpu.memory_space<vmem>>, %arg13: memref<2x784xf32, #tpu.memory_space<vmem>>) attributes {dimension_semantics = [#tpu.dimension_semantics<parallel>], iteration_bounds = array<i64: 1>, scalar_prefetch = 0 : i64, scratch_operands = 0 : i64, tpu.core_type = #tpu.core_type<tc>, window_params = [{transform_indices = @transform_0, window_bounds = array<i64: 2, 784>}, {transform_indices = @transform_1, window_bounds = array<i64: 2, 5>}, {pipeline_mode = #tpu.pipeline_mode<synchronous>, transform_indices = @transform_2, window_bounds = array<i64: 784, 500>}, {pipeline_mode = #tpu.pipeline_mode<synchronous>, transform_indices = @transform_3, window_bounds = array<i64: 1, 500>}, {pipeline_mode = #tpu.pipeline_mode<synchronous>, transform_indices = @transform_4, window_bounds = array<i64: 500, 5>}, {pipeline_mode = #tpu.pipeline_mode<synchronous>, transform_indices = @transform_5, window_bounds = array<i64: 1, 5>}, {pipeline_mode = #tpu.pipeline_mode<synchronous>, transform_indices = @transform_6, window_bounds = array<i64: 500, 5>}, {pipeline_mode = #tpu.pipeline_mode<synchronous>, transform_indices = @transform_7, window_bounds = array<i64: 1, 5>}, {pipeline_mode = #tpu.pipeline_mode<synchronous>, transform_indices = @transform_8, window_bounds = array<i64: 5, 500>}, {pipeline_mode = #tpu.pipeline_mode<synchronous>, transform_indices = @transform_9, window_bounds = array<i64: 1, 500>}, {pipeline_mode = #tpu.pipeline_mode<synchronous>, transform_indices = @transform_10, window_bounds = array<i64: 500, 784>}, {pipeline_mode = #tpu.pipeline_mode<synchronous>, transform_indices = @transform_11, window_bounds = array<i64: 1, 784>}, {transform_indices = @transform_12, window_bounds = array<i64: 2, 784>}]} {
    %c0 = arith.constant 0 : index
    %c0_0 = arith.constant 0 : index
    %0 = vector.load %arg1[%c0, %c0_0] : memref<2x784xf32, #tpu.memory_space<vmem>>, vector<2x784xf32>
    %c0_1 = arith.constant 0 : index
    %c0_2 = arith.constant 0 : index
    %1 = vector.load %arg3[%c0_1, %c0_2] : memref<784x500xf32, #tpu.memory_space<vmem>>, vector<784x500xf32>
    %cst = arith.constant dense<0.000000e+00> : vector<2x500xf32>
    %2 = tpu.matmul %0, %1, %cst {dimension_numbers = #tpu.dot_dimension_numbers<[1], [0], [0], [1], [0, 0, 1, 1], [], []>} : vector<2x784xf32>, vector<784x500xf32>, vector<2x500xf32> -> vector<2x500xf32>
    %c0_3 = arith.constant 0 : index
    %c0_4 = arith.constant 0 : index
    %3 = vector.load %arg4[%c0_3, %c0_4] : memref<1x500xf32, #tpu.memory_space<vmem>>, vector<1x500xf32>
    %4 = vector.broadcast %3 : vector<1x500xf32> to vector<2x500xf32>
    %5 = arith.addf %2, %4 : vector<2x500xf32>
    %cst_5 = arith.constant 0.000000e+00 : f32
    %6 = vector.broadcast %cst_5 : f32 to vector<2x500xf32>
    %7 = arith.maximumf %5, %6 : vector<2x500xf32>
    %c0_6 = arith.constant 0 : index
    %c0_7 = arith.constant 0 : index
    %8 = vector.load %arg5[%c0_6, %c0_7] : memref<500x5xf32, #tpu.memory_space<vmem>>, vector<500x5xf32>
    %cst_8 = arith.constant dense<0.000000e+00> : vector<2x5xf32>
    %9 = tpu.matmul %7, %8, %cst_8 {dimension_numbers = #tpu.dot_dimension_numbers<[1], [0], [0], [1], [0, 0, 1, 1], [], []>} : vector<2x500xf32>, vector<500x5xf32>, vector<2x5xf32> -> vector<2x5xf32>
    %c0_9 = arith.constant 0 : index
    %c0_10 = arith.constant 0 : index
    %10 = vector.load %arg6[%c0_9, %c0_10] : memref<1x5xf32, #tpu.memory_space<vmem>>, vector<1x5xf32>
    %11 = vector.broadcast %10 : vector<1x5xf32> to vector<2x5xf32>
    %12 = arith.addf %9, %11 : vector<2x5xf32>
    %c0_11 = arith.constant 0 : index
    %c0_12 = arith.constant 0 : index
    %13 = vector.load %arg7[%c0_11, %c0_12] : memref<500x5xf32, #tpu.memory_space<vmem>>, vector<500x5xf32>
    %cst_13 = arith.constant dense<0.000000e+00> : vector<2x5xf32>
    %14 = tpu.matmul %7, %13, %cst_13 {dimension_numbers = #tpu.dot_dimension_numbers<[1], [0], [0], [1], [0, 0, 1, 1], [], []>} : vector<2x500xf32>, vector<500x5xf32>, vector<2x5xf32> -> vector<2x5xf32>
    %c0_14 = arith.constant 0 : index
    %c0_15 = arith.constant 0 : index
    %15 = vector.load %arg8[%c0_14, %c0_15] : memref<1x5xf32, #tpu.memory_space<vmem>>, vector<1x5xf32>
    %16 = vector.broadcast %15 : vector<1x5xf32> to vector<2x5xf32>
    %17 = arith.addf %14, %16 : vector<2x5xf32>
    %c0_16 = arith.constant 0 : index
    %c0_17 = arith.constant 0 : index
    %18 = vector.load %arg2[%c0_16, %c0_17] : memref<2x5xf32, #tpu.memory_space<vmem>>, vector<2x5xf32>
    %19 = arith.mulf %17, %18 : vector<2x5xf32>
    %20 = arith.addf %12, %19 : vector<2x5xf32>
    %c0_18 = arith.constant 0 : index
    %c0_19 = arith.constant 0 : index
    %21 = vector.load %arg9[%c0_18, %c0_19] : memref<5x500xf32, #tpu.memory_space<vmem>>, vector<5x500xf32>
    %cst_20 = arith.constant dense<0.000000e+00> : vector<2x500xf32>
    %22 = tpu.matmul %20, %21, %cst_20 {dimension_numbers = #tpu.dot_dimension_numbers<[1], [0], [0], [1], [0, 0, 1, 1], [], []>} : vector<2x5xf32>, vector<5x500xf32>, vector<2x500xf32> -> vector<2x500xf32>
    %c0_21 = arith.constant 0 : index
    %c0_22 = arith.constant 0 : index
    %23 = vector.load %arg10[%c0_21, %c0_22] : memref<1x500xf32, #tpu.memory_space<vmem>>, vector<1x500xf32>
    %24 = vector.broadcast %23 : vector<1x500xf32> to vector<2x500xf32>
    %25 = arith.addf %22, %24 : vector<2x500xf32>
    %cst_23 = arith.constant 0.000000e+00 : f32
    %26 = vector.broadcast %cst_23 : f32 to vector<2x500xf32>
    %27 = arith.maximumf %25, %26 : vector<2x500xf32>
    %c0_24 = arith.constant 0 : index
    %c0_25 = arith.constant 0 : index
    %28 = vector.load %arg11[%c0_24, %c0_25] : memref<500x784xf32, #tpu.memory_space<vmem>>, vector<500x784xf32>
    %cst_26 = arith.constant dense<0.000000e+00> : vector<2x784xf32>
    %29 = tpu.matmul %27, %28, %cst_26 {dimension_numbers = #tpu.dot_dimension_numbers<[1], [0], [0], [1], [0, 0, 1, 1], [], []>} : vector<2x500xf32>, vector<500x784xf32>, vector<2x784xf32> -> vector<2x784xf32>
    %c0_27 = arith.constant 0 : index
    %c0_28 = arith.constant 0 : index
    %30 = vector.load %arg12[%c0_27, %c0_28] : memref<1x784xf32, #tpu.memory_space<vmem>>, vector<1x784xf32>
    %31 = vector.broadcast %30 : vector<1x784xf32> to vector<2x784xf32>
    %32 = arith.addf %29, %31 : vector<2x784xf32>
    %cst_29 = arith.constant 0.000000e+00 : f32
    %33 = vector.broadcast %cst_29 : f32 to vector<2x784xf32>
    %34 = arith.maximumf %32, %33 : vector<2x784xf32>
    %c0_30 = arith.constant 0 : index
    %c0_31 = arith.constant 0 : index
    %35 = vector.load %arg13[%c0_30, %c0_31] : memref<2x784xf32, #tpu.memory_space<vmem>>, vector<2x784xf32>
    tpu.vector_store %arg13[%c0_30, %c0_31], %34 {strides = array<i32>} : memref<2x784xf32, #tpu.memory_space<vmem>>, vector<2x784xf32>,
    return
  }
  func.func @transform_0(%arg0: i32) -> (i32, i32) {
    %c0_i32 = arith.constant 0 : i32
    %c0_i32_0 = arith.constant 0 : i32
    return %arg0, %c0_i32 : i32, i32
  }
  func.func @transform_1(%arg0: i32) -> (i32, i32) {
    %c0_i32 = arith.constant 0 : i32
    %c0_i32_0 = arith.constant 0 : i32
    return %arg0, %c0_i32 : i32, i32
  }
  func.func @transform_2(%arg0: i32) -> (i32, i32) {
    %c0_i32 = arith.constant 0 : i32
    %c0_i32_0 = arith.constant 0 : i32
    %c0_i32_1 = arith.constant 0 : i32
    return %c0_i32, %c0_i32_0 : i32, i32
  }
  func.func @transform_3(%arg0: i32) -> (i32, i32) {
    %c0_i32 = arith.constant 0 : i32
    %c0_i32_0 = arith.constant 0 : i32
    %c0_i32_1 = arith.constant 0 : i32
    return %c0_i32, %c0_i32_0 : i32, i32
  }
  func.func @transform_4(%arg0: i32) -> (i32, i32) {
    %c0_i32 = arith.constant 0 : i32
    %c0_i32_0 = arith.constant 0 : i32
    %c0_i32_1 = arith.constant 0 : i32
    return %c0_i32, %c0_i32_0 : i32, i32
  }
  func.func @transform_5(%arg0: i32) -> (i32, i32) {
    %c0_i32 = arith.constant 0 : i32
    %c0_i32_0 = arith.constant 0 : i32
    %c0_i32_1 = arith.constant 0 : i32
    return %c0_i32, %c0_i32_0 : i32, i32
  }
  func.func @transform_6(%arg0: i32) -> (i32, i32) {
    %c0_i32 = arith.constant 0 : i32
    %c0_i32_0 = arith.constant 0 : i32
    %c0_i32_1 = arith.constant 0 : i32
    return %c0_i32, %c0_i32_0 : i32, i32
  }
  func.func @transform_7(%arg0: i32) -> (i32, i32) {
    %c0_i32 = arith.constant 0 : i32
    %c0_i32_0 = arith.constant 0 : i32
    %c0_i32_1 = arith.constant 0 : i32
    return %c0_i32, %c0_i32_0 : i32, i32
  }
  func.func @transform_8(%arg0: i32) -> (i32, i32) {
    %c0_i32 = arith.constant 0 : i32
    %c0_i32_0 = arith.constant 0 : i32
    %c0_i32_1 = arith.constant 0 : i32
    return %c0_i32, %c0_i32_0 : i32, i32
  }
  func.func @transform_9(%arg0: i32) -> (i32, i32) {
    %c0_i32 = arith.constant 0 : i32
    %c0_i32_0 = arith.constant 0 : i32
    %c0_i32_1 = arith.constant 0 : i32
    return %c0_i32, %c0_i32_0 : i32, i32
  }
  func.func @transform_10(%arg0: i32) -> (i32, i32) {
    %c0_i32 = arith.constant 0 : i32
    %c0_i32_0 = arith.constant 0 : i32
    %c0_i32_1 = arith.constant 0 : i32
    return %c0_i32, %c0_i32_0 : i32, i32
  }
  func.func @transform_11(%arg0: i32) -> (i32, i32) {
    %c0_i32 = arith.constant 0 : i32
    %c0_i32_0 = arith.constant 0 : i32
    %c0_i32_1 = arith.constant 0 : i32
    return %c0_i32, %c0_i32_0 : i32, i32
  }
  func.func @transform_12(%arg0: i32) -> (i32, i32) {
    %c0_i32 = arith.constant 0 : i32
    %c0_i32_0 = arith.constant 0 : i32
    return %arg0, %c0_i32 : i32, i32
  }
}

</mosaic_0001>

<llo_original>
// kernel: vae_forward.1
$region0: #{vae_forward.1}
  #allocation0 [shape = 'u32[]', space=smem, size = 0x4, offset = 0x4, fixed_abs, tag = 'smem constant byte address 0x4 - core index']
  #allocation1 [shape = 'u32[144,128]{1,0:T(1,128)}', space=vmem, size = 0x12000, scoped, tag = 'internal scratch']
  %s0 = inlined_call_operand.vmem [shape: f32[2,784], index: 0, kind: input, shape index: {}]
  %s1 = inlined_call_operand.vmem [shape: f32[2,5], index: 1, kind: input, shape index: {}]
  %s2 = inlined_call_operand.vmem [shape: f32[784,500], index: 2, kind: input, shape index: {}]
  %s3 = inlined_call_operand.vmem [shape: f32[1,500], index: 3, kind: input, shape index: {}]
  %s4 = inlined_call_operand.vmem [shape: f32[500,5], index: 4, kind: input, shape index: {}]
  %s5 = inlined_call_operand.vmem [shape: f32[1,5], index: 5, kind: input, shape index: {}]
  %s6 = inlined_call_operand.vmem [shape: f32[500,5], index: 6, kind: input, shape index: {}]
  %s7 = inlined_call_operand.vmem [shape: f32[1,5], index: 7, kind: input, shape index: {}]
  %s8 = inlined_call_operand.vmem [shape: f32[5,500], index: 8, kind: input, shape index: {}]
  %s9 = inlined_call_operand.vmem [shape: f32[1,500], index: 9, kind: input, shape index: {}]
  %s10 = inlined_call_operand.vmem [shape: f32[500,784], index: 10, kind: input, shape index: {}]
  %s11 = inlined_call_operand.vmem [shape: f32[1,784], index: 11, kind: input, shape index: {}]
  %s12 = inlined_call_operand.hbm [shape: f32[2,784], index: 12, kind: output, shape index: {}]
  %s13 = sld [smem:[#allocation0]]
  $region58: #{vae_forward.1} parent=0
    _
  %s15 = ssub.s32 1, %s13
  %s16 = scalar_select 0, %s15, %s13
  $region1: #{vae_forward.1} parent=0
    #allocation2 [shape = 'u8[7168]{0}', space=vmem, size = 0x1c00, scoped, tag = 'output window, operand 0, single buffered']
    #allocation3 [shape = 's32[1]{0}', space=sflag, size = 0x4, scoped, tag = 'scoped memory for vae_forward.1']
    %17 = vsyncpa [#allocation3], 0
    // Predicated region
    $region2: #{vae_forward.1} parent=1 // pred_check
      _
    $region3: #{vae_forward.1} parent=1 // pred_check_branch
      %19 = sbr.rel (0) target = $region5
    $region4: #{vae_forward.1} parent=1 // pred_region
      _
    $region5: #{vae_forward.1} parent=1 // pred_fallthru
      _
    // Predicated region
    $region6: #{vae_forward.1} parent=1 // pred_check
      _
    $region7: #{vae_forward.1} parent=1 // pred_check_branch
      %21 = sbr.rel (0) target = $region9
    $region8: #{vae_forward.1} parent=1 // pred_region
      _
    $region9: #{vae_forward.1} parent=1 // pred_fallthru
      _
    // Predicated region
    $region10: #{vae_forward.1} parent=1 // pred_check
      _
    $region11: #{vae_forward.1} parent=1 // pred_check_branch
      %23 = sbr.rel (0) target = $region13
    $region12: #{vae_forward.1} parent=1 // pred_region
      _
    $region13: #{vae_forward.1} parent=1 // pred_fallthru
      _
    // Predicated region
    $region14: #{vae_forward.1} parent=1 // pred_check
      _
    $region15: #{vae_forward.1} parent=1 // pred_check_branch
      %25 = sbr.rel (0) target = $region17
    $region16: #{vae_forward.1} parent=1 // pred_region
      _
    $region17: #{vae_forward.1} parent=1 // pred_fallthru
      _
    // Predicated region
    $region18: #{vae_forward.1} parent=1 // pred_check
      _
    $region19: #{vae_forward.1} parent=1 // pred_check_branch
      %27 = sbr.rel (0) target = $region21
    $region20: #{vae_forward.1} parent=1 // pred_region
      _
    $region21: #{vae_forward.1} parent=1 // pred_fallthru
      _
    // Predicated region
    $region22: #{vae_forward.1} parent=1 // pred_check
      _
    $region23: #{vae_forward.1} parent=1 // pred_check_branch
      %29 = sbr.rel (0) target = $region25
    $region24: #{vae_forward.1} parent=1 // pred_region
      _
    $region25: #{vae_forward.1} parent=1 // pred_fallthru
      _
    // Predicated region
    $region26: #{vae_forward.1} parent=1 // pred_check
      _
    $region27: #{vae_forward.1} parent=1 // pred_check_branch
      %31 = sbr.rel (0) target = $region29
    $region28: #{vae_forward.1} parent=1 // pred_region
      _
    $region29: #{vae_forward.1} parent=1 // pred_fallthru
      _
    // Predicated region
    $region30: #{vae_forward.1} parent=1 // pred_check
      _
    $region31: #{vae_forward.1} parent=1 // pred_check_branch
      %33 = sbr.rel (0) target = $region33
    $region32: #{vae_forward.1} parent=1 // pred_region
      _
    $region33: #{vae_forward.1} parent=1 // pred_fallthru
      _
    // Predicated region
    $region34: #{vae_forward.1} parent=1 // pred_check
      _
    $region35: #{vae_forward.1} parent=1 // pred_check_branch
      %35 = sbr.rel (0) target = $region37
    $region36: #{vae_forward.1} parent=1 // pred_region
      _
    $region37: #{vae_forward.1} parent=1 // pred_fallthru
      _
    // Predicated region
    $region38: #{vae_forward.1} parent=1 // pred_check
      _
    $region39: #{vae_forward.1} parent=1 // pred_check_branch
      %37 = sbr.rel (0) target = $region41
    $region40: #{vae_forward.1} parent=1 // pred_region
      _
    $region41: #{vae_forward.1} parent=1 // pred_fallthru
      _
    // Predicated region
    $region42: #{vae_forward.1} parent=1 // pred_check
      _
    $region43: #{vae_forward.1} parent=1 // pred_check_branch
      %39 = sbr.rel (0) target = $region45
    $region44: #{vae_forward.1} parent=1 // pred_region
      _
    $region45: #{vae_forward.1} parent=1 // pred_fallthru
      _
    // Predicated region
    $region46: #{vae_forward.1} parent=1 // pred_check
      _
    $region47: #{vae_forward.1} parent=1 // pred_check_branch
      %41 = sbr.rel (0) target = $region49
    $region48: #{vae_forward.1} parent=1 // pred_region
      _
    $region49: #{vae_forward.1} parent=1 // pred_fallthru
      _
    %v42 = vld [vmem:[%s0] sm:$0xff]
    %v43 = vld [vmem:[%s0 + $0x8] sm:$0x3f]
    %v44 = vld [vmem:[%s2] sm:$0xff]
    %v45 = vld [vmem:[%s2 + $0x8] sm:$0xff]
    %v46 = vld [vmem:[%s2 + $0x10] sm:$0xff]
    %v47 = vld [vmem:[%s2 + $0x18] sm:$0xff]
    %v48 = vld [vmem:[%s2 + $0x20] sm:$0xff]
    %v49 = vld [vmem:[%s2 + $0x28] sm:$0xff]
    %v50 = vld [vmem:[%s2 + $0x30] sm:$0xff]
    %v51 = vld [vmem:[%s2 + $0x38] sm:$0xff]
    %v52 = vld [vmem:[%s2 + $0x40] sm:$0xff]
    %v53 = vld [vmem:[%s2 + $0x48] sm:$0xff]
    %v54 = vld [vmem:[%s2 + $0x50] sm:$0xff]
    %v55 = vld [vmem:[%s2 + $0x58] sm:$0xff]
    %v56 = vld [vmem:[%s2 + $0x60] sm:$0xff]
    %v57 = vld [vmem:[%s2 + $0x68] sm:$0xff]
    %v58 = vld [vmem:[%s2 + $0x70] sm:$0xff]
    %v59 = vld [vmem:[%s2 + $0x78] sm:$0xff]
    %v60 = vld [vmem:[%s2 + $0x80] sm:$0xff]
    %v61 = vld [vmem:[%s2 + $0x88] sm:$0xff]
    %v62 = vld [vmem:[%s2 + $0x90] sm:$0xff]
    %v63 = vld [vmem:[%s2 + $0x98] sm:$0xff]
    %v64 = vld [vmem:[%s2 + $0xa0] sm:$0xff]
    %v65 = vld [vmem:[%s2 + $0xa8] sm:$0xff]
    %v66 = vld [vmem:[%s2 + $0xb0] sm:$0xff]
    %v67 = vld [vmem:[%s2 + $0xb8] sm:$0xff]
    %v68 = vld [vmem:[%s2 + $0xc0] sm:$0xff]
    %v69 = vld [vmem:[%s2 + $0xc8] sm:$0xff]
    %v70 = vld [vmem:[%s2 + $0xd0] sm:$0xff]
    %v71 = vld [vmem:[%s2 + $0xd8] sm:$0xff]
    %v72 = vld [vmem:[%s2 + $0xe0] sm:$0xff]
    %v73 = vld [vmem:[%s2 + $0xe8] sm:$0xff]
    %v74 = vld [vmem:[%s2 + $0xf0] sm:$0xff]
    %v75 = vld [vmem:[%s2 + $0xf8] sm:$0xff]
    %v76 = vld [vmem:[%s2 + $0x100] sm:$0xff]
    %v77 = vld [vmem:[%s2 + $0x108] sm:$0xff]
    %v78 = vld [vmem:[%s2 + $0x110] sm:$0xff]
    %v79 = vld [vmem:[%s2 + $0x118] sm:$0xff]
    %v80 = vld [vmem:[%s2 + $0x120] sm:$0xff]
    %v81 = vld [vmem:[%s2 + $0x128] sm:$0xff]
    %v82 = vld [vmem:[%s2 + $0x130] sm:$0xff]
    %v83 = vld [vmem:[%s2 + $0x138] sm:$0xff]
    %v84 = vld [vmem:[%s2 + $0x140] sm:$0xff]
    %v85 = vld [vmem:[%s2 + $0x148] sm:$0xff]
    %v86 = vld [vmem:[%s2 + $0x150] sm:$0xff]
    %v87 = vld [vmem:[%s2 + $0x158] sm:$0xff]
    %v88 = vld [vmem:[%s2 + $0x160] sm:$0xff]
    %v89 = vld [vmem:[%s2 + $0x168] sm:$0xff]
    %v90 = vld [vmem:[%s2 + $0x170] sm:$0xff]
    %v91 = vld [vmem:[%s2 + $0x178] sm:$0xff]
    %v92 = vld [vmem:[%s2 + $0x180] sm:$0xff]
    %v93 = vld [vmem:[%s2 + $0x188] sm:$0xff]
    %v94 = vld [vmem:[%s2 + $0x190] sm:$0xff]
    %v95 = vld [vmem:[%s2 + $0x198] sm:$0xff]
    %v96 = vld [vmem:[%s2 + $0x1a0] sm:$0xff]
    %v97 = vld [vmem:[%s2 + $0x1a8] sm:$0xff]
    %v98 = vld [vmem:[%s2 + $0x1b0] sm:$0xff]
    %v99 = vld [vmem:[%s2 + $0x1b8] sm:$0xff]
    %v100 = vld [vmem:[%s2 + $0x1c0] sm:$0xff]
    %v101 = vld [vmem:[%s2 + $0x1c8] sm:$0xff]
    %v102 = vld [vmem:[%s2 + $0x1d0] sm:$0xff]
    %v103 = vld [vmem:[%s2 + $0x1d8] sm:$0xff]
    %v104 = vld [vmem:[%s2 + $0x1e0] sm:$0xff]
    %v105 = vld [vmem:[%s2 + $0x1e8] sm:$0xff]
    %v106 = vld [vmem:[%s2 + $0x1f0] sm:$0xff]
    %v107 = vld [vmem:[%s2 + $0x1f8] sm:$0xff]
    %v108 = vld [vmem:[%s2 + $0x200] sm:$0xff]
    %v109 = vld [vmem:[%s2 + $0x208] sm:$0xff]
    %v110 = vld [vmem:[%s2 + $0x210] sm:$0xff]
    %v111 = vld [vmem:[%s2 + $0x218] sm:$0xff]
    %v112 = vld [vmem:[%s2 + $0x220] sm:$0xff]
    %v113 = vld [vmem:[%s2 + $0x228] sm:$0xff]
    %v114 = vld [vmem:[%s2 + $0x230] sm:$0xff]
    %v115 = vld [vmem:[%s2 + $0x238] sm:$0xff]
    %v116 = vld [vmem:[%s2 + $0x240] sm:$0xff]
    %v117 = vld [vmem:[%s2 + $0x248] sm:$0xff]
    %v118 = vld [vmem:[%s2 + $0x250] sm:$0xff]
    %v119 = vld [vmem:[%s2 + $0x258] sm:$0xff]
    %v120 = vld [vmem:[%s2 + $0x260] sm:$0xff]
    %v121 = vld [vmem:[%s2 + $0x268] sm:$0xff]
    %v122 = vld [vmem:[%s2 + $0x270] sm:$0xff]
    %v123 = vld [vmem:[%s2 + $0x278] sm:$0xff]
    %v124 = vld [vmem:[%s2 + $0x280] sm:$0xff]
    %v125 = vld [vmem:[%s2 + $0x288] sm:$0xff]
    %v126 = vld [vmem:[%s2 + $0x290] sm:$0xff]
    %v127 = vld [vmem:[%s2 + $0x298] sm:$0xff]
    %v128 = vld [vmem:[%s2 + $0x2a0] sm:$0xff]
    %v129 = vld [vmem:[%s2 + $0x2a8] sm:$0xff]
    %v130 = vld [vmem:[%s2 + $0x2b0] sm:$0xff]
    %v131 = vld [vmem:[%s2 + $0x2b8] sm:$0xff]
    %v132 = vld [vmem:[%s2 + $0x2c0] sm:$0xff]
    %v133 = vld [vmem:[%s2 + $0x2c8] sm:$0xff]
    %v134 = vld [vmem:[%s2 + $0x2d0] sm:$0xff]
    %v135 = vld [vmem:[%s2 + $0x2d8] sm:$0xff]
    %v136 = vld [vmem:[%s2 + $0x2e0] sm:$0xff]
    %v137 = vld [vmem:[%s2 + $0x2e8] sm:$0xff]
    %v138 = vld [vmem:[%s2 + $0x2f0] sm:$0xff]
    %v139 = vld [vmem:[%s2 + $0x2f8] sm:$0xff]
    %v140 = vld [vmem:[%s2 + $0x300] sm:$0xff]
    %v141 = vld [vmem:[%s2 + $0x308] sm:$0xff]
    %v142 = vld [vmem:[%s2 + $0x310] sm:$0xff]
    %v143 = vld [vmem:[%s2 + $0x318] sm:$0xff]
    %v144 = vld [vmem:[%s2 + $0x320] sm:$0xff]
    %v145 = vld [vmem:[%s2 + $0x328] sm:$0xff]
    %v146 = vld [vmem:[%s2 + $0x330] sm:$0xff]
    %v147 = vld [vmem:[%s2 + $0x338] sm:$0xff]
    %v148 = vld [vmem:[%s2 + $0x340] sm:$0xff]
    %v149 = vld [vmem:[%s2 + $0x348] sm:$0xff]
    %v150 = vld [vmem:[%s2 + $0x350] sm:$0xff]
    %v151 = vld [vmem:[%s2 + $0x358] sm:$0xff]
    %v152 = vld [vmem:[%s2 + $0x360] sm:$0xff]
    %v153 = vld [vmem:[%s2 + $0x368] sm:$0xff]
    %v154 = vld [vmem:[%s2 + $0x370] sm:$0xff]
    %v155 = vld [vmem:[%s2 + $0x378] sm:$0xff]
    %v156 = vld [vmem:[%s2 + $0x380] sm:$0xff]
    %v157 = vld [vmem:[%s2 + $0x388] sm:$0xff]
    %v158 = vld [vmem:[%s2 + $0x390] sm:$0xff]
    %v159 = vld [vmem:[%s2 + $0x398] sm:$0xff]
    %v160 = vld [vmem:[%s2 + $0x3a0] sm:$0xff]
    %v161 = vld [vmem:[%s2 + $0x3a8] sm:$0xff]
    %v162 = vld [vmem:[%s2 + $0x3b0] sm:$0xff]
    %v163 = vld [vmem:[%s2 + $0x3b8] sm:$0xff]
    %v164 = vld [vmem:[%s2 + $0x3c0] sm:$0xff]
    %v165 = vld [vmem:[%s2 + $0x3c8] sm:$0xff]
    %v166 = vld [vmem:[%s2 + $0x3d0] sm:$0xff]
    %v167 = vld [vmem:[%s2 + $0x3d8] sm:$0xff]
    %v168 = vld [vmem:[%s2 + $0x3e0] sm:$0xff]
    %v169 = vld [vmem:[%s2 + $0x3e8] sm:$0xff]
    %v170 = vld [vmem:[%s2 + $0x3f0] sm:$0xff]
    %v171 = vld [vmem:[%s2 + $0x3f8] sm:$0xff]
    %v172 = vld [vmem:[%s2 + $0x400] sm:$0xff]
    %v173 = vld [vmem:[%s2 + $0x408] sm:$0xff]
    %v174 = vld [vmem:[%s2 + $0x410] sm:$0xff]
    %v175 = vld [vmem:[%s2 + $0x418] sm:$0xff]
    %v176 = vld [vmem:[%s2 + $0x420] sm:$0xff]
    %v177 = vld [vmem:[%s2 + $0x428] sm:$0xff]
    %v178 = vld [vmem:[%s2 + $0x430] sm:$0xff]
    %v179 = vld [vmem:[%s2 + $0x438] sm:$0xff]
    %v180 = vld [vmem:[%s2 + $0x440] sm:$0xff]
    %v181 = vld [vmem:[%s2 + $0x448] sm:$0xff]
    %v182 = vld [vmem:[%s2 + $0x450] sm:$0xff]
    %v183 = vld [vmem:[%s2 + $0x458] sm:$0xff]
    %v184 = vld [vmem:[%s2 + $0x460] sm:$0xff]
    %v185 = vld [vmem:[%s2 + $0x468] sm:$0xff]
    %v186 = vld [vmem:[%s2 + $0x470] sm:$0xff]
    %v187 = vld [vmem:[%s2 + $0x478] sm:$0xff]
    %v188 = vld [vmem:[%s2 + $0x480] sm:$0xff]
    %v189 = vld [vmem:[%s2 + $0x488] sm:$0xff]
    %v190 = vld [vmem:[%s2 + $0x490] sm:$0xff]
    %v191 = vld [vmem:[%s2 + $0x498] sm:$0xff]
    %v192 = vld [vmem:[%s2 + $0x4a0] sm:$0xff]
    %v193 = vld [vmem:[%s2 + $0x4a8] sm:$0xff]
    %v194 = vld [vmem:[%s2 + $0x4b0] sm:$0xff]
    %v195 = vld [vmem:[%s2 + $0x4b8] sm:$0xff]
    %v196 = vld [vmem:[%s2 + $0x4c0] sm:$0xff]
    %v197 = vld [vmem:[%s2 + $0x4c8] sm:$0xff]
    %v198 = vld [vmem:[%s2 + $0x4d0] sm:$0xff]
    %v199 = vld [vmem:[%s2 + $0x4d8] sm:$0xff]
    %v200 = vld [vmem:[%s2 + $0x4e0] sm:$0xff]
    %v201 = vld [vmem:[%s2 + $0x4e8] sm:$0xff]
    %v202 = vld [vmem:[%s2 + $0x4f0] sm:$0xff]
    %v203 = vld [vmem:[%s2 + $0x4f8] sm:$0xff]
    %v204 = vld [vmem:[%s2 + $0x500] sm:$0xff]
    %v205 = vld [vmem:[%s2 + $0x508] sm:$0xff]
    %v206 = vld [vmem:[%s2 + $0x510] sm:$0xff]
    %v207 = vld [vmem:[%s2 + $0x518] sm:$0xff]
    %v208 = vld [vmem:[%s2 + $0x520] sm:$0xff]
    %v209 = vld [vmem:[%s2 + $0x528] sm:$0xff]
    %v210 = vld [vmem:[%s2 + $0x530] sm:$0xff]
    %v211 = vld [vmem:[%s2 + $0x538] sm:$0xff]
    %v212 = vld [vmem:[%s2 + $0x540] sm:$0xff]
    %v213 = vld [vmem:[%s2 + $0x548] sm:$0xff]
    %v214 = vld [vmem:[%s2 + $0x550] sm:$0xff]
    %v215 = vld [vmem:[%s2 + $0x558] sm:$0xff]
    %v216 = vld [vmem:[%s2 + $0x560] sm:$0xff]
    %v217 = vld [vmem:[%s2 + $0x568] sm:$0xff]
    %v218 = vld [vmem:[%s2 + $0x570] sm:$0xff]
    %v219 = vld [vmem:[%s2 + $0x578] sm:$0xff]
    %v220 = vld [vmem:[%s2 + $0x580] sm:$0xff]
    %v221 = vld [vmem:[%s2 + $0x588] sm:$0xff]
    %v222 = vld [vmem:[%s2 + $0x590] sm:$0xff]
    %v223 = vld [vmem:[%s2 + $0x598] sm:$0xff]
    %v224 = vld [vmem:[%s2 + $0x5a0] sm:$0xff]
    %v225 = vld [vmem:[%s2 + $0x5a8] sm:$0xff]
    %v226 = vld [vmem:[%s2 + $0x5b0] sm:$0xff]
    %v227 = vld [vmem:[%s2 + $0x5b8] sm:$0xff]
    %v228 = vld [vmem:[%s2 + $0x5c0] sm:$0xff]
    %v229 = vld [vmem:[%s2 + $0x5c8] sm:$0xff]
    %v230 = vld [vmem:[%s2 + $0x5d0] sm:$0xff]
    %v231 = vld [vmem:[%s2 + $0x5d8] sm:$0xff]
    %v232 = vld [vmem:[%s2 + $0x5e0] sm:$0xff]
    %v233 = vld [vmem:[%s2 + $0x5e8] sm:$0xff]
    %v234 = vld [vmem:[%s2 + $0x5f0] sm:$0xff]
    %v235 = vld [vmem:[%s2 + $0x5f8] sm:$0xff]
    %v236 = vld [vmem:[%s2 + $0x600] sm:$0xff]
    %v237 = vld [vmem:[%s2 + $0x608] sm:$0xff]
    %v238 = vld [vmem:[%s2 + $0x610] sm:$0xff]
    %v239 = vld [vmem:[%s2 + $0x618] sm:$0xff]
    %v240 = vld [vmem:[%s2 + $0x620] sm:$0xff]
    %v241 = vld [vmem:[%s2 + $0x628] sm:$0xff]
    %v242 = vld [vmem:[%s2 + $0x630] sm:$0xff]
    %v243 = vld [vmem:[%s2 + $0x638] sm:$0xff]
    %v244 = vld [vmem:[%s2 + $0x640] sm:$0xff]
    %v245 = vld [vmem:[%s2 + $0x648] sm:$0xff]
    %v246 = vld [vmem:[%s2 + $0x650] sm:$0xff]
    %v247 = vld [vmem:[%s2 + $0x658] sm:$0xff]
    %v248 = vld [vmem:[%s2 + $0x660] sm:$0xff]
    %v249 = vld [vmem:[%s2 + $0x668] sm:$0xff]
    %v250 = vld [vmem:[%s2 + $0x670] sm:$0xff]
    %v251 = vld [vmem:[%s2 + $0x678] sm:$0xff]
    %v252 = vld [vmem:[%s2 + $0x680] sm:$0xff]
    %v253 = vld [vmem:[%s2 + $0x688] sm:$0xff]
    %v254 = vld [vmem:[%s2 + $0x690] sm:$0xff]
    %v255 = vld [vmem:[%s2 + $0x698] sm:$0xff]
    %v256 = vld [vmem:[%s2 + $0x6a0] sm:$0xff]
    %v257 = vld [vmem:[%s2 + $0x6a8] sm:$0xff]
    %v258 = vld [vmem:[%s2 + $0x6b0] sm:$0xff]
    %v259 = vld [vmem:[%s2 + $0x6b8] sm:$0xff]
    %v260 = vld [vmem:[%s2 + $0x6c0] sm:$0xff]
    %v261 = vld [vmem:[%s2 + $0x6c8] sm:$0xff]
    %v262 = vld [vmem:[%s2 + $0x6d0] sm:$0xff]
    %v263 = vld [vmem:[%s2 + $0x6d8] sm:$0xff]
    %v264 = vld [vmem:[%s2 + $0x6e0] sm:$0xff]
    %v265 = vld [vmem:[%s2 + $0x6e8] sm:$0xff]
    %v266 = vld [vmem:[%s2 + $0x6f0] sm:$0xff]
    %v267 = vld [vmem:[%s2 + $0x6f8] sm:$0xff]
    %v268 = vld [vmem:[%s2 + $0x700] sm:$0xff]
    %v269 = vld [vmem:[%s2 + $0x708] sm:$0xff]
    %v270 = vld [vmem:[%s2 + $0x710] sm:$0xff]
    %v271 = vld [vmem:[%s2 + $0x718] sm:$0xff]
    %v272 = vld [vmem:[%s2 + $0x720] sm:$0xff]
    %v273 = vld [vmem:[%s2 + $0x728] sm:$0xff]
    %v274 = vld [vmem:[%s2 + $0x730] sm:$0xff]
    %v275 = vld [vmem:[%s2 + $0x738] sm:$0xff]
    %v276 = vld [vmem:[%s2 + $0x740] sm:$0xff]
    %v277 = vld [vmem:[%s2 + $0x748] sm:$0xff]
    %v278 = vld [vmem:[%s2 + $0x750] sm:$0xff]
    %v279 = vld [vmem:[%s2 + $0x758] sm:$0xff]
    %v280 = vld [vmem:[%s2 + $0x760] sm:$0xff]
    %v281 = vld [vmem:[%s2 + $0x768] sm:$0xff]
    %v282 = vld [vmem:[%s2 + $0x770] sm:$0xff]
    %v283 = vld [vmem:[%s2 + $0x778] sm:$0xff]
    %v284 = vld [vmem:[%s2 + $0x780] sm:$0xff]
    %v285 = vld [vmem:[%s2 + $0x788] sm:$0xff]
    %v286 = vld [vmem:[%s2 + $0x790] sm:$0xff]
    %v287 = vld [vmem:[%s2 + $0x798] sm:$0xff]
    %v288 = vld [vmem:[%s2 + $0x7a0] sm:$0xff]
    %v289 = vld [vmem:[%s2 + $0x7a8] sm:$0xff]
    %v290 = vld [vmem:[%s2 + $0x7b0] sm:$0xff]
    %v291 = vld [vmem:[%s2 + $0x7b8] sm:$0xff]
    %v292 = vld [vmem:[%s2 + $0x7c0] sm:$0xff]
    %v293 = vld [vmem:[%s2 + $0x7c8] sm:$0xff]
    %v294 = vld [vmem:[%s2 + $0x7d0] sm:$0xff]
    %v295 = vld [vmem:[%s2 + $0x7d8] sm:$0xff]
    %v296 = vld [vmem:[%s2 + $0x7e0] sm:$0xff]
    %v297 = vld [vmem:[%s2 + $0x7e8] sm:$0xff]
    %v298 = vld [vmem:[%s2 + $0x7f0] sm:$0xff]
    %v299 = vld [vmem:[%s2 + $0x7f8] sm:$0xff]
    %v300 = vld [vmem:[%s2 + $0x800] sm:$0xff]
    %v301 = vld [vmem:[%s2 + $0x808] sm:$0xff]
    %v302 = vld [vmem:[%s2 + $0x810] sm:$0xff]
    %v303 = vld [vmem:[%s2 + $0x818] sm:$0xff]
    %v304 = vld [vmem:[%s2 + $0x820] sm:$0xff]
    %v305 = vld [vmem:[%s2 + $0x828] sm:$0xff]
    %v306 = vld [vmem:[%s2 + $0x830] sm:$0xff]
    %v307 = vld [vmem:[%s2 + $0x838] sm:$0xff]
    %v308 = vld [vmem:[%s2 + $0x840] sm:$0xff]
    %v309 = vld [vmem:[%s2 + $0x848] sm:$0xff]
    %v310 = vld [vmem:[%s2 + $0x850] sm:$0xff]
    %v311 = vld [vmem:[%s2 + $0x858] sm:$0xff]
    %v312 = vld [vmem:[%s2 + $0x860] sm:$0xff]
    %v313 = vld [vmem:[%s2 + $0x868] sm:$0xff]
    %v314 = vld [vmem:[%s2 + $0x870] sm:$0xff]
    %v315 = vld [vmem:[%s2 + $0x878] sm:$0xff]
    %v316 = vld [vmem:[%s2 + $0x880] sm:$0xff]
    %v317 = vld [vmem:[%s2 + $0x888] sm:$0xff]
    %v318 = vld [vmem:[%s2 + $0x890] sm:$0xff]
    %v319 = vld [vmem:[%s2 + $0x898] sm:$0xff]
    %v320 = vld [vmem:[%s2 + $0x8a0] sm:$0xff]
    %v321 = vld [vmem:[%s2 + $0x8a8] sm:$0xff]
    %v322 = vld [vmem:[%s2 + $0x8b0] sm:$0xff]
    %v323 = vld [vmem:[%s2 + $0x8b8] sm:$0xff]
    %v324 = vld [vmem:[%s2 + $0x8c0] sm:$0xff]
    %v325 = vld [vmem:[%s2 + $0x8c8] sm:$0xff]
    %v326 = vld [vmem:[%s2 + $0x8d0] sm:$0xff]
    %v327 = vld [vmem:[%s2 + $0x8d8] sm:$0xff]
    %v328 = vld [vmem:[%s2 + $0x8e0] sm:$0xff]
    %v329 = vld [vmem:[%s2 + $0x8e8] sm:$0xff]
    %v330 = vld [vmem:[%s2 + $0x8f0] sm:$0xff]
    %v331 = vld [vmem:[%s2 + $0x8f8] sm:$0xff]
    %v332 = vld [vmem:[%s2 + $0x900] sm:$0xff]
    %v333 = vld [vmem:[%s2 + $0x908] sm:$0xff]
    %v334 = vld [vmem:[%s2 + $0x910] sm:$0xff]
    %v335 = vld [vmem:[%s2 + $0x918] sm:$0xff]
    %v336 = vld [vmem:[%s2 + $0x920] sm:$0xff]
    %v337 = vld [vmem:[%s2 + $0x928] sm:$0xff]
    %v338 = vld [vmem:[%s2 + $0x930] sm:$0xff]
    %v339 = vld [vmem:[%s2 + $0x938] sm:$0xff]
    %v340 = vld [vmem:[%s2 + $0x940] sm:$0xff]
    %v341 = vld [vmem:[%s2 + $0x948] sm:$0xff]
    %v342 = vld [vmem:[%s2 + $0x950] sm:$0xff]
    %v343 = vld [vmem:[%s2 + $0x958] sm:$0xff]
    %v344 = vld [vmem:[%s2 + $0x960] sm:$0xff]
    %v345 = vld [vmem:[%s2 + $0x968] sm:$0xff]
    %v346 = vld [vmem:[%s2 + $0x970] sm:$0xff]
    %v347 = vld [vmem:[%s2 + $0x978] sm:$0xff]
    %v348 = vld [vmem:[%s2 + $0x980] sm:$0xff]
    %v349 = vld [vmem:[%s2 + $0x988] sm:$0xff]
    %v350 = vld [vmem:[%s2 + $0x990] sm:$0xff]
    %v351 = vld [vmem:[%s2 + $0x998] sm:$0xff]
    %v352 = vld [vmem:[%s2 + $0x9a0] sm:$0xff]
    %v353 = vld [vmem:[%s2 + $0x9a8] sm:$0xff]
    %v354 = vld [vmem:[%s2 + $0x9b0] sm:$0xff]
    %v355 = vld [vmem:[%s2 + $0x9b8] sm:$0xff]
    %v356 = vld [vmem:[%s2 + $0x9c0] sm:$0xff]
    %v357 = vld [vmem:[%s2 + $0x9c8] sm:$0xff]
    %v358 = vld [vmem:[%s2 + $0x9d0] sm:$0xff]
    %v359 = vld [vmem:[%s2 + $0x9d8] sm:$0xff]
    %v360 = vld [vmem:[%s2 + $0x9e0] sm:$0xff]
    %v361 = vld [vmem:[%s2 + $0x9e8] sm:$0xff]
    %v362 = vld [vmem:[%s2 + $0x9f0] sm:$0xff]
    %v363 = vld [vmem:[%s2 + $0x9f8] sm:$0xff]
    %v364 = vld [vmem:[%s2 + $0xa00] sm:$0xff]
    %v365 = vld [vmem:[%s2 + $0xa08] sm:$0xff]
    %v366 = vld [vmem:[%s2 + $0xa10] sm:$0xff]
    %v367 = vld [vmem:[%s2 + $0xa18] sm:$0xff]
    %v368 = vld [vmem:[%s2 + $0xa20] sm:$0xff]
    %v369 = vld [vmem:[%s2 + $0xa28] sm:$0xff]
    %v370 = vld [vmem:[%s2 + $0xa30] sm:$0xff]
    %v371 = vld [vmem:[%s2 + $0xa38] sm:$0xff]
    %v372 = vld [vmem:[%s2 + $0xa40] sm:$0xff]
    %v373 = vld [vmem:[%s2 + $0xa48] sm:$0xff]
    %v374 = vld [vmem:[%s2 + $0xa50] sm:$0xff]
    %v375 = vld [vmem:[%s2 + $0xa58] sm:$0xff]
    %v376 = vld [vmem:[%s2 + $0xa60] sm:$0xff]
    %v377 = vld [vmem:[%s2 + $0xa68] sm:$0xff]
    %v378 = vld [vmem:[%s2 + $0xa70] sm:$0xff]
    %v379 = vld [vmem:[%s2 + $0xa78] sm:$0xff]
    %v380 = vld [vmem:[%s2 + $0xa80] sm:$0xff]
    %v381 = vld [vmem:[%s2 + $0xa88] sm:$0xff]
    %v382 = vld [vmem:[%s2 + $0xa90] sm:$0xff]
    %v383 = vld [vmem:[%s2 + $0xa98] sm:$0xff]
    %v384 = vld [vmem:[%s2 + $0xaa0] sm:$0xff]
    %v385 = vld [vmem:[%s2 + $0xaa8] sm:$0xff]
    %v386 = vld [vmem:[%s2 + $0xab0] sm:$0xff]
    %v387 = vld [vmem:[%s2 + $0xab8] sm:$0xff]
    %v388 = vld [vmem:[%s2 + $0xac0] sm:$0xff]
    %v389 = vld [vmem:[%s2 + $0xac8] sm:$0xff]
    %v390 = vld [vmem:[%s2 + $0xad0] sm:$0xff]
    %v391 = vld [vmem:[%s2 + $0xad8] sm:$0xff]
    %v392 = vld [vmem:[%s2 + $0xae0] sm:$0xff]
    %v393 = vld [vmem:[%s2 + $0xae8] sm:$0xff]
    %v394 = vld [vmem:[%s2 + $0xaf0] sm:$0xff]
    %v395 = vld [vmem:[%s2 + $0xaf8] sm:$0xff]
    %v396 = vld [vmem:[%s2 + $0xb00] sm:$0xff]
    %v397 = vld [vmem:[%s2 + $0xb08] sm:$0xff]
    %v398 = vld [vmem:[%s2 + $0xb10] sm:$0xff]
    %v399 = vld [vmem:[%s2 + $0xb18] sm:$0xff]
    %v400 = vld [vmem:[%s2 + $0xb20] sm:$0xff]
    %v401 = vld [vmem:[%s2 + $0xb28] sm:$0xff]
    %v402 = vld [vmem:[%s2 + $0xb30] sm:$0xff]
    %v403 = vld [vmem:[%s2 + $0xb38] sm:$0xff]
    %v404 = vld [vmem:[%s2 + $0xb40] sm:$0xff]
    %v405 = vld [vmem:[%s2 + $0xb48] sm:$0xff]
    %v406 = vld [vmem:[%s2 + $0xb50] sm:$0xff]
    %v407 = vld [vmem:[%s2 + $0xb58] sm:$0xff]
    %v408 = vld [vmem:[%s2 + $0xb60] sm:$0xff]
    %v409 = vld [vmem:[%s2 + $0xb68] sm:$0xff]
    %v410 = vld [vmem:[%s2 + $0xb70] sm:$0xff]
    %v411 = vld [vmem:[%s2 + $0xb78] sm:$0xff]
    %v412 = vld [vmem:[%s2 + $0xb80] sm:$0xff]
    %v413 = vld [vmem:[%s2 + $0xb88] sm:$0xff]
    %v414 = vld [vmem:[%s2 + $0xb90] sm:$0xff]
    %v415 = vld [vmem:[%s2 + $0xb98] sm:$0xff]
    %v416 = vld [vmem:[%s2 + $0xba0] sm:$0xff]
    %v417 = vld [vmem:[%s2 + $0xba8] sm:$0xff]
    %v418 = vld [vmem:[%s2 + $0xbb0] sm:$0xff]
    %v419 = vld [vmem:[%s2 + $0xbb8] sm:$0xff]
    %v420 = vld [vmem:[%s2 + $0xbc0] sm:$0xff]
    %v421 = vld [vmem:[%s2 + $0xbc8] sm:$0xff]
    %v422 = vld [vmem:[%s2 + $0xbd0] sm:$0xff]
    %v423 = vld [vmem:[%s2 + $0xbd8] sm:$0xff]
    %v424 = vld [vmem:[%s2 + $0xbe0] sm:$0xff]
    %v425 = vld [vmem:[%s2 + $0xbe8] sm:$0xff]
    %v426 = vld [vmem:[%s2 + $0xbf0] sm:$0xff]
    %v427 = vld [vmem:[%s2 + $0xbf8] sm:$0xff]
    %v428 = vld [vmem:[%s2 + $0xc00] sm:$0xff]
    %v429 = vld [vmem:[%s2 + $0xc08] sm:$0xff]
    %v430 = vld [vmem:[%s2 + $0xc10] sm:$0xff]
    %v431 = vld [vmem:[%s2 + $0xc18] sm:$0xff]
    %v432 = vld [vmem:[%s2 + $0xc20] sm:$0xff]
    %v433 = vld [vmem:[%s2 + $0xc28] sm:$0xff]
    %v434 = vld [vmem:[%s2 + $0xc30] sm:$0xff]
    %v435 = vld [vmem:[%s2 + $0xc38] sm:$0xff]
    %v436 = vld [vmem:[%s3] sm:$0xf]
    %v438 = vlaneseq
    %v439 = vshrl.u32 %v438, 7
    %v440 = vsub.s32 0, %v439
    %v441 = vrot.slane %v436, %v440
    %v442 = vlaneseq
    %v443 = vshrl.u32 %v442, 7
    %v444 = vsub.s32 1, %v443
    %v445 = vrot.slane %v436, %v444
    %v446 = vlaneseq
    %v447 = vshrl.u32 %v446, 7
    %v448 = vsub.s32 2, %v447
    %v449 = vrot.slane %v436, %v448
    %v450 = vlaneseq
    %v451 = vshrl.u32 %v450, 7
    %v452 = vsub.s32 3, %v451
    %v453 = vrot.slane %v436, %v452
    %v460 = vcombine.high %v42, %v42
    %v462 = vunpack.c.l.s4 1983009808
    %v463 = vunpack.c.0.s8 %v462
    %v464 = vlaneseq
    %v465 = vshrl.u32 %v464, 7
    %v466 = vsub.s32 %v463, %v465
    %v467 = vrot.slane %v42, %v466
    %v469 = vunpack.c.l.s4 1983009808
    %v470 = vunpack.c.0.s8 %v469
    %v471 = vlaneseq
    %v472 = vshrl.u32 %v471, 7
    %v473 = vsub.s32 %v470, %v472
    %v474 = vrot.slane %v460, %v473
    %v475 = vcombine.high %v467, %v467
    %v476 = vcombine.high %v474, %v474
    %v477 = vcombine.high %v43, %v43
    %v479 = vunpack.c.l.s4 1983009808
    %v480 = vunpack.c.0.s8 %v479
    %v481 = vlaneseq
    %v482 = vshrl.u32 %v481, 7
    %v483 = vsub.s32 %v480, %v482
    %v484 = vrot.slane %v43, %v483
    %v486 = vunpack.c.l.s4 1983009808
    %v487 = vunpack.c.0.s8 %v486
    %v488 = vlaneseq
    %v489 = vshrl.u32 %v488, 7
    %v490 = vsub.s32 %v487, %v489
    %v491 = vrot.slane %v477, %v490
    %v492 = vcombine.high %v484, %v484
    %vm499 = vcmask 130048
    %v500 = vsel %vm499, %v491, 0
    %502 = vmatprep.subr.mxu0 %v45
    %503 = vmatpush1.msra.mxu0 %v44
    %504 = vmatprep.subr.mxu0 %v49
    %505 = vmatpush1.msra.mxu0 %v48
    %506 = vmatprep.subr.mxu0 %v53
    %507 = vmatpush1.msra.mxu0 %v52
    %508 = vmatprep.subr.mxu0 %v57
    %509 = vmatpush1.msra.mxu0 %v56
    %510 = vmatprep.subr.mxu0 %v61
    %511 = vmatpush1.msra.mxu0 %v60
    %512 = vmatprep.subr.mxu0 %v65
    %513 = vmatpush1.msra.mxu0 %v64
    %514 = vmatprep.subr.mxu0 %v69
    %515 = vmatpush1.msra.mxu0 %v68
    %516 = vmatprep.subr.mxu0 %v73
    %517 = vmatpush1.msra.mxu0 %v72
    %518 = vmatprep.subr.mxu0 %v77
    %519 = vmatpush1.msra.mxu0 %v76
    %520 = vmatprep.subr.mxu0 %v81
    %521 = vmatpush1.msra.mxu0 %v80
    %522 = vmatprep.subr.mxu0 %v85
    %523 = vmatpush1.msra.mxu0 %v84
    %524 = vmatprep.subr.mxu0 %v89
    %525 = vmatpush1.msra.mxu0 %v88
    %526 = vmatprep.subr.mxu0 %v93
    %527 = vmatpush1.msra.mxu0 %v92
    %528 = vmatprep.subr.mxu0 %v97
    %529 = vmatpush1.msra.mxu0 %v96
    %530 = vmatprep.subr.mxu0 %v101
    %531 = vmatpush1.msra.mxu0 %v100
    %532 = vmatprep.subr.mxu0 %v105
    %533 = vmatpush1.msra.mxu0 %v104
    %534 = vmatprep.subr.mxu0 %v109
    %535 = vmatpush1.msra.mxu0 %v108
    %536 = vmatprep.subr.mxu0 %v113
    %537 = vmatpush1.msra.mxu0 %v112
    %538 = vmatprep.subr.mxu0 %v117
    %539 = vmatpush1.msra.mxu0 %v116
    %540 = vmatprep.subr.mxu0 %v121
    %541 = vmatpush1.msra.mxu0 %v120
    %542 = vmatprep.subr.mxu0 %v125
    %543 = vmatpush1.msra.mxu0 %v124
    %544 = vmatprep.subr.mxu0 %v129
    %545 = vmatpush1.msra.mxu0 %v128
    %546 = vmatprep.subr.mxu0 %v133
    %547 = vmatpush1.msra.mxu0 %v132
    %548 = vmatprep.subr.mxu0 %v137
    %549 = vmatpush1.msra.mxu0 %v136
    %550 = vmatprep.subr.mxu0 %v141
    %551 = vmatpush1.msra.mxu0 %v140
    %552 = vmatprep.subr.mxu0 %v145
    %553 = vmatpush1.msra.mxu0 %v144
    %554 = vmatprep.subr.mxu0 %v149
    %555 = vmatpush1.msra.mxu0 %v148
    %556 = vmatprep.subr.mxu0 %v153
    %557 = vmatpush1.msra.mxu0 %v152
    %558 = vmatprep.subr.mxu0 %v157
    %559 = vmatpush1.msra.mxu0 %v156
    %560 = vmatprep.subr.mxu0 %v161
    %561 = vmatpush1.msra.mxu0 %v160
    %562 = vmatprep.subr.mxu0 %v165
    %563 = vmatpush1.msra.mxu0 %v164
    %564 = vmatprep.subr.mxu0 %v169
    %565 = vmatpush1.msra.mxu0 %v168
    %566 = vmatprep.mubr.f32.mxu0 %v475
    %567 = vmatmul.mubr.f32.gmra.mrb[0].mxu0 %v467
    %v568 = vpop.f32.mrb[0].mxu0
    %v569 = vadd.f32 %v441, %v568
    %v570 = vpop.f32.mrb[0].mxu0
    %v571 = vadd.f32 %v445, %v570
    %572 = vdwg.mxu0
    %573 = vmatprep.subr.mxu0 %v173
    %574 = vmatpush1.msra.mxu0 %v172
    %575 = vmatprep.subr.mxu0 %v177
    %576 = vmatpush1.msra.mxu0 %v176
    %577 = vmatprep.subr.mxu0 %v181
    %578 = vmatpush1.msra.mxu0 %v180
    %579 = vmatprep.subr.mxu0 %v185
    %580 = vmatpush1.msra.mxu0 %v184
    %581 = vmatprep.subr.mxu0 %v189
    %582 = vmatpush1.msra.mxu0 %v188
    %583 = vmatprep.subr.mxu0 %v193
    %584 = vmatpush1.msra.mxu0 %v192
    %585 = vmatprep.subr.mxu0 %v197
    %586 = vmatpush1.msra.mxu0 %v196
    %587 = vmatprep.subr.mxu0 %v201
    %588 = vmatpush1.msra.mxu0 %v200
    %589 = vmatprep.subr.mxu0 %v205
    %590 = vmatpush1.msra.mxu0 %v204
    %591 = vmatprep.subr.mxu0 %v209
    %592 = vmatpush1.msra.mxu0 %v208
    %593 = vmatprep.subr.mxu0 %v213
    %594 = vmatpush1.msra.mxu0 %v212
    %595 = vmatprep.subr.mxu0 %v217
    %596 = vmatpush1.msra.mxu0 %v216
    %597 = vmatprep.subr.mxu0 %v221
    %598 = vmatpush1.msra.mxu0 %v220
    %599 = vmatprep.subr.mxu0 %v225
    %600 = vmatpush1.msra.mxu0 %v224
    %601 = vmatprep.subr.mxu0 %v229
    %602 = vmatpush1.msra.mxu0 %v228
    %603 = vmatprep.subr.mxu0 %v233
    %604 = vmatpush1.msra.mxu0 %v232
    %605 = vmatprep.subr.mxu0 %v237
    %606 = vmatpush1.msra.mxu0 %v236
    %607 = vmatprep.subr.mxu0 %v241
    %608 = vmatpush1.msra.mxu0 %v240
    %609 = vmatprep.subr.mxu0 %v245
    %610 = vmatpush1.msra.mxu0 %v244
    %611 = vmatprep.subr.mxu0 %v249
    %612 = vmatpush1.msra.mxu0 %v248
    %613 = vmatprep.subr.mxu0 %v253
    %614 = vmatpush1.msra.mxu0 %v252
    %615 = vmatprep.subr.mxu0 %v257
    %616 = vmatpush1.msra.mxu0 %v256
    %617 = vmatprep.subr.mxu0 %v261
    %618 = vmatpush1.msra.mxu0 %v260
    %619 = vmatprep.subr.mxu0 %v265
    %620 = vmatpush1.msra.mxu0 %v264
    %621 = vmatprep.subr.mxu0 %v269
    %622 = vmatpush1.msra.mxu0 %v268
    %623 = vmatprep.subr.mxu0 %v273
    %624 = vmatpush1.msra.mxu0 %v272
    %625 = vmatprep.subr.mxu0 %v277
    %626 = vmatpush1.msra.mxu0 %v276
    %627 = vmatprep.subr.mxu0 %v281
    %628 = vmatpush1.msra.mxu0 %v280
    %629 = vmatprep.subr.mxu0 %v285
    %630 = vmatpush1.msra.mxu0 %v284
    %631 = vmatprep.subr.mxu0 %v289
    %632 = vmatpush1.msra.mxu0 %v288
    %633 = vmatprep.subr.mxu0 %v293
    %634 = vmatpush1.msra.mxu0 %v292
    %635 = vmatprep.subr.mxu0 %v297
    %636 = vmatpush1.msra.mxu0 %v296
    %637 = vmatprep.mubr.f32.mxu0 %v476
    %638 = vmatmul.mubr.f32.gmra.mrb[0].mxu0 %v474
    %v639 = vpop.f32.mrb[0].mxu0
    %v640 = vadd.f32 %v569, %v639
    %v641 = vpop.f32.mrb[0].mxu0
    %v642 = vadd.f32 %v571, %v641
    %643 = vdwg.mxu0
    %644 = vmatprep.subr.mxu0 %v301
    %645 = vmatpush1.msra.mxu0 %v300
    %646 = vmatprep.subr.mxu0 %v305
    %647 = vmatpush1.msra.mxu0 %v304
    %648 = vmatprep.subr.mxu0 %v309
    %649 = vmatpush1.msra.mxu0 %v308
    %650 = vmatprep.subr.mxu0 %v313
    %651 = vmatpush1.msra.mxu0 %v312
    %652 = vmatprep.subr.mxu0 %v317
    %653 = vmatpush1.msra.mxu0 %v316
    %654 = vmatprep.subr.mxu0 %v321
    %655 = vmatpush1.msra.mxu0 %v320
    %656 = vmatprep.subr.mxu0 %v325
    %657 = vmatpush1.msra.mxu0 %v324
    %658 = vmatprep.subr.mxu0 %v329
    %659 = vmatpush1.msra.mxu0 %v328
    %660 = vmatprep.subr.mxu0 %v333
    %661 = vmatpush1.msra.mxu0 %v332
    %662 = vmatprep.subr.mxu0 %v337
    %663 = vmatpush1.msra.mxu0 %v336
    %664 = vmatprep.subr.mxu0 %v341
    %665 = vmatpush1.msra.mxu0 %v340
    %666 = vmatprep.subr.mxu0 %v345
    %667 = vmatpush1.msra.mxu0 %v344
    %668 = vmatprep.subr.mxu0 %v349
    %669 = vmatpush1.msra.mxu0 %v348
    %670 = vmatprep.subr.mxu0 %v353
    %671 = vmatpush1.msra.mxu0 %v352
    %672 = vmatprep.subr.mxu0 %v357
    %673 = vmatpush1.msra.mxu0 %v356
    %674 = vmatprep.subr.mxu0 %v361
    %675 = vmatpush1.msra.mxu0 %v360
    %676 = vmatprep.subr.mxu0 %v365
    %677 = vmatpush1.msra.mxu0 %v364
    %678 = vmatprep.subr.mxu0 %v369
    %679 = vmatpush1.msra.mxu0 %v368
    %680 = vmatprep.subr.mxu0 %v373
    %681 = vmatpush1.msra.mxu0 %v372
    %682 = vmatprep.subr.mxu0 %v377
    %683 = vmatpush1.msra.mxu0 %v376
    %684 = vmatprep.subr.mxu0 %v381
    %685 = vmatpush1.msra.mxu0 %v380
    %686 = vmatprep.subr.mxu0 %v385
    %687 = vmatpush1.msra.mxu0 %v384
    %688 = vmatprep.subr.mxu0 %v389
    %689 = vmatpush1.msra.mxu0 %v388
    %690 = vmatprep.subr.mxu0 %v393
    %691 = vmatpush1.msra.mxu0 %v392
    %692 = vmatprep.subr.mxu0 %v397
    %693 = vmatpush1.msra.mxu0 %v396
    %694 = vmatprep.subr.mxu0 %v401
    %695 = vmatpush1.msra.mxu0 %v400
    %696 = vmatprep.subr.mxu0 %v405
    %697 = vmatpush1.msra.mxu0 %v404
    %698 = vmatprep.subr.mxu0 %v409
    %699 = vmatpush1.msra.mxu0 %v408
    %700 = vmatprep.subr.mxu0 %v413
    %701 = vmatpush1.msra.mxu0 %v412
    %702 = vmatprep.subr.mxu0 %v417
    %703 = vmatpush1.msra.mxu0 %v416
    %704 = vmatprep.subr.mxu0 %v421
    %705 = vmatpush1.msra.mxu0 %v420
    %706 = vmatprep.subr.mxu0 %v425
    %707 = vmatpush1.msra.mxu0 %v424
    %708 = vmatprep.mubr.f32.mxu0 %v492
    %709 = vmatmul.mubr.f32.gmra.mrb[0].mxu0 %v484
    %v710 = vpop.f32.mrb[0].mxu0
    %v711 = vadd.f32 %v640, %v710
    %v712 = vpop.f32.mrb[0].mxu0
    %v713 = vadd.f32 %v642, %v712
    %714 = vdwg.mxu0
    %715 = vmatprep.subr.mxu0 %v429
    %716 = vmatpush1.msra.mxu0 %v428
    %717 = vmatprep.subr.mxu0 %v433
    %718 = vmatpush1.msra.mxu0 %v432
    %719 = vmatprep.subr.mxu0 0.0
    %720 = vmatpush1.msra.mxu0 0.0
    %721 = vmatprep.subr.mxu0 0.0
    %722 = vmatpush1.msra.mxu0 0.0
    %723 = vmatprep.subr.mxu0 0.0
    %724 = vmatpush1.msra.mxu0 0.0
    %725 = vmatprep.subr.mxu0 0.0
    %726 = vmatpush1.msra.mxu0 0.0
    %727 = vmatprep.subr.mxu0 0.0
    %728 = vmatpush1.msra.mxu0 0.0
    %729 = vmatprep.subr.mxu0 0.0
    %730 = vmatpush1.msra.mxu0 0.0
    %731 = vmatprep.subr.mxu0 0.0
    %732 = vmatpush1.msra.mxu0 0.0
    %733 = vmatprep.subr.mxu0 0.0
    %734 = vmatpush1.msra.mxu0 0.0
    %735 = vmatprep.subr.mxu0 0.0
    %736 = vmatpush1.msra.mxu0 0.0
    %737 = vmatprep.subr.mxu0 0.0
    %738 = vmatpush1.msra.mxu0 0.0
    %739 = vmatprep.subr.mxu0 0.0
    %740 = vmatpush1.msra.mxu0 0.0
    %741 = vmatprep.subr.mxu0 0.0
    %742 = vmatpush1.msra.mxu0 0.0
    %743 = vmatprep.subr.mxu0 0.0
    %744 = vmatpush1.msra.mxu0 0.0
    %745 = vmatprep.subr.mxu0 0.0
    %746 = vmatpush1.msra.mxu0 0.0
    %747 = vmatprep.subr.mxu0 0.0
    %748 = vmatpush1.msra.mxu0 0.0
    %749 = vmatprep.subr.mxu0 0.0
    %750 = vmatpush1.msra.mxu0 0.0
    %751 = vmatprep.subr.mxu0 0.0
    %752 = vmatpush1.msra.mxu0 0.0
    %753 = vmatprep.subr.mxu0 0.0
    %754 = vmatpush1.msra.mxu0 0.0
    %755 = vmatprep.subr.mxu0 0.0
    %756 = vmatpush1.msra.mxu0 0.0
    %757 = vmatprep.subr.mxu0 0.0
    %758 = vmatpush1.msra.mxu0 0.0
    %759 = vmatprep.subr.mxu0 0.0
    %760 = vmatpush1.msra.mxu0 0.0
    %761 = vmatprep.subr.mxu0 0.0
    %762 = vmatpush1.msra.mxu0 0.0
    %763 = vmatprep.subr.mxu0 0.0
    %764 = vmatpush1.msra.mxu0 0.0
    %765 = vmatprep.subr.mxu0 0.0
    %766 = vmatpush1.msra.mxu0 0.0
    %767 = vmatprep.subr.mxu0 0.0
    %768 = vmatpush1.msra.mxu0 0.0
    %769 = vmatprep.subr.mxu0 0.0
    %770 = vmatpush1.msra.mxu0 0.0
    %771 = vmatprep.subr.mxu0 0.0
    %772 = vmatpush1.msra.mxu0 0.0
    %773 = vmatprep.subr.mxu0 0.0
    %774 = vmatpush1.msra.mxu0 0.0
    %775 = vmatprep.subr.mxu0 0.0
    %776 = vmatpush1.msra.mxu0 0.0
    %777 = vmatprep.subr.mxu0 0.0
    %778 = vmatpush1.msra.mxu0 0.0
    %779 = vmatprep.mubr.f32.mxu0 0.0
    %780 = vmatmul.mubr.f32.gmra.mrb[0].mxu0 %v500
    %v781 = vpop.f32.mrb[0].mxu0
    %v782 = vadd.f32 %v711, %v781
    %v783 = vpop.f32.mrb[0].mxu0
    %v784 = vadd.f32 %v713, %v783
    %785 = vdwg.mxu0
    %786 = vmatprep.subr.mxu0 %v47
    %787 = vmatpush1.msra.mxu0 %v46
    %788 = vmatprep.subr.mxu0 %v51
    %789 = vmatpush1.msra.mxu0 %v50
    %790 = vmatprep.subr.mxu0 %v55
    %791 = vmatpush1.msra.mxu0 %v54
    %792 = vmatprep.subr.mxu0 %v59
    %793 = vmatpush1.msra.mxu0 %v58
    %794 = vmatprep.subr.mxu0 %v63
    %795 = vmatpush1.msra.mxu0 %v62
    %796 = vmatprep.subr.mxu0 %v67
    %797 = vmatpush1.msra.mxu0 %v66
    %798 = vmatprep.subr.mxu0 %v71
    %799 = vmatpush1.msra.mxu0 %v70
    %800 = vmatprep.subr.mxu0 %v75
    %801 = vmatpush1.msra.mxu0 %v74
    %802 = vmatprep.subr.mxu0 %v79
    %803 = vmatpush1.msra.mxu0 %v78
    %804 = vmatprep.subr.mxu0 %v83
    %805 = vmatpush1.msra.mxu0 %v82
    %806 = vmatprep.subr.mxu0 %v87
    %807 = vmatpush1.msra.mxu0 %v86
    %808 = vmatprep.subr.mxu0 %v91
    %809 = vmatpush1.msra.mxu0 %v90
    %810 = vmatprep.subr.mxu0 %v95
    %811 = vmatpush1.msra.mxu0 %v94
    %812 = vmatprep.subr.mxu0 %v99
    %813 = vmatpush1.msra.mxu0 %v98
    %814 = vmatprep.subr.mxu0 %v103
    %815 = vmatpush1.msra.mxu0 %v102
    %816 = vmatprep.subr.mxu0 %v107
    %817 = vmatpush1.msra.mxu0 %v106
    %818 = vmatprep.subr.mxu0 %v111
    %819 = vmatpush1.msra.mxu0 %v110
    %820 = vmatprep.subr.mxu0 %v115
    %821 = vmatpush1.msra.mxu0 %v114
    %822 = vmatprep.subr.mxu0 %v119
    %823 = vmatpush1.msra.mxu0 %v118
    %824 = vmatprep.subr.mxu0 %v123
    %825 = vmatpush1.msra.mxu0 %v122
    %826 = vmatprep.subr.mxu0 %v127
    %827 = vmatpush1.msra.mxu0 %v126
    %828 = vmatprep.subr.mxu0 %v131
    %829 = vmatpush1.msra.mxu0 %v130
    %830 = vmatprep.subr.mxu0 %v135
    %831 = vmatpush1.msra.mxu0 %v134
    %832 = vmatprep.subr.mxu0 %v139
    %833 = vmatpush1.msra.mxu0 %v138
    %834 = vmatprep.subr.mxu0 %v143
    %835 = vmatpush1.msra.mxu0 %v142
    %836 = vmatprep.subr.mxu0 %v147
    %837 = vmatpush1.msra.mxu0 %v146
    %838 = vmatprep.subr.mxu0 %v151
    %839 = vmatpush1.msra.mxu0 %v150
    %840 = vmatprep.subr.mxu0 %v155
    %841 = vmatpush1.msra.mxu0 %v154
    %842 = vmatprep.subr.mxu0 %v159
    %843 = vmatpush1.msra.mxu0 %v158
    %844 = vmatprep.subr.mxu0 %v163
    %845 = vmatpush1.msra.mxu0 %v162
    %846 = vmatprep.subr.mxu0 %v167
    %847 = vmatpush1.msra.mxu0 %v166
    %848 = vmatprep.subr.mxu0 %v171
    %849 = vmatpush1.msra.mxu0 %v170
    %850 = vmatprep.mubr.f32.mxu0 %v475
    %851 = vmatmul.mubr.f32.gmra.mrb[0].mxu0 %v467
    %v852 = vpop.f32.mrb[0].mxu0
    %v853 = vadd.f32 %v449, %v852
    %v854 = vpop.f32.mrb[0].mxu0
    %v855 = vadd.f32 %v453, %v854
    %856 = vdwg.mxu0
    %857 = vmatprep.subr.mxu0 %v175
    %858 = vmatpush1.msra.mxu0 %v174
    %859 = vmatprep.subr.mxu0 %v179
    %860 = vmatpush1.msra.mxu0 %v178
    %861 = vmatprep.subr.mxu0 %v183
    %862 = vmatpush1.msra.mxu0 %v182
    %863 = vmatprep.subr.mxu0 %v187
    %864 = vmatpush1.msra.mxu0 %v186
    %865 = vmatprep.subr.mxu0 %v191
    %866 = vmatpush1.msra.mxu0 %v190
    %867 = vmatprep.subr.mxu0 %v195
    %868 = vmatpush1.msra.mxu0 %v194
    %869 = vmatprep.subr.mxu0 %v199
    %870 = vmatpush1.msra.mxu0 %v198
    %871 = vmatprep.subr.mxu0 %v203
    %872 = vmatpush1.msra.mxu0 %v202
    %873 = vmatprep.subr.mxu0 %v207
    %874 = vmatpush1.msra.mxu0 %v206
    %875 = vmatprep.subr.mxu0 %v211
    %876 = vmatpush1.msra.mxu0 %v210
    %877 = vmatprep.subr.mxu0 %v215
    %878 = vmatpush1.msra.mxu0 %v214
    %879 = vmatprep.subr.mxu0 %v219
    %880 = vmatpush1.msra.mxu0 %v218
    %881 = vmatprep.subr.mxu0 %v223
    %882 = vmatpush1.msra.mxu0 %v222
    %883 = vmatprep.subr.mxu0 %v227
    %884 = vmatpush1.msra.mxu0 %v226
    %885 = vmatprep.subr.mxu0 %v231
    %886 = vmatpush1.msra.mxu0 %v230
    %887 = vmatprep.subr.mxu0 %v235
    %888 = vmatpush1.msra.mxu0 %v234
    %889 = vmatprep.subr.mxu0 %v239
    %890 = vmatpush1.msra.mxu0 %v238
    %891 = vmatprep.subr.mxu0 %v243
    %892 = vmatpush1.msra.mxu0 %v242
    %893 = vmatprep.subr.mxu0 %v247
    %894 = vmatpush1.msra.mxu0 %v246
    %895 = vmatprep.subr.mxu0 %v251
    %896 = vmatpush1.msra.mxu0 %v250
    %897 = vmatprep.subr.mxu0 %v255
    %898 = vmatpush1.msra.mxu0 %v254
    %899 = vmatprep.subr.mxu0 %v259
    %900 = vmatpush1.msra.mxu0 %v258
    %901 = vmatprep.subr.mxu0 %v263
    %902 = vmatpush1.msra.mxu0 %v262
    %903 = vmatprep.subr.mxu0 %v267
    %904 = vmatpush1.msra.mxu0 %v266
    %905 = vmatprep.subr.mxu0 %v271
    %906 = vmatpush1.msra.mxu0 %v270
    %907 = vmatprep.subr.mxu0 %v275
    %908 = vmatpush1.msra.mxu0 %v274
    %909 = vmatprep.subr.mxu0 %v279
    %910 = vmatpush1.msra.mxu0 %v278
    %911 = vmatprep.subr.mxu0 %v283
    %912 = vmatpush1.msra.mxu0 %v282
    %913 = vmatprep.subr.mxu0 %v287
    %914 = vmatpush1.msra.mxu0 %v286
    %915 = vmatprep.subr.mxu0 %v291
    %916 = vmatpush1.msra.mxu0 %v290
    %917 = vmatprep.subr.mxu0 %v295
    %918 = vmatpush1.msra.mxu0 %v294
    %919 = vmatprep.subr.mxu0 %v299
    %920 = vmatpush1.msra.mxu0 %v298
    %921 = vmatprep.mubr.f32.mxu0 %v476
    %922 = vmatmul.mubr.f32.gmra.mrb[0].mxu0 %v474
    %v923 = vpop.f32.mrb[0].mxu0
    %v924 = vadd.f32 %v853, %v923
    %v925 = vpop.f32.mrb[0].mxu0
    %v926 = vadd.f32 %v855, %v925
    %927 = vdwg.mxu0
    %928 = vmatprep.subr.mxu0 %v303
    %929 = vmatpush1.msra.mxu0 %v302
    %930 = vmatprep.subr.mxu0 %v307
    %931 = vmatpush1.msra.mxu0 %v306
    %932 = vmatprep.subr.mxu0 %v311
    %933 = vmatpush1.msra.mxu0 %v310
    %934 = vmatprep.subr.mxu0 %v315
    %935 = vmatpush1.msra.mxu0 %v314
    %936 = vmatprep.subr.mxu0 %v319
    %937 = vmatpush1.msra.mxu0 %v318
    %938 = vmatprep.subr.mxu0 %v323
    %939 = vmatpush1.msra.mxu0 %v322
    %940 = vmatprep.subr.mxu0 %v327
    %941 = vmatpush1.msra.mxu0 %v326
    %942 = vmatprep.subr.mxu0 %v331
    %943 = vmatpush1.msra.mxu0 %v330
    %944 = vmatprep.subr.mxu0 %v335
    %945 = vmatpush1.msra.mxu0 %v334
    %946 = vmatprep.subr.mxu0 %v339
    %947 = vmatpush1.msra.mxu0 %v338
    %948 = vmatprep.subr.mxu0 %v343
    %949 = vmatpush1.msra.mxu0 %v342
    %950 = vmatprep.subr.mxu0 %v347
    %951 = vmatpush1.msra.mxu0 %v346
    %952 = vmatprep.subr.mxu0 %v351
    %953 = vmatpush1.msra.mxu0 %v350
    %954 = vmatprep.subr.mxu0 %v355
    %955 = vmatpush1.msra.mxu0 %v354
    %956 = vmatprep.subr.mxu0 %v359
    %957 = vmatpush1.msra.mxu0 %v358
    %958 = vmatprep.subr.mxu0 %v363
    %959 = vmatpush1.msra.mxu0 %v362
    %960 = vmatprep.subr.mxu0 %v367
    %961 = vmatpush1.msra.mxu0 %v366
    %962 = vmatprep.subr.mxu0 %v371
    %963 = vmatpush1.msra.mxu0 %v370
    %964 = vmatprep.subr.mxu0 %v375
    %965 = vmatpush1.msra.mxu0 %v374
    %966 = vmatprep.subr.mxu0 %v379
    %967 = vmatpush1.msra.mxu0 %v378
    %968 = vmatprep.subr.mxu0 %v383
    %969 = vmatpush1.msra.mxu0 %v382
    %970 = vmatprep.subr.mxu0 %v387
    %971 = vmatpush1.msra.mxu0 %v386
    %972 = vmatprep.subr.mxu0 %v391
    %973 = vmatpush1.msra.mxu0 %v390
    %974 = vmatprep.subr.mxu0 %v395
    %975 = vmatpush1.msra.mxu0 %v394
    %976 = vmatprep.subr.mxu0 %v399
    %977 = vmatpush1.msra.mxu0 %v398
    %978 = vmatprep.subr.mxu0 %v403
    %979 = vmatpush1.msra.mxu0 %v402
    %980 = vmatprep.subr.mxu0 %v407
    %981 = vmatpush1.msra.mxu0 %v406
    %982 = vmatprep.subr.mxu0 %v411
    %983 = vmatpush1.msra.mxu0 %v410
    %984 = vmatprep.subr.mxu0 %v415
    %985 = vmatpush1.msra.mxu0 %v414
    %986 = vmatprep.subr.mxu0 %v419
    %987 = vmatpush1.msra.mxu0 %v418
    %988 = vmatprep.subr.mxu0 %v423
    %989 = vmatpush1.msra.mxu0 %v422
    %990 = vmatprep.subr.mxu0 %v427
    %991 = vmatpush1.msra.mxu0 %v426
    %992 = vmatprep.mubr.f32.mxu0 %v492
    %993 = vmatmul.mubr.f32.gmra.mrb[0].mxu0 %v484
    %v994 = vpop.f32.mrb[0].mxu0
    %v995 = vadd.f32 %v924, %v994
    %v996 = vpop.f32.mrb[0].mxu0
    %v997 = vadd.f32 %v926, %v996
    %998 = vdwg.mxu0
    %999 = vmatprep.subr.mxu0 %v431
    %1000 = vmatpush1.msra.mxu0 %v430
    %1001 = vmatprep.subr.mxu0 %v435
    %1002 = vmatpush1.msra.mxu0 %v434
    %1003 = vmatprep.subr.mxu0 0.0
    %1004 = vmatpush1.msra.mxu0 0.0
    %1005 = vmatprep.subr.mxu0 0.0
    %1006 = vmatpush1.msra.mxu0 0.0
    %1007 = vmatprep.subr.mxu0 0.0
    %1008 = vmatpush1.msra.mxu0 0.0
    %1009 = vmatprep.subr.mxu0 0.0
    %1010 = vmatpush1.msra.mxu0 0.0
    %1011 = vmatprep.subr.mxu0 0.0
    %1012 = vmatpush1.msra.mxu0 0.0
    %1013 = vmatprep.subr.mxu0 0.0
    %1014 = vmatpush1.msra.mxu0 0.0
    %1015 = vmatprep.subr.mxu0 0.0
    %1016 = vmatpush1.msra.mxu0 0.0
    %1017 = vmatprep.subr.mxu0 0.0
    %1018 = vmatpush1.msra.mxu0 0.0
    %1019 = vmatprep.subr.mxu0 0.0
    %1020 = vmatpush1.msra.mxu0 0.0
    %1021 = vmatprep.subr.mxu0 0.0
    %1022 = vmatpush1.msra.mxu0 0.0
    %1023 = vmatprep.subr.mxu0 0.0
    %1024 = vmatpush1.msra.mxu0 0.0
    %1025 = vmatprep.subr.mxu0 0.0
    %1026 = vmatpush1.msra.mxu0 0.0
    %1027 = vmatprep.subr.mxu0 0.0
    %1028 = vmatpush1.msra.mxu0 0.0
    %1029 = vmatprep.subr.mxu0 0.0
    %1030 = vmatpush1.msra.mxu0 0.0
    %1031 = vmatprep.subr.mxu0 0.0
    %1032 = vmatpush1.msra.mxu0 0.0
    %1033 = vmatprep.subr.mxu0 0.0
    %1034 = vmatpush1.msra.mxu0 0.0
    %1035 = vmatprep.subr.mxu0 0.0
    %1036 = vmatpush1.msra.mxu0 0.0
    %1037 = vmatprep.subr.mxu0 0.0
    %1038 = vmatpush1.msra.mxu0 0.0
    %1039 = vmatprep.subr.mxu0 0.0
    %1040 = vmatpush1.msra.mxu0 0.0
    %1041 = vmatprep.subr.mxu0 0.0
    %1042 = vmatpush1.msra.mxu0 0.0
    %1043 = vmatprep.subr.mxu0 0.0
    %1044 = vmatpush1.msra.mxu0 0.0
    %1045 = vmatprep.subr.mxu0 0.0
    %1046 = vmatpush1.msra.mxu0 0.0
    %1047 = vmatprep.subr.mxu0 0.0
    %1048 = vmatpush1.msra.mxu0 0.0
    %1049 = vmatprep.subr.mxu0 0.0
    %1050 = vmatpush1.msra.mxu0 0.0
    %1051 = vmatprep.subr.mxu0 0.0
    %1052 = vmatpush1.msra.mxu0 0.0
    %1053 = vmatprep.subr.mxu0 0.0
    %1054 = vmatpush1.msra.mxu0 0.0
    %1055 = vmatprep.subr.mxu0 0.0
    %1056 = vmatpush1.msra.mxu0 0.0
    %1057 = vmatprep.subr.mxu0 0.0
    %1058 = vmatpush1.msra.mxu0 0.0
    %1059 = vmatprep.subr.mxu0 0.0
    %1060 = vmatpush1.msra.mxu0 0.0
    %1061 = vmatprep.subr.mxu0 0.0
    %1062 = vmatpush1.msra.mxu0 0.0
    %1063 = vmatprep.mubr.f32.mxu0 0.0
    %1064 = vmatmul.mubr.f32.gmra.mrb[0].mxu0 %v500
    %v1065 = vpop.f32.mrb[0].mxu0
    %v1066 = vadd.f32 %v995, %v1065
    %v1067 = vpop.f32.mrb[0].mxu0
    %v1068 = vadd.f32 %v997, %v1067
    %1069 = vdwg.mxu0
    %v1070 = vmax.f32 %v782, 0.0
    %v1071 = vmax.f32 %v784, 0.0
    %v1072 = vmax.f32 %v1066, 0.0
    %v1073 = vmax.f32 %v1068, 0.0
    %v1074 = vld [vmem:[%s4] sm:$0xff]
    %v1075 = vld [vmem:[%s4 + $0x8] sm:$0xff]
    %v1076 = vld [vmem:[%s4 + $0x10] sm:$0xff]
    %v1077 = vld [vmem:[%s4 + $0x18] sm:$0xff]
    %v1078 = vld [vmem:[%s4 + $0x20] sm:$0xff]
    %v1079 = vld [vmem:[%s4 + $0x28] sm:$0xff]
    %v1080 = vld [vmem:[%s4 + $0x30] sm:$0xff]
    %v1081 = vld [vmem:[%s4 + $0x38] sm:$0xff]
    %v1082 = vld [vmem:[%s4 + $0x40] sm:$0xff]
    %v1083 = vld [vmem:[%s4 + $0x48] sm:$0xff]
    %v1084 = vld [vmem:[%s4 + $0x50] sm:$0xff]
    %v1085 = vld [vmem:[%s4 + $0x58] sm:$0xff]
    %v1086 = vld [vmem:[%s4 + $0x60] sm:$0xff]
    %v1087 = vld [vmem:[%s4 + $0x68] sm:$0xff]
    %v1088 = vld [vmem:[%s4 + $0x70] sm:$0xff]
    %v1089 = vld [vmem:[%s4 + $0x78] sm:$0xff]
    %v1090 = vld [vmem:[%s4 + $0x80] sm:$0xff]
    %v1091 = vld [vmem:[%s4 + $0x88] sm:$0xff]
    %v1092 = vld [vmem:[%s4 + $0x90] sm:$0xff]
    %v1093 = vld [vmem:[%s4 + $0x98] sm:$0xff]
    %v1094 = vld [vmem:[%s4 + $0xa0] sm:$0xff]
    %v1095 = vld [vmem:[%s4 + $0xa8] sm:$0xff]
    %v1096 = vld [vmem:[%s4 + $0xb0] sm:$0xff]
    %v1097 = vld [vmem:[%s4 + $0xb8] sm:$0xff]
    %v1098 = vld [vmem:[%s4 + $0xc0] sm:$0xff]
    %v1099 = vld [vmem:[%s4 + $0xc8] sm:$0xff]
    %v1100 = vld [vmem:[%s4 + $0xd0] sm:$0xff]
    %v1101 = vld [vmem:[%s4 + $0xd8] sm:$0xff]
    %v1102 = vld [vmem:[%s4 + $0xe0] sm:$0xff]
    %v1103 = vld [vmem:[%s4 + $0xe8] sm:$0xff]
    %v1104 = vld [vmem:[%s4 + $0xf0] sm:$0xff]
    %v1105 = vld [vmem:[%s4 + $0xf8] sm:$0xff]
    %v1106 = vld [vmem:[%s4 + $0x100] sm:$0xff]
    %v1107 = vld [vmem:[%s4 + $0x108] sm:$0xff]
    %v1108 = vld [vmem:[%s4 + $0x110] sm:$0xff]
    %v1109 = vld [vmem:[%s4 + $0x118] sm:$0xff]
    %v1110 = vld [vmem:[%s4 + $0x120] sm:$0xff]
    %v1111 = vld [vmem:[%s4 + $0x128] sm:$0xff]
    %v1112 = vld [vmem:[%s4 + $0x130] sm:$0xff]
    %v1113 = vld [vmem:[%s4 + $0x138] sm:$0xff]
    %v1114 = vld [vmem:[%s4 + $0x140] sm:$0xff]
    %v1115 = vld [vmem:[%s4 + $0x148] sm:$0xff]
    %v1116 = vld [vmem:[%s4 + $0x150] sm:$0xff]
    %v1117 = vld [vmem:[%s4 + $0x158] sm:$0xff]
    %v1118 = vld [vmem:[%s4 + $0x160] sm:$0xff]
    %v1119 = vld [vmem:[%s4 + $0x168] sm:$0xff]
    %v1120 = vld [vmem:[%s4 + $0x170] sm:$0xff]
    %v1121 = vld [vmem:[%s4 + $0x178] sm:$0xff]
    %v1122 = vld [vmem:[%s4 + $0x180] sm:$0xff]
    %v1123 = vld [vmem:[%s4 + $0x188] sm:$0xff]
    %v1124 = vld [vmem:[%s4 + $0x190] sm:$0xff]
    %v1125 = vld [vmem:[%s4 + $0x198] sm:$0xff]
    %v1126 = vld [vmem:[%s4 + $0x1a0] sm:$0xff]
    %v1127 = vld [vmem:[%s4 + $0x1a8] sm:$0xff]
    %v1128 = vld [vmem:[%s4 + $0x1b0] sm:$0xff]
    %v1129 = vld [vmem:[%s4 + $0x1b8] sm:$0xff]
    %v1130 = vld [vmem:[%s4 + $0x1c0] sm:$0xff]
    %v1131 = vld [vmem:[%s4 + $0x1c8] sm:$0xff]
    %v1132 = vld [vmem:[%s4 + $0x1d0] sm:$0xff]
    %v1133 = vld [vmem:[%s4 + $0x1d8] sm:$0xff]
    %v1134 = vld [vmem:[%s4 + $0x1e0] sm:$0xff]
    %v1135 = vld [vmem:[%s4 + $0x1e8] sm:$0xff]
    %v1136 = vld [vmem:[%s4 + $0x1f0] sm:$0xf]
    %v1137 = vld [vmem:[%s5] sm:$0x1]
    %v1139 = vlaneseq
    %v1140 = vshrl.u32 %v1139, 7
    %v1141 = vsub.s32 0, %v1140
    %v1142 = vrot.slane %v1137, %v1141
    %vm1144 = vcmask 949248
    %v1146 = vsel %vm1144, %v1073, 0
    %vm1148 = vcmask 1043456
    %v1150 = vsel %vm1148, %v1136, 0
    %1152 = vmatprep.subr.mxu0 0.0
    %1153 = vmatpush1.msra.mxu0 %v1074
    %1154 = vmatprep.subr.mxu0 0.0
    %1155 = vmatpush1.msra.mxu0 %v1075
    %1156 = vmatprep.subr.mxu0 0.0
    %1157 = vmatpush1.msra.mxu0 %v1076
    %1158 = vmatprep.subr.mxu0 0.0
    %1159 = vmatpush1.msra.mxu0 %v1077
    %1160 = vmatprep.subr.mxu0 0.0
    %1161 = vmatpush1.msra.mxu0 %v1078
    %1162 = vmatprep.subr.mxu0 0.0
    %1163 = vmatpush1.msra.mxu0 %v1079
    %1164 = vmatprep.subr.mxu0 0.0
    %1165 = vmatpush1.msra.mxu0 %v1080
    %1166 = vmatprep.subr.mxu0 0.0
    %1167 = vmatpush1.msra.mxu0 %v1081
    %1168 = vmatprep.subr.mxu0 0.0
    %1169 = vmatpush1.msra.mxu0 %v1082
    %1170 = vmatprep.subr.mxu0 0.0
    %1171 = vmatpush1.msra.mxu0 %v1083
    %1172 = vmatprep.subr.mxu0 0.0
    %1173 = vmatpush1.msra.mxu0 %v1084
    %1174 = vmatprep.subr.mxu0 0.0
    %1175 = vmatpush1.msra.mxu0 %v1085
    %1176 = vmatprep.subr.mxu0 0.0
    %1177 = vmatpush1.msra.mxu0 %v1086
    %1178 = vmatprep.subr.mxu0 0.0
    %1179 = vmatpush1.msra.mxu0 %v1087
    %1180 = vmatprep.subr.mxu0 0.0
    %1181 = vmatpush1.msra.mxu0 %v1088
    %1182 = vmatprep.subr.mxu0 0.0
    %1183 = vmatpush1.msra.mxu0 %v1089
    %1184 = vmatprep.subr.mxu0 0.0
    %1185 = vmatpush1.msra.mxu0 %v1090
    %1186 = vmatprep.subr.mxu0 0.0
    %1187 = vmatpush1.msra.mxu0 %v1091
    %1188 = vmatprep.subr.mxu0 0.0
    %1189 = vmatpush1.msra.mxu0 %v1092
    %1190 = vmatprep.subr.mxu0 0.0
    %1191 = vmatpush1.msra.mxu0 %v1093
    %1192 = vmatprep.subr.mxu0 0.0
    %1193 = vmatpush1.msra.mxu0 %v1094
    %1194 = vmatprep.subr.mxu0 0.0
    %1195 = vmatpush1.msra.mxu0 %v1095
    %1196 = vmatprep.subr.mxu0 0.0
    %1197 = vmatpush1.msra.mxu0 %v1096
    %1198 = vmatprep.subr.mxu0 0.0
    %1199 = vmatpush1.msra.mxu0 %v1097
    %1200 = vmatprep.subr.mxu0 0.0
    %1201 = vmatpush1.msra.mxu0 %v1098
    %1202 = vmatprep.subr.mxu0 0.0
    %1203 = vmatpush1.msra.mxu0 %v1099
    %1204 = vmatprep.subr.mxu0 0.0
    %1205 = vmatpush1.msra.mxu0 %v1100
    %1206 = vmatprep.subr.mxu0 0.0
    %1207 = vmatpush1.msra.mxu0 %v1101
    %1208 = vmatprep.subr.mxu0 0.0
    %1209 = vmatpush1.msra.mxu0 %v1102
    %1210 = vmatprep.subr.mxu0 0.0
    %1211 = vmatpush1.msra.mxu0 %v1103
    %1212 = vmatprep.subr.mxu0 0.0
    %1213 = vmatpush1.msra.mxu0 %v1104
    %1214 = vmatprep.subr.mxu0 0.0
    %1215 = vmatpush1.msra.mxu0 %v1105
    %1216 = vmatprep.mubr.f32.mxu0 %v1071
    %1217 = vmatmul.mubr.f32.gmra.mrb[0].mxu0 %v1070
    %v1218 = vpop.f32.mrb[0].mxu0
    %v1219 = vadd.f32 %v1142, %v1218
    %v1220 = vpop.f32.mrb[0].mxu0
    %1221 = vdwg.mxu0
    %1222 = vmatprep.subr.mxu0 0.0
    %1223 = vmatpush1.msra.mxu0 %v1106
    %1224 = vmatprep.subr.mxu0 0.0
    %1225 = vmatpush1.msra.mxu0 %v1107
    %1226 = vmatprep.subr.mxu0 0.0
    %1227 = vmatpush1.msra.mxu0 %v1108
    %1228 = vmatprep.subr.mxu0 0.0
    %1229 = vmatpush1.msra.mxu0 %v1109
    %1230 = vmatprep.subr.mxu0 0.0
    %1231 = vmatpush1.msra.mxu0 %v1110
    %1232 = vmatprep.subr.mxu0 0.0
    %1233 = vmatpush1.msra.mxu0 %v1111
    %1234 = vmatprep.subr.mxu0 0.0
    %1235 = vmatpush1.msra.mxu0 %v1112
    %1236 = vmatprep.subr.mxu0 0.0
    %1237 = vmatpush1.msra.mxu0 %v1113
    %1238 = vmatprep.subr.mxu0 0.0
    %1239 = vmatpush1.msra.mxu0 %v1114
    %1240 = vmatprep.subr.mxu0 0.0
    %1241 = vmatpush1.msra.mxu0 %v1115
    %1242 = vmatprep.subr.mxu0 0.0
    %1243 = vmatpush1.msra.mxu0 %v1116
    %1244 = vmatprep.subr.mxu0 0.0
    %1245 = vmatpush1.msra.mxu0 %v1117
    %1246 = vmatprep.subr.mxu0 0.0
    %1247 = vmatpush1.msra.mxu0 %v1118
    %1248 = vmatprep.subr.mxu0 0.0
    %1249 = vmatpush1.msra.mxu0 %v1119
    %1250 = vmatprep.subr.mxu0 0.0
    %1251 = vmatpush1.msra.mxu0 %v1120
    %1252 = vmatprep.subr.mxu0 0.0
    %1253 = vmatpush1.msra.mxu0 %v1121
    %1254 = vmatprep.subr.mxu0 0.0
    %1255 = vmatpush1.msra.mxu0 %v1122
    %1256 = vmatprep.subr.mxu0 0.0
    %1257 = vmatpush1.msra.mxu0 %v1123
    %1258 = vmatprep.subr.mxu0 0.0
    %1259 = vmatpush1.msra.mxu0 %v1124
    %1260 = vmatprep.subr.mxu0 0.0
    %1261 = vmatpush1.msra.mxu0 %v1125
    %1262 = vmatprep.subr.mxu0 0.0
    %1263 = vmatpush1.msra.mxu0 %v1126
    %1264 = vmatprep.subr.mxu0 0.0
    %1265 = vmatpush1.msra.mxu0 %v1127
    %1266 = vmatprep.subr.mxu0 0.0
    %1267 = vmatpush1.msra.mxu0 %v1128
    %1268 = vmatprep.subr.mxu0 0.0
    %1269 = vmatpush1.msra.mxu0 %v1129
    %1270 = vmatprep.subr.mxu0 0.0
    %1271 = vmatpush1.msra.mxu0 %v1130
    %1272 = vmatprep.subr.mxu0 0.0
    %1273 = vmatpush1.msra.mxu0 %v1131
    %1274 = vmatprep.subr.mxu0 0.0
    %1275 = vmatpush1.msra.mxu0 %v1132
    %1276 = vmatprep.subr.mxu0 0.0
    %1277 = vmatpush1.msra.mxu0 %v1133
    %1278 = vmatprep.subr.mxu0 0.0
    %1279 = vmatpush1.msra.mxu0 %v1134
    %1280 = vmatprep.subr.mxu0 0.0
    %1281 = vmatpush1.msra.mxu0 %v1135
    %1282 = vmatprep.subr.mxu0 0.0
    %1283 = vmatpush1.msra.mxu0 %v1150
    %1284 = vmatprep.subr.mxu0 0.0
    %1285 = vmatpush1.msra.mxu0 0.0
    %1286 = vmatprep.mubr.f32.mxu0 %v1146
    %1287 = vmatmul.mubr.f32.gmra.mrb[0].mxu0 %v1072
    %v1288 = vpop.f32.mrb[0].mxu0
    %v1289 = vadd.f32 %v1219, %v1288
    %v1290 = vpop.f32.mrb[0].mxu0
    %1291 = vdwg.mxu0
    %v1292 = vld [vmem:[%s6] sm:$0xff]
    %v1293 = vld [vmem:[%s6 + $0x8] sm:$0xff]
    %v1294 = vld [vmem:[%s6 + $0x10] sm:$0xff]
    %v1295 = vld [vmem:[%s6 + $0x18] sm:$0xff]
    %v1296 = vld [vmem:[%s6 + $0x20] sm:$0xff]
    %v1297 = vld [vmem:[%s6 + $0x28] sm:$0xff]
    %v1298 = vld [vmem:[%s6 + $0x30] sm:$0xff]
    %v1299 = vld [vmem:[%s6 + $0x38] sm:$0xff]
    %v1300 = vld [vmem:[%s6 + $0x40] sm:$0xff]
    %v1301 = vld [vmem:[%s6 + $0x48] sm:$0xff]
    %v1302 = vld [vmem:[%s6 + $0x50] sm:$0xff]
    %v1303 = vld [vmem:[%s6 + $0x58] sm:$0xff]
    %v1304 = vld [vmem:[%s6 + $0x60] sm:$0xff]
    %v1305 = vld [vmem:[%s6 + $0x68] sm:$0xff]
    %v1306 = vld [vmem:[%s6 + $0x70] sm:$0xff]
    %v1307 = vld [vmem:[%s6 + $0x78] sm:$0xff]
    %v1308 = vld [vmem:[%s6 + $0x80] sm:$0xff]
    %v1309 = vld [vmem:[%s6 + $0x88] sm:$0xff]
    %v1310 = vld [vmem:[%s6 + $0x90] sm:$0xff]
    %v1311 = vld [vmem:[%s6 + $0x98] sm:$0xff]
    %v1312 = vld [vmem:[%s6 + $0xa0] sm:$0xff]
    %v1313 = vld [vmem:[%s6 + $0xa8] sm:$0xff]
    %v1314 = vld [vmem:[%s6 + $0xb0] sm:$0xff]
    %v1315 = vld [vmem:[%s6 + $0xb8] sm:$0xff]
    %v1316 = vld [vmem:[%s6 + $0xc0] sm:$0xff]
    %v1317 = vld [vmem:[%s6 + $0xc8] sm:$0xff]
    %v1318 = vld [vmem:[%s6 + $0xd0] sm:$0xff]
    %v1319 = vld [vmem:[%s6 + $0xd8] sm:$0xff]
    %v1320 = vld [vmem:[%s6 + $0xe0] sm:$0xff]
    %v1321 = vld [vmem:[%s6 + $0xe8] sm:$0xff]
    %v1322 = vld [vmem:[%s6 + $0xf0] sm:$0xff]
    %v1323 = vld [vmem:[%s6 + $0xf8] sm:$0xff]
    %v1324 = vld [vmem:[%s6 + $0x100] sm:$0xff]
    %v1325 = vld [vmem:[%s6 + $0x108] sm:$0xff]
    %v1326 = vld [vmem:[%s6 + $0x110] sm:$0xff]
    %v1327 = vld [vmem:[%s6 + $0x118] sm:$0xff]
    %v1328 = vld [vmem:[%s6 + $0x120] sm:$0xff]
    %v1329 = vld [vmem:[%s6 + $0x128] sm:$0xff]
    %v1330 = vld [vmem:[%s6 + $0x130] sm:$0xff]
    %v1331 = vld [vmem:[%s6 + $0x138] sm:$0xff]
    %v1332 = vld [vmem:[%s6 + $0x140] sm:$0xff]
    %v1333 = vld [vmem:[%s6 + $0x148] sm:$0xff]
    %v1334 = vld [vmem:[%s6 + $0x150] sm:$0xff]
    %v1335 = vld [vmem:[%s6 + $0x158] sm:$0xff]
    %v1336 = vld [vmem:[%s6 + $0x160] sm:$0xff]
    %v1337 = vld [vmem:[%s6 + $0x168] sm:$0xff]
    %v1338 = vld [vmem:[%s6 + $0x170] sm:$0xff]
    %v1339 = vld [vmem:[%s6 + $0x178] sm:$0xff]
    %v1340 = vld [vmem:[%s6 + $0x180] sm:$0xff]
    %v1341 = vld [vmem:[%s6 + $0x188] sm:$0xff]
    %v1342 = vld [vmem:[%s6 + $0x190] sm:$0xff]
    %v1343 = vld [vmem:[%s6 + $0x198] sm:$0xff]
    %v1344 = vld [vmem:[%s6 + $0x1a0] sm:$0xff]
    %v1345 = vld [vmem:[%s6 + $0x1a8] sm:$0xff]
    %v1346 = vld [vmem:[%s6 + $0x1b0] sm:$0xff]
    %v1347 = vld [vmem:[%s6 + $0x1b8] sm:$0xff]
    %v1348 = vld [vmem:[%s6 + $0x1c0] sm:$0xff]
    %v1349 = vld [vmem:[%s6 + $0x1c8] sm:$0xff]
    %v1350 = vld [vmem:[%s6 + $0x1d0] sm:$0xff]
    %v1351 = vld [vmem:[%s6 + $0x1d8] sm:$0xff]
    %v1352 = vld [vmem:[%s6 + $0x1e0] sm:$0xff]
    %v1353 = vld [vmem:[%s6 + $0x1e8] sm:$0xff]
    %v1354 = vld [vmem:[%s6 + $0x1f0] sm:$0xf]
    %v1355 = vld [vmem:[%s7] sm:$0x1]
    %v1357 = vlaneseq
    %v1358 = vshrl.u32 %v1357, 7
    %v1359 = vsub.s32 0, %v1358
    %v1360 = vrot.slane %v1355, %v1359
    %v1363 = vsel %vm1148, %v1354, 0
    %1365 = vmatprep.subr.mxu0 0.0
    %1366 = vmatpush1.msra.mxu0 %v1292
    %1367 = vmatprep.subr.mxu0 0.0
    %1368 = vmatpush1.msra.mxu0 %v1293
    %1369 = vmatprep.subr.mxu0 0.0
    %1370 = vmatpush1.msra.mxu0 %v1294
    %1371 = vmatprep.subr.mxu0 0.0
    %1372 = vmatpush1.msra.mxu0 %v1295
    %1373 = vmatprep.subr.mxu0 0.0
    %1374 = vmatpush1.msra.mxu0 %v1296
    %1375 = vmatprep.subr.mxu0 0.0
    %1376 = vmatpush1.msra.mxu0 %v1297
    %1377 = vmatprep.subr.mxu0 0.0
    %1378 = vmatpush1.msra.mxu0 %v1298
    %1379 = vmatprep.subr.mxu0 0.0
    %1380 = vmatpush1.msra.mxu0 %v1299
    %1381 = vmatprep.subr.mxu0 0.0
    %1382 = vmatpush1.msra.mxu0 %v1300
    %1383 = vmatprep.subr.mxu0 0.0
    %1384 = vmatpush1.msra.mxu0 %v1301
    %1385 = vmatprep.subr.mxu0 0.0
    %1386 = vmatpush1.msra.mxu0 %v1302
    %1387 = vmatprep.subr.mxu0 0.0
    %1388 = vmatpush1.msra.mxu0 %v1303
    %1389 = vmatprep.subr.mxu0 0.0
    %1390 = vmatpush1.msra.mxu0 %v1304
    %1391 = vmatprep.subr.mxu0 0.0
    %1392 = vmatpush1.msra.mxu0 %v1305
    %1393 = vmatprep.subr.mxu0 0.0
    %1394 = vmatpush1.msra.mxu0 %v1306
    %1395 = vmatprep.subr.mxu0 0.0
    %1396 = vmatpush1.msra.mxu0 %v1307
    %1397 = vmatprep.subr.mxu0 0.0
    %1398 = vmatpush1.msra.mxu0 %v1308
    %1399 = vmatprep.subr.mxu0 0.0
    %1400 = vmatpush1.msra.mxu0 %v1309
    %1401 = vmatprep.subr.mxu0 0.0
    %1402 = vmatpush1.msra.mxu0 %v1310
    %1403 = vmatprep.subr.mxu0 0.0
    %1404 = vmatpush1.msra.mxu0 %v1311
    %1405 = vmatprep.subr.mxu0 0.0
    %1406 = vmatpush1.msra.mxu0 %v1312
    %1407 = vmatprep.subr.mxu0 0.0
    %1408 = vmatpush1.msra.mxu0 %v1313
    %1409 = vmatprep.subr.mxu0 0.0
    %1410 = vmatpush1.msra.mxu0 %v1314
    %1411 = vmatprep.subr.mxu0 0.0
    %1412 = vmatpush1.msra.mxu0 %v1315
    %1413 = vmatprep.subr.mxu0 0.0
    %1414 = vmatpush1.msra.mxu0 %v1316
    %1415 = vmatprep.subr.mxu0 0.0
    %1416 = vmatpush1.msra.mxu0 %v1317
    %1417 = vmatprep.subr.mxu0 0.0
    %1418 = vmatpush1.msra.mxu0 %v1318
    %1419 = vmatprep.subr.mxu0 0.0
    %1420 = vmatpush1.msra.mxu0 %v1319
    %1421 = vmatprep.subr.mxu0 0.0
    %1422 = vmatpush1.msra.mxu0 %v1320
    %1423 = vmatprep.subr.mxu0 0.0
    %1424 = vmatpush1.msra.mxu0 %v1321
    %1425 = vmatprep.subr.mxu0 0.0
    %1426 = vmatpush1.msra.mxu0 %v1322
    %1427 = vmatprep.subr.mxu0 0.0
    %1428 = vmatpush1.msra.mxu0 %v1323
    %1429 = vmatprep.mubr.f32.mxu0 %v1071
    %1430 = vmatmul.mubr.f32.gmra.mrb[0].mxu0 %v1070
    %v1431 = vpop.f32.mrb[0].mxu0
    %v1432 = vadd.f32 %v1360, %v1431
    %v1433 = vpop.f32.mrb[0].mxu0
    %1434 = vdwg.mxu0
    %1435 = vmatprep.subr.mxu0 0.0
    %1436 = vmatpush1.msra.mxu0 %v1324
    %1437 = vmatprep.subr.mxu0 0.0
    %1438 = vmatpush1.msra.mxu0 %v1325
    %1439 = vmatprep.subr.mxu0 0.0
    %1440 = vmatpush1.msra.mxu0 %v1326
    %1441 = vmatprep.subr.mxu0 0.0
    %1442 = vmatpush1.msra.mxu0 %v1327
    %1443 = vmatprep.subr.mxu0 0.0
    %1444 = vmatpush1.msra.mxu0 %v1328
    %1445 = vmatprep.subr.mxu0 0.0
    %1446 = vmatpush1.msra.mxu0 %v1329
    %1447 = vmatprep.subr.mxu0 0.0
    %1448 = vmatpush1.msra.mxu0 %v1330
    %1449 = vmatprep.subr.mxu0 0.0
    %1450 = vmatpush1.msra.mxu0 %v1331
    %1451 = vmatprep.subr.mxu0 0.0
    %1452 = vmatpush1.msra.mxu0 %v1332
    %1453 = vmatprep.subr.mxu0 0.0
    %1454 = vmatpush1.msra.mxu0 %v1333
    %1455 = vmatprep.subr.mxu0 0.0
    %1456 = vmatpush1.msra.mxu0 %v1334
    %1457 = vmatprep.subr.mxu0 0.0
    %1458 = vmatpush1.msra.mxu0 %v1335
    %1459 = vmatprep.subr.mxu0 0.0
    %1460 = vmatpush1.msra.mxu0 %v1336
    %1461 = vmatprep.subr.mxu0 0.0
    %1462 = vmatpush1.msra.mxu0 %v1337
    %1463 = vmatprep.subr.mxu0 0.0
    %1464 = vmatpush1.msra.mxu0 %v1338
    %1465 = vmatprep.subr.mxu0 0.0
    %1466 = vmatpush1.msra.mxu0 %v1339
    %1467 = vmatprep.subr.mxu0 0.0
    %1468 = vmatpush1.msra.mxu0 %v1340
    %1469 = vmatprep.subr.mxu0 0.0
    %1470 = vmatpush1.msra.mxu0 %v1341
    %1471 = vmatprep.subr.mxu0 0.0
    %1472 = vmatpush1.msra.mxu0 %v1342
    %1473 = vmatprep.subr.mxu0 0.0
    %1474 = vmatpush1.msra.mxu0 %v1343
    %1475 = vmatprep.subr.mxu0 0.0
    %1476 = vmatpush1.msra.mxu0 %v1344
    %1477 = vmatprep.subr.mxu0 0.0
    %1478 = vmatpush1.msra.mxu0 %v1345
    %1479 = vmatprep.subr.mxu0 0.0
    %1480 = vmatpush1.msra.mxu0 %v1346
    %1481 = vmatprep.subr.mxu0 0.0
    %1482 = vmatpush1.msra.mxu0 %v1347
    %1483 = vmatprep.subr.mxu0 0.0
    %1484 = vmatpush1.msra.mxu0 %v1348
    %1485 = vmatprep.subr.mxu0 0.0
    %1486 = vmatpush1.msra.mxu0 %v1349
    %1487 = vmatprep.subr.mxu0 0.0
    %1488 = vmatpush1.msra.mxu0 %v1350
    %1489 = vmatprep.subr.mxu0 0.0
    %1490 = vmatpush1.msra.mxu0 %v1351
    %1491 = vmatprep.subr.mxu0 0.0
    %1492 = vmatpush1.msra.mxu0 %v1352
    %1493 = vmatprep.subr.mxu0 0.0
    %1494 = vmatpush1.msra.mxu0 %v1353
    %1495 = vmatprep.subr.mxu0 0.0
    %1496 = vmatpush1.msra.mxu0 %v1363
    %1497 = vmatprep.subr.mxu0 0.0
    %1498 = vmatpush1.msra.mxu0 0.0
    %1499 = vmatprep.mubr.f32.mxu0 %v1146
    %1500 = vmatmul.mubr.f32.gmra.mrb[0].mxu0 %v1072
    %v1501 = vpop.f32.mrb[0].mxu0
    %v1502 = vadd.f32 %v1432, %v1501
    %v1503 = vpop.f32.mrb[0].mxu0
    %1504 = vdwg.mxu0
    %v1505 = vld [vmem:[%s1] sm:$0x3]
    %v1506 = vmul.f32 %v1502, %v1505
    %v1507 = vadd.f32 %v1289, %v1506
    %v1508 = vld [vmem:[%s8] sm:$0x1f]
    %v1509 = vld [vmem:[%s8 + $0x8] sm:$0x1f]
    %v1510 = vld [vmem:[%s8 + $0x10] sm:$0x1f]
    %v1511 = vld [vmem:[%s8 + $0x18] sm:$0x1f]
    %v1512 = vld [vmem:[%s9] sm:$0xf]
    %v1514 = vlaneseq
    %v1515 = vshrl.u32 %v1514, 7
    %v1516 = vsub.s32 0, %v1515
    %v1517 = vrot.slane %v1512, %v1516
    %v1518 = vlaneseq
    %v1519 = vshrl.u32 %v1518, 7
    %v1520 = vsub.s32 1, %v1519
    %v1521 = vrot.slane %v1512, %v1520
    %v1522 = vlaneseq
    %v1523 = vshrl.u32 %v1522, 7
    %v1524 = vsub.s32 2, %v1523
    %v1525 = vrot.slane %v1512, %v1524
    %v1526 = vlaneseq
    %v1527 = vshrl.u32 %v1526, 7
    %v1528 = vsub.s32 3, %v1527
    %v1529 = vrot.slane %v1512, %v1528
    %vm1534 = vcmask 39936
    %v1536 = vsel %vm1534, %v1507, 0
    %vm1538 = vcmask 1044480
    %v1540 = vsel %vm1538, %v1508, 0
    %v1543 = vsel %vm1538, %v1509, 0
    %v1546 = vsel %vm1538, %v1510, 0
    %v1549 = vsel %vm1538, %v1511, 0
    %1551 = vmatprep.subr.mxu0 %v1543
    %1552 = vmatpush1.msra.mxu0 %v1540
    %1553 = vmatprep.subr.mxu0 0.0
    %1554 = vmatpush1.msra.mxu0 0.0
    %1555 = vmatprep.subr.mxu0 0.0
    %1556 = vmatpush1.msra.mxu0 0.0
    %1557 = vmatprep.subr.mxu0 0.0
    %1558 = vmatpush1.msra.mxu0 0.0
    %1559 = vmatprep.subr.mxu0 0.0
    %1560 = vmatpush1.msra.mxu0 0.0
    %1561 = vmatprep.subr.mxu0 0.0
    %1562 = vmatpush1.msra.mxu0 0.0
    %1563 = vmatprep.subr.mxu0 0.0
    %1564 = vmatpush1.msra.mxu0 0.0
    %1565 = vmatprep.subr.mxu0 0.0
    %1566 = vmatpush1.msra.mxu0 0.0
    %1567 = vmatprep.subr.mxu0 0.0
    %1568 = vmatpush1.msra.mxu0 0.0
    %1569 = vmatprep.subr.mxu0 0.0
    %1570 = vmatpush1.msra.mxu0 0.0
    %1571 = vmatprep.subr.mxu0 0.0
    %1572 = vmatpush1.msra.mxu0 0.0
    %1573 = vmatprep.subr.mxu0 0.0
    %1574 = vmatpush1.msra.mxu0 0.0
    %1575 = vmatprep.subr.mxu0 0.0
    %1576 = vmatpush1.msra.mxu0 0.0
    %1577 = vmatprep.subr.mxu0 0.0
    %1578 = vmatpush1.msra.mxu0 0.0
    %1579 = vmatprep.subr.mxu0 0.0
    %1580 = vmatpush1.msra.mxu0 0.0
    %1581 = vmatprep.subr.mxu0 0.0
    %1582 = vmatpush1.msra.mxu0 0.0
    %1583 = vmatprep.subr.mxu0 0.0
    %1584 = vmatpush1.msra.mxu0 0.0
    %1585 = vmatprep.subr.mxu0 0.0
    %1586 = vmatpush1.msra.mxu0 0.0
    %1587 = vmatprep.subr.mxu0 0.0
    %1588 = vmatpush1.msra.mxu0 0.0
    %1589 = vmatprep.subr.mxu0 0.0
    %1590 = vmatpush1.msra.mxu0 0.0
    %1591 = vmatprep.subr.mxu0 0.0
    %1592 = vmatpush1.msra.mxu0 0.0
    %1593 = vmatprep.subr.mxu0 0.0
    %1594 = vmatpush1.msra.mxu0 0.0
    %1595 = vmatprep.subr.mxu0 0.0
    %1596 = vmatpush1.msra.mxu0 0.0
    %1597 = vmatprep.subr.mxu0 0.0
    %1598 = vmatpush1.msra.mxu0 0.0
    %1599 = vmatprep.subr.mxu0 0.0
    %1600 = vmatpush1.msra.mxu0 0.0
    %1601 = vmatprep.subr.mxu0 0.0
    %1602 = vmatpush1.msra.mxu0 0.0
    %1603 = vmatprep.subr.mxu0 0.0
    %1604 = vmatpush1.msra.mxu0 0.0
    %1605 = vmatprep.subr.mxu0 0.0
    %1606 = vmatpush1.msra.mxu0 0.0
    %1607 = vmatprep.subr.mxu0 0.0
    %1608 = vmatpush1.msra.mxu0 0.0
    %1609 = vmatprep.subr.mxu0 0.0
    %1610 = vmatpush1.msra.mxu0 0.0
    %1611 = vmatprep.subr.mxu0 0.0
    %1612 = vmatpush1.msra.mxu0 0.0
    %1613 = vmatprep.subr.mxu0 0.0
    %1614 = vmatpush1.msra.mxu0 0.0
    %1615 = vmatprep.mubr.f32.mxu0 0.0
    %1616 = vmatmul.mubr.f32.gmra.mrb[0].mxu0 %v1536
    %v1617 = vpop.f32.mrb[0].mxu0
    %v1618 = vadd.f32 %v1517, %v1617
    %v1619 = vpop.f32.mrb[0].mxu0
    %v1620 = vadd.f32 %v1521, %v1619
    %1621 = vdwg.mxu0
    %1622 = vmatprep.subr.mxu0 %v1549
    %1623 = vmatpush1.msra.mxu0 %v1546
    %1624 = vmatprep.subr.mxu0 0.0
    %1625 = vmatpush1.msra.mxu0 0.0
    %1626 = vmatprep.subr.mxu0 0.0
    %1627 = vmatpush1.msra.mxu0 0.0
    %1628 = vmatprep.subr.mxu0 0.0
    %1629 = vmatpush1.msra.mxu0 0.0
    %1630 = vmatprep.subr.mxu0 0.0
    %1631 = vmatpush1.msra.mxu0 0.0
    %1632 = vmatprep.subr.mxu0 0.0
    %1633 = vmatpush1.msra.mxu0 0.0
    %1634 = vmatprep.subr.mxu0 0.0
    %1635 = vmatpush1.msra.mxu0 0.0
    %1636 = vmatprep.subr.mxu0 0.0
    %1637 = vmatpush1.msra.mxu0 0.0
    %1638 = vmatprep.subr.mxu0 0.0
    %1639 = vmatpush1.msra.mxu0 0.0
    %1640 = vmatprep.subr.mxu0 0.0
    %1641 = vmatpush1.msra.mxu0 0.0
    %1642 = vmatprep.subr.mxu0 0.0
    %1643 = vmatpush1.msra.mxu0 0.0
    %1644 = vmatprep.subr.mxu0 0.0
    %1645 = vmatpush1.msra.mxu0 0.0
    %1646 = vmatprep.subr.mxu0 0.0
    %1647 = vmatpush1.msra.mxu0 0.0
    %1648 = vmatprep.subr.mxu0 0.0
    %1649 = vmatpush1.msra.mxu0 0.0
    %1650 = vmatprep.subr.mxu0 0.0
    %1651 = vmatpush1.msra.mxu0 0.0
    %1652 = vmatprep.subr.mxu0 0.0
    %1653 = vmatpush1.msra.mxu0 0.0
    %1654 = vmatprep.subr.mxu0 0.0
    %1655 = vmatpush1.msra.mxu0 0.0
    %1656 = vmatprep.subr.mxu0 0.0
    %1657 = vmatpush1.msra.mxu0 0.0
    %1658 = vmatprep.subr.mxu0 0.0
    %1659 = vmatpush1.msra.mxu0 0.0
    %1660 = vmatprep.subr.mxu0 0.0
    %1661 = vmatpush1.msra.mxu0 0.0
    %1662 = vmatprep.subr.mxu0 0.0
    %1663 = vmatpush1.msra.mxu0 0.0
    %1664 = vmatprep.subr.mxu0 0.0
    %1665 = vmatpush1.msra.mxu0 0.0
    %1666 = vmatprep.subr.mxu0 0.0
    %1667 = vmatpush1.msra.mxu0 0.0
    %1668 = vmatprep.subr.mxu0 0.0
    %1669 = vmatpush1.msra.mxu0 0.0
    %1670 = vmatprep.subr.mxu0 0.0
    %1671 = vmatpush1.msra.mxu0 0.0
    %1672 = vmatprep.subr.mxu0 0.0
    %1673 = vmatpush1.msra.mxu0 0.0
    %1674 = vmatprep.subr.mxu0 0.0
    %1675 = vmatpush1.msra.mxu0 0.0
    %1676 = vmatprep.subr.mxu0 0.0
    %1677 = vmatpush1.msra.mxu0 0.0
    %1678 = vmatprep.subr.mxu0 0.0
    %1679 = vmatpush1.msra.mxu0 0.0
    %1680 = vmatprep.subr.mxu0 0.0
    %1681 = vmatpush1.msra.mxu0 0.0
    %1682 = vmatprep.subr.mxu0 0.0
    %1683 = vmatpush1.msra.mxu0 0.0
    %1684 = vmatprep.subr.mxu0 0.0
    %1685 = vmatpush1.msra.mxu0 0.0
    %1686 = vmatprep.mubr.f32.mxu0 0.0
    %1687 = vmatmul.mubr.f32.gmra.mrb[0].mxu0 %v1536
    %v1688 = vpop.f32.mrb[0].mxu0
    %v1689 = vadd.f32 %v1525, %v1688
    %v1690 = vpop.f32.mrb[0].mxu0
    %v1691 = vadd.f32 %v1529, %v1690
    %1692 = vdwg.mxu0
    %v1693 = vmax.f32 %v1618, 0.0
    %v1694 = vmax.f32 %v1620, 0.0
    %v1695 = vmax.f32 %v1689, 0.0
    %v1696 = vmax.f32 %v1691, 0.0
    %v1697 = vld [vmem:[%s10] sm:$0xff]
    %v1698 = vld [vmem:[%s10 + $0x8] sm:$0xff]
    %v1699 = vld [vmem:[%s10 + $0x10] sm:$0xff]
    %v1700 = vld [vmem:[%s10 + $0x18] sm:$0xff]
    %v1701 = vld [vmem:[%s10 + $0x20] sm:$0xff]
    %v1702 = vld [vmem:[%s10 + $0x28] sm:$0xff]
    %v1703 = vld [vmem:[%s10 + $0x30] sm:$0xff]
    %v1704 = vld [vmem:[%s10 + $0x38] sm:$0xff]
    %v1705 = vld [vmem:[%s10 + $0x40] sm:$0xff]
    %v1706 = vld [vmem:[%s10 + $0x48] sm:$0xff]
    %v1707 = vld [vmem:[%s10 + $0x50] sm:$0xff]
    %v1708 = vld [vmem:[%s10 + $0x58] sm:$0xff]
    %v1709 = vld [vmem:[%s10 + $0x60] sm:$0xff]
    %v1710 = vld [vmem:[%s10 + $0x68] sm:$0xff]
    %v1711 = vld [vmem:[%s10 + $0x70] sm:$0xff]
    %v1712 = vld [vmem:[%s10 + $0x78] sm:$0xff]
    %v1713 = vld [vmem:[%s10 + $0x80] sm:$0xff]
    %v1714 = vld [vmem:[%s10 + $0x88] sm:$0xff]
    %v1715 = vld [vmem:[%s10 + $0x90] sm:$0xff]
    %v1716 = vld [vmem:[%s10 + $0x98] sm:$0xff]
    %v1717 = vld [vmem:[%s10 + $0xa0] sm:$0xff]
    %v1718 = vld [vmem:[%s10 + $0xa8] sm:$0xff]
    %v1719 = vld [vmem:[%s10 + $0xb0] sm:$0xff]
    %v1720 = vld [vmem:[%s10 + $0xb8] sm:$0xff]
    %v1721 = vld [vmem:[%s10 + $0xc0] sm:$0xff]
    %v1722 = vld [vmem:[%s10 + $0xc8] sm:$0xff]
    %v1723 = vld [vmem:[%s10 + $0xd0] sm:$0xff]
    %v1724 = vld [vmem:[%s10 + $0xd8] sm:$0xff]
    %v1725 = vld [vmem:[%s10 + $0xe0] sm:$0xff]
    %v1726 = vld [vmem:[%s10 + $0xe8] sm:$0xff]
    %v1727 = vld [vmem:[%s10 + $0xf0] sm:$0xff]
    %v1728 = vld [vmem:[%s10 + $0xf8] sm:$0xff]
    %v1729 = vld [vmem:[%s10 + $0x100] sm:$0xff]
    %v1730 = vld [vmem:[%s10 + $0x108] sm:$0xff]
    %v1731 = vld [vmem:[%s10 + $0x110] sm:$0xff]
    %v1732 = vld [vmem:[%s10 + $0x118] sm:$0xff]
    %v1733 = vld [vmem:[%s10 + $0x120] sm:$0xff]
    %v1734 = vld [vmem:[%s10 + $0x128] sm:$0xff]
    %v1735 = vld [vmem:[%s10 + $0x130] sm:$0xff]
    %v1736 = vld [vmem:[%s10 + $0x138] sm:$0xff]
    %v1737 = vld [vmem:[%s10 + $0x140] sm:$0xff]
    %v1738 = vld [vmem:[%s10 + $0x148] sm:$0xff]
    %v1739 = vld [vmem:[%s10 + $0x150] sm:$0xff]
    %v1740 = vld [vmem:[%s10 + $0x158] sm:$0xff]
    %v1741 = vld [vmem:[%s10 + $0x160] sm:$0xff]
    %v1742 = vld [vmem:[%s10 + $0x168] sm:$0xff]
    %v1743 = vld [vmem:[%s10 + $0x170] sm:$0xff]
    %v1744 = vld [vmem:[%s10 + $0x178] sm:$0xff]
    %v1745 = vld [vmem:[%s10 + $0x180] sm:$0xff]
    %v1746 = vld [vmem:[%s10 + $0x188] sm:$0xff]
    %v1747 = vld [vmem:[%s10 + $0x190] sm:$0xff]
    %v1748 = vld [vmem:[%s10 + $0x198] sm:$0xff]
    %v1749 = vld [vmem:[%s10 + $0x1a0] sm:$0xff]
    %v1750 = vld [vmem:[%s10 + $0x1a8] sm:$0xff]
    %v1751 = vld [vmem:[%s10 + $0x1b0] sm:$0xff]
    %v1752 = vld [vmem:[%s10 + $0x1b8] sm:$0xff]
    %v1753 = vld [vmem:[%s10 + $0x1c0] sm:$0xff]
    %v1754 = vld [vmem:[%s10 + $0x1c8] sm:$0xff]
    %v1755 = vld [vmem:[%s10 + $0x1d0] sm:$0xff]
    %v1756 = vld [vmem:[%s10 + $0x1d8] sm:$0xff]
    %v1757 = vld [vmem:[%s10 + $0x1e0] sm:$0xff]
    %v1758 = vld [vmem:[%s10 + $0x1e8] sm:$0xff]
    %v1759 = vld [vmem:[%s10 + $0x1f0] sm:$0xff]
    %v1760 = vld [vmem:[%s10 + $0x1f8] sm:$0xff]
    %v1761 = vld [vmem:[%s10 + $0x200] sm:$0xff]
    %v1762 = vld [vmem:[%s10 + $0x208] sm:$0xff]
    %v1763 = vld [vmem:[%s10 + $0x210] sm:$0xff]
    %v1764 = vld [vmem:[%s10 + $0x218] sm:$0xff]
    %v1765 = vld [vmem:[%s10 + $0x220] sm:$0xff]
    %v1766 = vld [vmem:[%s10 + $0x228] sm:$0xff]
    %v1767 = vld [vmem:[%s10 + $0x230] sm:$0xff]
    %v1768 = vld [vmem:[%s10 + $0x238] sm:$0xff]
    %v1769 = vld [vmem:[%s10 + $0x240] sm:$0xff]
    %v1770 = vld [vmem:[%s10 + $0x248] sm:$0xff]
    %v1771 = vld [vmem:[%s10 + $0x250] sm:$0xff]
    %v1772 = vld [vmem:[%s10 + $0x258] sm:$0xff]
    %v1773 = vld [vmem:[%s10 + $0x260] sm:$0xff]
    %v1774 = vld [vmem:[%s10 + $0x268] sm:$0xff]
    %v1775 = vld [vmem:[%s10 + $0x270] sm:$0xff]
    %v1776 = vld [vmem:[%s10 + $0x278] sm:$0xff]
    %v1777 = vld [vmem:[%s10 + $0x280] sm:$0xff]
    %v1778 = vld [vmem:[%s10 + $0x288] sm:$0xff]
    %v1779 = vld [vmem:[%s10 + $0x290] sm:$0xff]
    %v1780 = vld [vmem:[%s10 + $0x298] sm:$0xff]
    %v1781 = vld [vmem:[%s10 + $0x2a0] sm:$0xff]
    %v1782 = vld [vmem:[%s10 + $0x2a8] sm:$0xff]
    %v1783 = vld [vmem:[%s10 + $0x2b0] sm:$0xff]
    %v1784 = vld [vmem:[%s10 + $0x2b8] sm:$0xff]
    %v1785 = vld [vmem:[%s10 + $0x2c0] sm:$0xff]
    %v1786 = vld [vmem:[%s10 + $0x2c8] sm:$0xff]
    %v1787 = vld [vmem:[%s10 + $0x2d0] sm:$0xff]
    %v1788 = vld [vmem:[%s10 + $0x2d8] sm:$0xff]
    %v1789 = vld [vmem:[%s10 + $0x2e0] sm:$0xff]
    %v1790 = vld [vmem:[%s10 + $0x2e8] sm:$0xff]
    %v1791 = vld [vmem:[%s10 + $0x2f0] sm:$0xff]
    %v1792 = vld [vmem:[%s10 + $0x2f8] sm:$0xff]
    %v1793 = vld [vmem:[%s10 + $0x300] sm:$0xff]
    %v1794 = vld [vmem:[%s10 + $0x308] sm:$0xff]
    %v1795 = vld [vmem:[%s10 + $0x310] sm:$0xff]
    %v1796 = vld [vmem:[%s10 + $0x318] sm:$0xff]
    %v1797 = vld [vmem:[%s10 + $0x320] sm:$0xff]
    %v1798 = vld [vmem:[%s10 + $0x328] sm:$0xff]
    %v1799 = vld [vmem:[%s10 + $0x330] sm:$0xff]
    %v1800 = vld [vmem:[%s10 + $0x338] sm:$0xff]
    %v1801 = vld [vmem:[%s10 + $0x340] sm:$0xff]
    %v1802 = vld [vmem:[%s10 + $0x348] sm:$0xff]
    %v1803 = vld [vmem:[%s10 + $0x350] sm:$0xff]
    %v1804 = vld [vmem:[%s10 + $0x358] sm:$0xff]
    %v1805 = vld [vmem:[%s10 + $0x360] sm:$0xff]
    %v1806 = vld [vmem:[%s10 + $0x368] sm:$0xff]
    %v1807 = vld [vmem:[%s10 + $0x370] sm:$0xff]
    %v1808 = vld [vmem:[%s10 + $0x378] sm:$0xff]
    %v1809 = vld [vmem:[%s10 + $0x380] sm:$0xff]
    %v1810 = vld [vmem:[%s10 + $0x388] sm:$0xff]
    %v1811 = vld [vmem:[%s10 + $0x390] sm:$0xff]
    %v1812 = vld [vmem:[%s10 + $0x398] sm:$0xff]
    %v1813 = vld [vmem:[%s10 + $0x3a0] sm:$0xff]
    %v1814 = vld [vmem:[%s10 + $0x3a8] sm:$0xff]
    %v1815 = vld [vmem:[%s10 + $0x3b0] sm:$0xff]
    %v1816 = vld [vmem:[%s10 + $0x3b8] sm:$0xff]
    %v1817 = vld [vmem:[%s10 + $0x3c0] sm:$0xff]
    %v1818 = vld [vmem:[%s10 + $0x3c8] sm:$0xff]
    %v1819 = vld [vmem:[%s10 + $0x3d0] sm:$0xff]
    %v1820 = vld [vmem:[%s10 + $0x3d8] sm:$0xff]
    %v1821 = vld [vmem:[%s10 + $0x3e0] sm:$0xff]
    %v1822 = vld [vmem:[%s10 + $0x3e8] sm:$0xff]
    %v1823 = vld [vmem:[%s10 + $0x3f0] sm:$0xff]
    %v1824 = vld [vmem:[%s10 + $0x3f8] sm:$0xff]
    %v1825 = vld [vmem:[%s10 + $0x400] sm:$0xff]
    %v1826 = vld [vmem:[%s10 + $0x408] sm:$0xff]
    %v1827 = vld [vmem:[%s10 + $0x410] sm:$0xff]
    %v1828 = vld [vmem:[%s10 + $0x418] sm:$0xff]
    %v1829 = vld [vmem:[%s10 + $0x420] sm:$0xff]
    %v1830 = vld [vmem:[%s10 + $0x428] sm:$0xff]
    %v1831 = vld [vmem:[%s10 + $0x430] sm:$0xff]
    %v1832 = vld [vmem:[%s10 + $0x438] sm:$0xff]
    %v1833 = vld [vmem:[%s10 + $0x440] sm:$0xff]
    %v1834 = vld [vmem:[%s10 + $0x448] sm:$0xff]
    %v1835 = vld [vmem:[%s10 + $0x450] sm:$0xff]
    %v1836 = vld [vmem:[%s10 + $0x458] sm:$0xff]
    %v1837 = vld [vmem:[%s10 + $0x460] sm:$0xff]
    %v1838 = vld [vmem:[%s10 + $0x468] sm:$0xff]
    %v1839 = vld [vmem:[%s10 + $0x470] sm:$0xff]
    %v1840 = vld [vmem:[%s10 + $0x478] sm:$0xff]
    %v1841 = vld [vmem:[%s10 + $0x480] sm:$0xff]
    %v1842 = vld [vmem:[%s10 + $0x488] sm:$0xff]
    %v1843 = vld [vmem:[%s10 + $0x490] sm:$0xff]
    %v1844 = vld [vmem:[%s10 + $0x498] sm:$0xff]
    %v1845 = vld [vmem:[%s10 + $0x4a0] sm:$0xff]
    %v1846 = vld [vmem:[%s10 + $0x4a8] sm:$0xff]
    %v1847 = vld [vmem:[%s10 + $0x4b0] sm:$0xff]
    %v1848 = vld [vmem:[%s10 + $0x4b8] sm:$0xff]
    %v1849 = vld [vmem:[%s10 + $0x4c0] sm:$0xff]
    %v1850 = vld [vmem:[%s10 + $0x4c8] sm:$0xff]
    %v1851 = vld [vmem:[%s10 + $0x4d0] sm:$0xff]
    %v1852 = vld [vmem:[%s10 + $0x4d8] sm:$0xff]
    %v1853 = vld [vmem:[%s10 + $0x4e0] sm:$0xff]
    %v1854 = vld [vmem:[%s10 + $0x4e8] sm:$0xff]
    %v1855 = vld [vmem:[%s10 + $0x4f0] sm:$0xff]
    %v1856 = vld [vmem:[%s10 + $0x4f8] sm:$0xff]
    %v1857 = vld [vmem:[%s10 + $0x500] sm:$0xff]
    %v1858 = vld [vmem:[%s10 + $0x508] sm:$0xff]
    %v1859 = vld [vmem:[%s10 + $0x510] sm:$0xff]
    %v1860 = vld [vmem:[%s10 + $0x518] sm:$0xff]
    %v1861 = vld [vmem:[%s10 + $0x520] sm:$0xff]
    %v1862 = vld [vmem:[%s10 + $0x528] sm:$0xff]
    %v1863 = vld [vmem:[%s10 + $0x530] sm:$0xff]
    %v1864 = vld [vmem:[%s10 + $0x538] sm:$0xff]
    %v1865 = vld [vmem:[%s10 + $0x540] sm:$0xff]
    %v1866 = vld [vmem:[%s10 + $0x548] sm:$0xff]
    %v1867 = vld [vmem:[%s10 + $0x550] sm:$0xff]
    %v1868 = vld [vmem:[%s10 + $0x558] sm:$0xff]
    %v1869 = vld [vmem:[%s10 + $0x560] sm:$0xff]
    %v1870 = vld [vmem:[%s10 + $0x568] sm:$0xff]
    %v1871 = vld [vmem:[%s10 + $0x570] sm:$0xff]
    %v1872 = vld [vmem:[%s10 + $0x578] sm:$0xff]
    %v1873 = vld [vmem:[%s10 + $0x580] sm:$0xff]
    %v1874 = vld [vmem:[%s10 + $0x588] sm:$0xff]
    %v1875 = vld [vmem:[%s10 + $0x590] sm:$0xff]
    %v1876 = vld [vmem:[%s10 + $0x598] sm:$0xff]
    %v1877 = vld [vmem:[%s10 + $0x5a0] sm:$0xff]
    %v1878 = vld [vmem:[%s10 + $0x5a8] sm:$0xff]
    %v1879 = vld [vmem:[%s10 + $0x5b0] sm:$0xff]
    %v1880 = vld [vmem:[%s10 + $0x5b8] sm:$0xff]
    %v1881 = vld [vmem:[%s10 + $0x5c0] sm:$0xff]
    %v1882 = vld [vmem:[%s10 + $0x5c8] sm:$0xff]
    %v1883 = vld [vmem:[%s10 + $0x5d0] sm:$0xff]
    %v1884 = vld [vmem:[%s10 + $0x5d8] sm:$0xff]
    %v1885 = vld [vmem:[%s10 + $0x5e0] sm:$0xff]
    %v1886 = vld [vmem:[%s10 + $0x5e8] sm:$0xff]
    %v1887 = vld [vmem:[%s10 + $0x5f0] sm:$0xff]
    %v1888 = vld [vmem:[%s10 + $0x5f8] sm:$0xff]
    %v1889 = vld [vmem:[%s10 + $0x600] sm:$0xff]
    %v1890 = vld [vmem:[%s10 + $0x608] sm:$0xff]
    %v1891 = vld [vmem:[%s10 + $0x610] sm:$0xff]
    %v1892 = vld [vmem:[%s10 + $0x618] sm:$0xff]
    %v1893 = vld [vmem:[%s10 + $0x620] sm:$0xff]
    %v1894 = vld [vmem:[%s10 + $0x628] sm:$0xff]
    %v1895 = vld [vmem:[%s10 + $0x630] sm:$0xff]
    %v1896 = vld [vmem:[%s10 + $0x638] sm:$0xff]
    %v1897 = vld [vmem:[%s10 + $0x640] sm:$0xff]
    %v1898 = vld [vmem:[%s10 + $0x648] sm:$0xff]
    %v1899 = vld [vmem:[%s10 + $0x650] sm:$0xff]
    %v1900 = vld [vmem:[%s10 + $0x658] sm:$0xff]
    %v1901 = vld [vmem:[%s10 + $0x660] sm:$0xff]
    %v1902 = vld [vmem:[%s10 + $0x668] sm:$0xff]
    %v1903 = vld [vmem:[%s10 + $0x670] sm:$0xff]
    %v1904 = vld [vmem:[%s10 + $0x678] sm:$0xff]
    %v1905 = vld [vmem:[%s10 + $0x680] sm:$0xff]
    %v1906 = vld [vmem:[%s10 + $0x688] sm:$0xff]
    %v1907 = vld [vmem:[%s10 + $0x690] sm:$0xff]
    %v1908 = vld [vmem:[%s10 + $0x698] sm:$0xff]
    %v1909 = vld [vmem:[%s10 + $0x6a0] sm:$0xff]
    %v1910 = vld [vmem:[%s10 + $0x6a8] sm:$0xff]
    %v1911 = vld [vmem:[%s10 + $0x6b0] sm:$0xff]
    %v1912 = vld [vmem:[%s10 + $0x6b8] sm:$0xff]
    %v1913 = vld [vmem:[%s10 + $0x6c0] sm:$0xff]
    %v1914 = vld [vmem:[%s10 + $0x6c8] sm:$0xff]
    %v1915 = vld [vmem:[%s10 + $0x6d0] sm:$0xff]
    %v1916 = vld [vmem:[%s10 + $0x6d8] sm:$0xff]
    %v1917 = vld [vmem:[%s10 + $0x6e0] sm:$0xff]
    %v1918 = vld [vmem:[%s10 + $0x6e8] sm:$0xff]
    %v1919 = vld [vmem:[%s10 + $0x6f0] sm:$0xff]
    %v1920 = vld [vmem:[%s10 + $0x6f8] sm:$0xff]
    %v1921 = vld [vmem:[%s10 + $0x700] sm:$0xff]
    %v1922 = vld [vmem:[%s10 + $0x708] sm:$0xff]
    %v1923 = vld [vmem:[%s10 + $0x710] sm:$0xff]
    %v1924 = vld [vmem:[%s10 + $0x718] sm:$0xff]
    %v1925 = vld [vmem:[%s10 + $0x720] sm:$0xff]
    %v1926 = vld [vmem:[%s10 + $0x728] sm:$0xff]
    %v1927 = vld [vmem:[%s10 + $0x730] sm:$0xff]
    %v1928 = vld [vmem:[%s10 + $0x738] sm:$0xff]
    %v1929 = vld [vmem:[%s10 + $0x740] sm:$0xff]
    %v1930 = vld [vmem:[%s10 + $0x748] sm:$0xff]
    %v1931 = vld [vmem:[%s10 + $0x750] sm:$0xff]
    %v1932 = vld [vmem:[%s10 + $0x758] sm:$0xff]
    %v1933 = vld [vmem:[%s10 + $0x760] sm:$0xff]
    %v1934 = vld [vmem:[%s10 + $0x768] sm:$0xff]
    %v1935 = vld [vmem:[%s10 + $0x770] sm:$0xff]
    %v1936 = vld [vmem:[%s10 + $0x778] sm:$0xff]
    %v1937 = vld [vmem:[%s10 + $0x780] sm:$0xff]
    %v1938 = vld [vmem:[%s10 + $0x788] sm:$0xff]
    %v1939 = vld [vmem:[%s10 + $0x790] sm:$0xff]
    %v1940 = vld [vmem:[%s10 + $0x798] sm:$0xff]
    %v1941 = vld [vmem:[%s10 + $0x7a0] sm:$0xff]
    %v1942 = vld [vmem:[%s10 + $0x7a8] sm:$0xff]
    %v1943 = vld [vmem:[%s10 + $0x7b0] sm:$0xff]
    %v1944 = vld [vmem:[%s10 + $0x7b8] sm:$0xff]
    %v1945 = vld [vmem:[%s10 + $0x7c0] sm:$0xff]
    %v1946 = vld [vmem:[%s10 + $0x7c8] sm:$0xff]
    %v1947 = vld [vmem:[%s10 + $0x7d0] sm:$0xff]
    %v1948 = vld [vmem:[%s10 + $0x7d8] sm:$0xff]
    %v1949 = vld [vmem:[%s10 + $0x7e0] sm:$0xff]
    %v1950 = vld [vmem:[%s10 + $0x7e8] sm:$0xff]
    %v1951 = vld [vmem:[%s10 + $0x7f0] sm:$0xff]
    %v1952 = vld [vmem:[%s10 + $0x7f8] sm:$0xff]
    %v1953 = vld [vmem:[%s10 + $0x800] sm:$0xff]
    %v1954 = vld [vmem:[%s10 + $0x808] sm:$0xff]
    %v1955 = vld [vmem:[%s10 + $0x810] sm:$0xff]
    %v1956 = vld [vmem:[%s10 + $0x818] sm:$0xff]
    %v1957 = vld [vmem:[%s10 + $0x820] sm:$0xff]
    %v1958 = vld [vmem:[%s10 + $0x828] sm:$0xff]
    %v1959 = vld [vmem:[%s10 + $0x830] sm:$0xff]
    %v1960 = vld [vmem:[%s10 + $0x838] sm:$0xff]
    %v1961 = vld [vmem:[%s10 + $0x840] sm:$0xff]
    %v1962 = vld [vmem:[%s10 + $0x848] sm:$0xff]
    %v1963 = vld [vmem:[%s10 + $0x850] sm:$0xff]
    %v1964 = vld [vmem:[%s10 + $0x858] sm:$0xff]
    %v1965 = vld [vmem:[%s10 + $0x860] sm:$0xff]
    %v1966 = vld [vmem:[%s10 + $0x868] sm:$0xff]
    %v1967 = vld [vmem:[%s10 + $0x870] sm:$0xff]
    %v1968 = vld [vmem:[%s10 + $0x878] sm:$0xff]
    %v1969 = vld [vmem:[%s10 + $0x880] sm:$0xff]
    %v1970 = vld [vmem:[%s10 + $0x888] sm:$0xff]
    %v1971 = vld [vmem:[%s10 + $0x890] sm:$0xff]
    %v1972 = vld [vmem:[%s10 + $0x898] sm:$0xff]
    %v1973 = vld [vmem:[%s10 + $0x8a0] sm:$0xff]
    %v1974 = vld [vmem:[%s10 + $0x8a8] sm:$0xff]
    %v1975 = vld [vmem:[%s10 + $0x8b0] sm:$0xff]
    %v1976 = vld [vmem:[%s10 + $0x8b8] sm:$0xff]
    %v1977 = vld [vmem:[%s10 + $0x8c0] sm:$0xff]
    %v1978 = vld [vmem:[%s10 + $0x8c8] sm:$0xff]
    %v1979 = vld [vmem:[%s10 + $0x8d0] sm:$0xff]
    %v1980 = vld [vmem:[%s10 + $0x8d8] sm:$0xff]
    %v1981 = vld [vmem:[%s10 + $0x8e0] sm:$0xff]
    %v1982 = vld [vmem:[%s10 + $0x8e8] sm:$0xff]
    %v1983 = vld [vmem:[%s10 + $0x8f0] sm:$0xff]
    %v1984 = vld [vmem:[%s10 + $0x8f8] sm:$0xff]
    %v1985 = vld [vmem:[%s10 + $0x900] sm:$0xff]
    %v1986 = vld [vmem:[%s10 + $0x908] sm:$0xff]
    %v1987 = vld [vmem:[%s10 + $0x910] sm:$0xff]
    %v1988 = vld [vmem:[%s10 + $0x918] sm:$0xff]
    %v1989 = vld [vmem:[%s10 + $0x920] sm:$0xff]
    %v1990 = vld [vmem:[%s10 + $0x928] sm:$0xff]
    %v1991 = vld [vmem:[%s10 + $0x930] sm:$0xff]
    %v1992 = vld [vmem:[%s10 + $0x938] sm:$0xff]
    %v1993 = vld [vmem:[%s10 + $0x940] sm:$0xff]
    %v1994 = vld [vmem:[%s10 + $0x948] sm:$0xff]
    %v1995 = vld [vmem:[%s10 + $0x950] sm:$0xff]
    %v1996 = vld [vmem:[%s10 + $0x958] sm:$0xff]
    %v1997 = vld [vmem:[%s10 + $0x960] sm:$0xff]
    %v1998 = vld [vmem:[%s10 + $0x968] sm:$0xff]
    %v1999 = vld [vmem:[%s10 + $0x970] sm:$0xff]
    %v2000 = vld [vmem:[%s10 + $0x978] sm:$0xff]
    %v2001 = vld [vmem:[%s10 + $0x980] sm:$0xff]
    %v2002 = vld [vmem:[%s10 + $0x988] sm:$0xff]
    %v2003 = vld [vmem:[%s10 + $0x990] sm:$0xff]
    %v2004 = vld [vmem:[%s10 + $0x998] sm:$0xff]
    %v2005 = vld [vmem:[%s10 + $0x9a0] sm:$0xff]
    %v2006 = vld [vmem:[%s10 + $0x9a8] sm:$0xff]
    %v2007 = vld [vmem:[%s10 + $0x9b0] sm:$0xff]
    %v2008 = vld [vmem:[%s10 + $0x9b8] sm:$0xff]
    %v2009 = vld [vmem:[%s10 + $0x9c0] sm:$0xff]
    %v2010 = vld [vmem:[%s10 + $0x9c8] sm:$0xff]
    %v2011 = vld [vmem:[%s10 + $0x9d0] sm:$0xff]
    %v2012 = vld [vmem:[%s10 + $0x9d8] sm:$0xff]
    %v2013 = vld [vmem:[%s10 + $0x9e0] sm:$0xff]
    %v2014 = vld [vmem:[%s10 + $0x9e8] sm:$0xff]
    %v2015 = vld [vmem:[%s10 + $0x9f0] sm:$0xff]
    %v2016 = vld [vmem:[%s10 + $0x9f8] sm:$0xff]
    %v2017 = vld [vmem:[%s10 + $0xa00] sm:$0xff]
    %v2018 = vld [vmem:[%s10 + $0xa08] sm:$0xff]
    %v2019 = vld [vmem:[%s10 + $0xa10] sm:$0xff]
    %v2020 = vld [vmem:[%s10 + $0xa18] sm:$0xff]
    %v2021 = vld [vmem:[%s10 + $0xa20] sm:$0xff]
    %v2022 = vld [vmem:[%s10 + $0xa28] sm:$0xff]
    %v2023 = vld [vmem:[%s10 + $0xa30] sm:$0xff]
    %v2024 = vld [vmem:[%s10 + $0xa38] sm:$0xff]
    %v2025 = vld [vmem:[%s10 + $0xa40] sm:$0xff]
    %v2026 = vld [vmem:[%s10 + $0xa48] sm:$0xff]
    %v2027 = vld [vmem:[%s10 + $0xa50] sm:$0xff]
    %v2028 = vld [vmem:[%s10 + $0xa58] sm:$0xff]
    %v2029 = vld [vmem:[%s10 + $0xa60] sm:$0xff]
    %v2030 = vld [vmem:[%s10 + $0xa68] sm:$0xff]
    %v2031 = vld [vmem:[%s10 + $0xa70] sm:$0xff]
    %v2032 = vld [vmem:[%s10 + $0xa78] sm:$0xff]
    %v2033 = vld [vmem:[%s10 + $0xa80] sm:$0xff]
    %v2034 = vld [vmem:[%s10 + $0xa88] sm:$0xff]
    %v2035 = vld [vmem:[%s10 + $0xa90] sm:$0xff]
    %v2036 = vld [vmem:[%s10 + $0xa98] sm:$0xff]
    %v2037 = vld [vmem:[%s10 + $0xaa0] sm:$0xff]
    %v2038 = vld [vmem:[%s10 + $0xaa8] sm:$0xff]
    %v2039 = vld [vmem:[%s10 + $0xab0] sm:$0xff]
    %v2040 = vld [vmem:[%s10 + $0xab8] sm:$0xff]
    %v2041 = vld [vmem:[%s10 + $0xac0] sm:$0xff]
    %v2042 = vld [vmem:[%s10 + $0xac8] sm:$0xff]
    %v2043 = vld [vmem:[%s10 + $0xad0] sm:$0xff]
    %v2044 = vld [vmem:[%s10 + $0xad8] sm:$0xff]
    %v2045 = vld [vmem:[%s10 + $0xae0] sm:$0xff]
    %v2046 = vld [vmem:[%s10 + $0xae8] sm:$0xff]
    %v2047 = vld [vmem:[%s10 + $0xaf0] sm:$0xff]
    %v2048 = vld [vmem:[%s10 + $0xaf8] sm:$0xff]
    %v2049 = vld [vmem:[%s10 + $0xb00] sm:$0xff]
    %v2050 = vld [vmem:[%s10 + $0xb08] sm:$0xff]
    %v2051 = vld [vmem:[%s10 + $0xb10] sm:$0xff]
    %v2052 = vld [vmem:[%s10 + $0xb18] sm:$0xff]
    %v2053 = vld [vmem:[%s10 + $0xb20] sm:$0xff]
    %v2054 = vld [vmem:[%s10 + $0xb28] sm:$0xff]
    %v2055 = vld [vmem:[%s10 + $0xb30] sm:$0xff]
    %v2056 = vld [vmem:[%s10 + $0xb38] sm:$0xff]
    %v2057 = vld [vmem:[%s10 + $0xb40] sm:$0xff]
    %v2058 = vld [vmem:[%s10 + $0xb48] sm:$0xff]
    %v2059 = vld [vmem:[%s10 + $0xb50] sm:$0xff]
    %v2060 = vld [vmem:[%s10 + $0xb58] sm:$0xff]
    %v2061 = vld [vmem:[%s10 + $0xb60] sm:$0xff]
    %v2062 = vld [vmem:[%s10 + $0xb68] sm:$0xff]
    %v2063 = vld [vmem:[%s10 + $0xb70] sm:$0xff]
    %v2064 = vld [vmem:[%s10 + $0xb78] sm:$0xff]
    %v2065 = vld [vmem:[%s10 + $0xb80] sm:$0xff]
    %v2066 = vld [vmem:[%s10 + $0xb88] sm:$0xff]
    %v2067 = vld [vmem:[%s10 + $0xb90] sm:$0xff]
    %v2068 = vld [vmem:[%s10 + $0xb98] sm:$0xff]
    %v2069 = vld [vmem:[%s10 + $0xba0] sm:$0xff]
    %v2070 = vld [vmem:[%s10 + $0xba8] sm:$0xff]
    %v2071 = vld [vmem:[%s10 + $0xbb0] sm:$0xff]
    %v2072 = vld [vmem:[%s10 + $0xbb8] sm:$0xff]
    %v2073 = vld [vmem:[%s10 + $0xbc0] sm:$0xff]
    %v2074 = vld [vmem:[%s10 + $0xbc8] sm:$0xff]
    %v2075 = vld [vmem:[%s10 + $0xbd0] sm:$0xff]
    %v2076 = vld [vmem:[%s10 + $0xbd8] sm:$0xff]
    %v2077 = vld [vmem:[%s10 + $0xbe0] sm:$0xff]
    %v2078 = vld [vmem:[%s10 + $0xbe8] sm:$0xff]
    %v2079 = vld [vmem:[%s10 + $0xbf0] sm:$0xff]
    %v2080 = vld [vmem:[%s10 + $0xbf8] sm:$0xff]
    %v2081 = vld [vmem:[%s10 + $0xc00] sm:$0xff]
    %v2082 = vld [vmem:[%s10 + $0xc08] sm:$0xff]
    %v2083 = vld [vmem:[%s10 + $0xc10] sm:$0xff]
    %v2084 = vld [vmem:[%s10 + $0xc18] sm:$0xff]
    %v2085 = vld [vmem:[%s10 + $0xc20] sm:$0xff]
    %v2086 = vld [vmem:[%s10 + $0xc28] sm:$0xff]
    %v2087 = vld [vmem:[%s10 + $0xc30] sm:$0xff]
    %v2088 = vld [vmem:[%s10 + $0xc38] sm:$0xff]
    %v2089 = vld [vmem:[%s10 + $0xc40] sm:$0xff]
    %v2090 = vld [vmem:[%s10 + $0xc48] sm:$0xff]
    %v2091 = vld [vmem:[%s10 + $0xc50] sm:$0xff]
    %v2092 = vld [vmem:[%s10 + $0xc58] sm:$0xff]
    %v2093 = vld [vmem:[%s10 + $0xc60] sm:$0xff]
    %v2094 = vld [vmem:[%s10 + $0xc68] sm:$0xff]
    %v2095 = vld [vmem:[%s10 + $0xc70] sm:$0xff]
    %v2096 = vld [vmem:[%s10 + $0xc78] sm:$0xff]
    %v2097 = vld [vmem:[%s10 + $0xc80] sm:$0xff]
    %v2098 = vld [vmem:[%s10 + $0xc88] sm:$0xff]
    %v2099 = vld [vmem:[%s10 + $0xc90] sm:$0xff]
    %v2100 = vld [vmem:[%s10 + $0xc98] sm:$0xff]
    %v2101 = vld [vmem:[%s10 + $0xca0] sm:$0xff]
    %v2102 = vld [vmem:[%s10 + $0xca8] sm:$0xff]
    %v2103 = vld [vmem:[%s10 + $0xcb0] sm:$0xff]
    %v2104 = vld [vmem:[%s10 + $0xcb8] sm:$0xff]
    %v2105 = vld [vmem:[%s10 + $0xcc0] sm:$0xff]
    %v2106 = vld [vmem:[%s10 + $0xcc8] sm:$0xff]
    %v2107 = vld [vmem:[%s10 + $0xcd0] sm:$0xff]
    %v2108 = vld [vmem:[%s10 + $0xcd8] sm:$0xff]
    %v2109 = vld [vmem:[%s10 + $0xce0] sm:$0xff]
    %v2110 = vld [vmem:[%s10 + $0xce8] sm:$0xff]
    %v2111 = vld [vmem:[%s10 + $0xcf0] sm:$0xff]
    %v2112 = vld [vmem:[%s10 + $0xcf8] sm:$0xff]
    %v2113 = vld [vmem:[%s10 + $0xd00] sm:$0xff]
    %v2114 = vld [vmem:[%s10 + $0xd08] sm:$0xff]
    %v2115 = vld [vmem:[%s10 + $0xd10] sm:$0xff]
    %v2116 = vld [vmem:[%s10 + $0xd18] sm:$0xff]
    %v2117 = vld [vmem:[%s10 + $0xd20] sm:$0xff]
    %v2118 = vld [vmem:[%s10 + $0xd28] sm:$0xff]
    %v2119 = vld [vmem:[%s10 + $0xd30] sm:$0xff]
    %v2120 = vld [vmem:[%s10 + $0xd38] sm:$0xff]
    %v2121 = vld [vmem:[%s10 + $0xd40] sm:$0xff]
    %v2122 = vld [vmem:[%s10 + $0xd48] sm:$0xff]
    %v2123 = vld [vmem:[%s10 + $0xd50] sm:$0xff]
    %v2124 = vld [vmem:[%s10 + $0xd58] sm:$0xff]
    %v2125 = vld [vmem:[%s10 + $0xd60] sm:$0xff]
    %v2126 = vld [vmem:[%s10 + $0xd68] sm:$0xff]
    %v2127 = vld [vmem:[%s10 + $0xd70] sm:$0xff]
    %v2128 = vld [vmem:[%s10 + $0xd78] sm:$0xff]
    %v2129 = vld [vmem:[%s10 + $0xd80] sm:$0xff]
    %v2130 = vld [vmem:[%s10 + $0xd88] sm:$0xff]
    %v2131 = vld [vmem:[%s10 + $0xd90] sm:$0xf]
    %v2132 = vld [vmem:[%s10 + $0xd98] sm:$0xf]
    %v2133 = vld [vmem:[%s10 + $0xda0] sm:$0xf]
    %v2134 = vld [vmem:[%s10 + $0xda8] sm:$0xf]
    %v2135 = vld [vmem:[%s10 + $0xdb0] sm:$0xf]
    %v2136 = vld [vmem:[%s10 + $0xdb8] sm:$0xf]
    %v2137 = vld [vmem:[%s10 + $0xdc0] sm:$0xf]
    %v2138 = vld [vmem:[%s11] sm:$0x7f]
    %v2140 = vlaneseq
    %v2141 = vshrl.u32 %v2140, 7
    %v2142 = vsub.s32 0, %v2141
    %v2143 = vrot.slane %v2138, %v2142
    %v2144 = vlaneseq
    %v2145 = vshrl.u32 %v2144, 7
    %v2146 = vsub.s32 1, %v2145
    %v2147 = vrot.slane %v2138, %v2146
    %v2148 = vlaneseq
    %v2149 = vshrl.u32 %v2148, 7
    %v2150 = vsub.s32 2, %v2149
    %v2151 = vrot.slane %v2138, %v2150
    %v2152 = vlaneseq
    %v2153 = vshrl.u32 %v2152, 7
    %v2154 = vsub.s32 3, %v2153
    %v2155 = vrot.slane %v2138, %v2154
    %v2156 = vlaneseq
    %v2157 = vshrl.u32 %v2156, 7
    %v2158 = vsub.s32 4, %v2157
    %v2159 = vrot.slane %v2138, %v2158
    %v2160 = vlaneseq
    %v2161 = vshrl.u32 %v2160, 7
    %v2162 = vsub.s32 5, %v2161
    %v2163 = vrot.slane %v2138, %v2162
    %v2164 = vlaneseq
    %v2165 = vshrl.u32 %v2164, 7
    %v2166 = vsub.s32 6, %v2165
    %v2167 = vrot.slane %v2138, %v2166
    %v2176 = vsel %vm1144, %v1696, 0
    %v2179 = vsel %vm1148, %v2131, 0
    %v2182 = vsel %vm1148, %v2132, 0
    %v2185 = vsel %vm1148, %v2133, 0
    %v2188 = vsel %vm1148, %v2134, 0
    %v2191 = vsel %vm1148, %v2135, 0
    %v2194 = vsel %vm1148, %v2136, 0
    %v2197 = vsel %vm1148, %v2137, 0
    %2199 = vmatprep.subr.mxu0 %v1698
    %2200 = vmatpush1.msra.mxu0 %v1697
    %2201 = vmatprep.subr.mxu0 %v1705
    %2202 = vmatpush1.msra.mxu0 %v1704
    %2203 = vmatprep.subr.mxu0 %v1712
    %2204 = vmatpush1.msra.mxu0 %v1711
    %2205 = vmatprep.subr.mxu0 %v1719
    %2206 = vmatpush1.msra.mxu0 %v1718
    %2207 = vmatprep.subr.mxu0 %v1726
    %2208 = vmatpush1.msra.mxu0 %v1725
    %2209 = vmatprep.subr.mxu0 %v1733
    %2210 = vmatpush1.msra.mxu0 %v1732
    %2211 = vmatprep.subr.mxu0 %v1740
    %2212 = vmatpush1.msra.mxu0 %v1739
    %2213 = vmatprep.subr.mxu0 %v1747
    %2214 = vmatpush1.msra.mxu0 %v1746
    %2215 = vmatprep.subr.mxu0 %v1754
    %2216 = vmatpush1.msra.mxu0 %v1753
    %2217 = vmatprep.subr.mxu0 %v1761
    %2218 = vmatpush1.msra.mxu0 %v1760
    %2219 = vmatprep.subr.mxu0 %v1768
    %2220 = vmatpush1.msra.mxu0 %v1767
    %2221 = vmatprep.subr.mxu0 %v1775
    %2222 = vmatpush1.msra.mxu0 %v1774
    %2223 = vmatprep.subr.mxu0 %v1782
    %2224 = vmatpush1.msra.mxu0 %v1781
    %2225 = vmatprep.subr.mxu0 %v1789
    %2226 = vmatpush1.msra.mxu0 %v1788
    %2227 = vmatprep.subr.mxu0 %v1796
    %2228 = vmatpush1.msra.mxu0 %v1795
    %2229 = vmatprep.subr.mxu0 %v1803
    %2230 = vmatpush1.msra.mxu0 %v1802
    %2231 = vmatprep.subr.mxu0 %v1810
    %2232 = vmatpush1.msra.mxu0 %v1809
    %2233 = vmatprep.subr.mxu0 %v1817
    %2234 = vmatpush1.msra.mxu0 %v1816
    %2235 = vmatprep.subr.mxu0 %v1824
    %2236 = vmatpush1.msra.mxu0 %v1823
    %2237 = vmatprep.subr.mxu0 %v1831
    %2238 = vmatpush1.msra.mxu0 %v1830
    %2239 = vmatprep.subr.mxu0 %v1838
    %2240 = vmatpush1.msra.mxu0 %v1837
    %2241 = vmatprep.subr.mxu0 %v1845
    %2242 = vmatpush1.msra.mxu0 %v1844
    %2243 = vmatprep.subr.mxu0 %v1852
    %2244 = vmatpush1.msra.mxu0 %v1851
    %2245 = vmatprep.subr.mxu0 %v1859
    %2246 = vmatpush1.msra.mxu0 %v1858
    %2247 = vmatprep.subr.mxu0 %v1866
    %2248 = vmatpush1.msra.mxu0 %v1865
    %2249 = vmatprep.subr.mxu0 %v1873
    %2250 = vmatpush1.msra.mxu0 %v1872
    %2251 = vmatprep.subr.mxu0 %v1880
    %2252 = vmatpush1.msra.mxu0 %v1879
    %2253 = vmatprep.subr.mxu0 %v1887
    %2254 = vmatpush1.msra.mxu0 %v1886
    %2255 = vmatprep.subr.mxu0 %v1894
    %2256 = vmatpush1.msra.mxu0 %v1893
    %2257 = vmatprep.subr.mxu0 %v1901
    %2258 = vmatpush1.msra.mxu0 %v1900
    %2259 = vmatprep.subr.mxu0 %v1908
    %2260 = vmatpush1.msra.mxu0 %v1907
    %2261 = vmatprep.subr.mxu0 %v1915
    %2262 = vmatpush1.msra.mxu0 %v1914
    %2263 = vmatprep.mubr.f32.mxu0 %v1694
    %2264 = vmatmul.mubr.f32.gmra.mrb[0].mxu0 %v1693
    %v2265 = vpop.f32.mrb[0].mxu0
    %v2266 = vadd.f32 %v2143, %v2265
    %v2267 = vpop.f32.mrb[0].mxu0
    %v2268 = vadd.f32 %v2147, %v2267
    %2269 = vdwg.mxu0
    %2270 = vmatprep.subr.mxu0 %v1922
    %2271 = vmatpush1.msra.mxu0 %v1921
    %2272 = vmatprep.subr.mxu0 %v1929
    %2273 = vmatpush1.msra.mxu0 %v1928
    %2274 = vmatprep.subr.mxu0 %v1936
    %2275 = vmatpush1.msra.mxu0 %v1935
    %2276 = vmatprep.subr.mxu0 %v1943
    %2277 = vmatpush1.msra.mxu0 %v1942
    %2278 = vmatprep.subr.mxu0 %v1950
    %2279 = vmatpush1.msra.mxu0 %v1949
    %2280 = vmatprep.subr.mxu0 %v1957
    %2281 = vmatpush1.msra.mxu0 %v1956
    %2282 = vmatprep.subr.mxu0 %v1964
    %2283 = vmatpush1.msra.mxu0 %v1963
    %2284 = vmatprep.subr.mxu0 %v1971
    %2285 = vmatpush1.msra.mxu0 %v1970
    %2286 = vmatprep.subr.mxu0 %v1978
    %2287 = vmatpush1.msra.mxu0 %v1977
    %2288 = vmatprep.subr.mxu0 %v1985
    %2289 = vmatpush1.msra.mxu0 %v1984
    %2290 = vmatprep.subr.mxu0 %v1992
    %2291 = vmatpush1.msra.mxu0 %v1991
    %2292 = vmatprep.subr.mxu0 %v1999
    %2293 = vmatpush1.msra.mxu0 %v1998
    %2294 = vmatprep.subr.mxu0 %v2006
    %2295 = vmatpush1.msra.mxu0 %v2005
    %2296 = vmatprep.subr.mxu0 %v2013
    %2297 = vmatpush1.msra.mxu0 %v2012
    %2298 = vmatprep.subr.mxu0 %v2020
    %2299 = vmatpush1.msra.mxu0 %v2019
    %2300 = vmatprep.subr.mxu0 %v2027
    %2301 = vmatpush1.msra.mxu0 %v2026
    %2302 = vmatprep.subr.mxu0 %v2034
    %2303 = vmatpush1.msra.mxu0 %v2033
    %2304 = vmatprep.subr.mxu0 %v2041
    %2305 = vmatpush1.msra.mxu0 %v2040
    %2306 = vmatprep.subr.mxu0 %v2048
    %2307 = vmatpush1.msra.mxu0 %v2047
    %2308 = vmatprep.subr.mxu0 %v2055
    %2309 = vmatpush1.msra.mxu0 %v2054
    %2310 = vmatprep.subr.mxu0 %v2062
    %2311 = vmatpush1.msra.mxu0 %v2061
    %2312 = vmatprep.subr.mxu0 %v2069
    %2313 = vmatpush1.msra.mxu0 %v2068
    %2314 = vmatprep.subr.mxu0 %v2076
    %2315 = vmatpush1.msra.mxu0 %v2075
    %2316 = vmatprep.subr.mxu0 %v2083
    %2317 = vmatpush1.msra.mxu0 %v2082
    %2318 = vmatprep.subr.mxu0 %v2090
    %2319 = vmatpush1.msra.mxu0 %v2089
    %2320 = vmatprep.subr.mxu0 %v2097
    %2321 = vmatpush1.msra.mxu0 %v2096
    %2322 = vmatprep.subr.mxu0 %v2104
    %2323 = vmatpush1.msra.mxu0 %v2103
    %2324 = vmatprep.subr.mxu0 %v2111
    %2325 = vmatpush1.msra.mxu0 %v2110
    %2326 = vmatprep.subr.mxu0 %v2118
    %2327 = vmatpush1.msra.mxu0 %v2117
    %2328 = vmatprep.subr.mxu0 %v2125
    %2329 = vmatpush1.msra.mxu0 %v2124
    %2330 = vmatprep.subr.mxu0 %v2182
    %2331 = vmatpush1.msra.mxu0 %v2179
    %2332 = vmatprep.subr.mxu0 0.0
    %2333 = vmatpush1.msra.mxu0 0.0
    %2334 = vmatprep.mubr.f32.mxu0 %v2176
    %2335 = vmatmul.mubr.f32.gmra.mrb[0].mxu0 %v1695
    %v2336 = vpop.f32.mrb[0].mxu0
    %v2337 = vadd.f32 %v2266, %v2336
    %v2338 = vpop.f32.mrb[0].mxu0
    %v2339 = vadd.f32 %v2268, %v2338
    %2340 = vdwg.mxu0
    %2341 = vmatprep.subr.mxu0 %v1700
    %2342 = vmatpush1.msra.mxu0 %v1699
    %2343 = vmatprep.subr.mxu0 %v1707
    %2344 = vmatpush1.msra.mxu0 %v1706
    %2345 = vmatprep.subr.mxu0 %v1714
    %2346 = vmatpush1.msra.mxu0 %v1713
    %2347 = vmatprep.subr.mxu0 %v1721
    %2348 = vmatpush1.msra.mxu0 %v1720
    %2349 = vmatprep.subr.mxu0 %v1728
    %2350 = vmatpush1.msra.mxu0 %v1727
    %2351 = vmatprep.subr.mxu0 %v1735
    %2352 = vmatpush1.msra.mxu0 %v1734
    %2353 = vmatprep.subr.mxu0 %v1742
    %2354 = vmatpush1.msra.mxu0 %v1741
    %2355 = vmatprep.subr.mxu0 %v1749
    %2356 = vmatpush1.msra.mxu0 %v1748
    %2357 = vmatprep.subr.mxu0 %v1756
    %2358 = vmatpush1.msra.mxu0 %v1755
    %2359 = vmatprep.subr.mxu0 %v1763
    %2360 = vmatpush1.msra.mxu0 %v1762
    %2361 = vmatprep.subr.mxu0 %v1770
    %2362 = vmatpush1.msra.mxu0 %v1769
    %2363 = vmatprep.subr.mxu0 %v1777
    %2364 = vmatpush1.msra.mxu0 %v1776
    %2365 = vmatprep.subr.mxu0 %v1784
    %2366 = vmatpush1.msra.mxu0 %v1783
    %2367 = vmatprep.subr.mxu0 %v1791
    %2368 = vmatpush1.msra.mxu0 %v1790
    %2369 = vmatprep.subr.mxu0 %v1798
    %2370 = vmatpush1.msra.mxu0 %v1797
    %2371 = vmatprep.subr.mxu0 %v1805
    %2372 = vmatpush1.msra.mxu0 %v1804
    %2373 = vmatprep.subr.mxu0 %v1812
    %2374 = vmatpush1.msra.mxu0 %v1811
    %2375 = vmatprep.subr.mxu0 %v1819
    %2376 = vmatpush1.msra.mxu0 %v1818
    %2377 = vmatprep.subr.mxu0 %v1826
    %2378 = vmatpush1.msra.mxu0 %v1825
    %2379 = vmatprep.subr.mxu0 %v1833
    %2380 = vmatpush1.msra.mxu0 %v1832
    %2381 = vmatprep.subr.mxu0 %v1840
    %2382 = vmatpush1.msra.mxu0 %v1839
    %2383 = vmatprep.subr.mxu0 %v1847
    %2384 = vmatpush1.msra.mxu0 %v1846
    %2385 = vmatprep.subr.mxu0 %v1854
    %2386 = vmatpush1.msra.mxu0 %v1853
    %2387 = vmatprep.subr.mxu0 %v1861
    %2388 = vmatpush1.msra.mxu0 %v1860
    %2389 = vmatprep.subr.mxu0 %v1868
    %2390 = vmatpush1.msra.mxu0 %v1867
    %2391 = vmatprep.subr.mxu0 %v1875
    %2392 = vmatpush1.msra.mxu0 %v1874
    %2393 = vmatprep.subr.mxu0 %v1882
    %2394 = vmatpush1.msra.mxu0 %v1881
    %2395 = vmatprep.subr.mxu0 %v1889
    %2396 = vmatpush1.msra.mxu0 %v1888
    %2397 = vmatprep.subr.mxu0 %v1896
    %2398 = vmatpush1.msra.mxu0 %v1895
    %2399 = vmatprep.subr.mxu0 %v1903
    %2400 = vmatpush1.msra.mxu0 %v1902
    %2401 = vmatprep.subr.mxu0 %v1910
    %2402 = vmatpush1.msra.mxu0 %v1909
    %2403 = vmatprep.subr.mxu0 %v1917
    %2404 = vmatpush1.msra.mxu0 %v1916
    %2405 = vmatprep.mubr.f32.mxu0 %v1694
    %2406 = vmatmul.mubr.f32.gmra.mrb[0].mxu0 %v1693
    %v2407 = vpop.f32.mrb[0].mxu0
    %v2408 = vadd.f32 %v2151, %v2407
    %v2409 = vpop.f32.mrb[0].mxu0
    %v2410 = vadd.f32 %v2155, %v2409
    %2411 = vdwg.mxu0
    %2412 = vmatprep.subr.mxu0 %v1924
    %2413 = vmatpush1.msra.mxu0 %v1923
    %2414 = vmatprep.subr.mxu0 %v1931
    %2415 = vmatpush1.msra.mxu0 %v1930
    %2416 = vmatprep.subr.mxu0 %v1938
    %2417 = vmatpush1.msra.mxu0 %v1937
    %2418 = vmatprep.subr.mxu0 %v1945
    %2419 = vmatpush1.msra.mxu0 %v1944
    %2420 = vmatprep.subr.mxu0 %v1952
    %2421 = vmatpush1.msra.mxu0 %v1951
    %2422 = vmatprep.subr.mxu0 %v1959
    %2423 = vmatpush1.msra.mxu0 %v1958
    %2424 = vmatprep.subr.mxu0 %v1966
    %2425 = vmatpush1.msra.mxu0 %v1965
    %2426 = vmatprep.subr.mxu0 %v1973
    %2427 = vmatpush1.msra.mxu0 %v1972
    %2428 = vmatprep.subr.mxu0 %v1980
    %2429 = vmatpush1.msra.mxu0 %v1979
    %2430 = vmatprep.subr.mxu0 %v1987
    %2431 = vmatpush1.msra.mxu0 %v1986
    %2432 = vmatprep.subr.mxu0 %v1994
    %2433 = vmatpush1.msra.mxu0 %v1993
    %2434 = vmatprep.subr.mxu0 %v2001
    %2435 = vmatpush1.msra.mxu0 %v2000
    %2436 = vmatprep.subr.mxu0 %v2008
    %2437 = vmatpush1.msra.mxu0 %v2007
    %2438 = vmatprep.subr.mxu0 %v2015
    %2439 = vmatpush1.msra.mxu0 %v2014
    %2440 = vmatprep.subr.mxu0 %v2022
    %2441 = vmatpush1.msra.mxu0 %v2021
    %2442 = vmatprep.subr.mxu0 %v2029
    %2443 = vmatpush1.msra.mxu0 %v2028
    %2444 = vmatprep.subr.mxu0 %v2036
    %2445 = vmatpush1.msra.mxu0 %v2035
    %2446 = vmatprep.subr.mxu0 %v2043
    %2447 = vmatpush1.msra.mxu0 %v2042
    %2448 = vmatprep.subr.mxu0 %v2050
    %2449 = vmatpush1.msra.mxu0 %v2049
    %2450 = vmatprep.subr.mxu0 %v2057
    %2451 = vmatpush1.msra.mxu0 %v2056
    %2452 = vmatprep.subr.mxu0 %v2064
    %2453 = vmatpush1.msra.mxu0 %v2063
    %2454 = vmatprep.subr.mxu0 %v2071
    %2455 = vmatpush1.msra.mxu0 %v2070
    %2456 = vmatprep.subr.mxu0 %v2078
    %2457 = vmatpush1.msra.mxu0 %v2077
    %2458 = vmatprep.subr.mxu0 %v2085
    %2459 = vmatpush1.msra.mxu0 %v2084
    %2460 = vmatprep.subr.mxu0 %v2092
    %2461 = vmatpush1.msra.mxu0 %v2091
    %2462 = vmatprep.subr.mxu0 %v2099
    %2463 = vmatpush1.msra.mxu0 %v2098
    %2464 = vmatprep.subr.mxu0 %v2106
    %2465 = vmatpush1.msra.mxu0 %v2105
    %2466 = vmatprep.subr.mxu0 %v2113
    %2467 = vmatpush1.msra.mxu0 %v2112
    %2468 = vmatprep.subr.mxu0 %v2120
    %2469 = vmatpush1.msra.mxu0 %v2119
    %2470 = vmatprep.subr.mxu0 %v2127
    %2471 = vmatpush1.msra.mxu0 %v2126
    %2472 = vmatprep.subr.mxu0 %v2188
    %2473 = vmatpush1.msra.mxu0 %v2185
    %2474 = vmatprep.subr.mxu0 0.0
    %2475 = vmatpush1.msra.mxu0 0.0
    %2476 = vmatprep.mubr.f32.mxu0 %v2176
    %2477 = vmatmul.mubr.f32.gmra.mrb[0].mxu0 %v1695
    %v2478 = vpop.f32.mrb[0].mxu0
    %v2479 = vadd.f32 %v2408, %v2478
    %v2480 = vpop.f32.mrb[0].mxu0
    %v2481 = vadd.f32 %v2410, %v2480
    %2482 = vdwg.mxu0
    %2483 = vmatprep.subr.mxu0 %v1702
    %2484 = vmatpush1.msra.mxu0 %v1701
    %2485 = vmatprep.subr.mxu0 %v1709
    %2486 = vmatpush1.msra.mxu0 %v1708
    %2487 = vmatprep.subr.mxu0 %v1716
    %2488 = vmatpush1.msra.mxu0 %v1715
    %2489 = vmatprep.subr.mxu0 %v1723
    %2490 = vmatpush1.msra.mxu0 %v1722
    %2491 = vmatprep.subr.mxu0 %v1730
    %2492 = vmatpush1.msra.mxu0 %v1729
    %2493 = vmatprep.subr.mxu0 %v1737
    %2494 = vmatpush1.msra.mxu0 %v1736
    %2495 = vmatprep.subr.mxu0 %v1744
    %2496 = vmatpush1.msra.mxu0 %v1743
    %2497 = vmatprep.subr.mxu0 %v1751
    %2498 = vmatpush1.msra.mxu0 %v1750
    %2499 = vmatprep.subr.mxu0 %v1758
    %2500 = vmatpush1.msra.mxu0 %v1757
    %2501 = vmatprep.subr.mxu0 %v1765
    %2502 = vmatpush1.msra.mxu0 %v1764
    %2503 = vmatprep.subr.mxu0 %v1772
    %2504 = vmatpush1.msra.mxu0 %v1771
    %2505 = vmatprep.subr.mxu0 %v1779
    %2506 = vmatpush1.msra.mxu0 %v1778
    %2507 = vmatprep.subr.mxu0 %v1786
    %2508 = vmatpush1.msra.mxu0 %v1785
    %2509 = vmatprep.subr.mxu0 %v1793
    %2510 = vmatpush1.msra.mxu0 %v1792
    %2511 = vmatprep.subr.mxu0 %v1800
    %2512 = vmatpush1.msra.mxu0 %v1799
    %2513 = vmatprep.subr.mxu0 %v1807
    %2514 = vmatpush1.msra.mxu0 %v1806
    %2515 = vmatprep.subr.mxu0 %v1814
    %2516 = vmatpush1.msra.mxu0 %v1813
    %2517 = vmatprep.subr.mxu0 %v1821
    %2518 = vmatpush1.msra.mxu0 %v1820
    %2519 = vmatprep.subr.mxu0 %v1828
    %2520 = vmatpush1.msra.mxu0 %v1827
    %2521 = vmatprep.subr.mxu0 %v1835
    %2522 = vmatpush1.msra.mxu0 %v1834
    %2523 = vmatprep.subr.mxu0 %v1842
    %2524 = vmatpush1.msra.mxu0 %v1841
    %2525 = vmatprep.subr.mxu0 %v1849
    %2526 = vmatpush1.msra.mxu0 %v1848
    %2527 = vmatprep.subr.mxu0 %v1856
    %2528 = vmatpush1.msra.mxu0 %v1855
    %2529 = vmatprep.subr.mxu0 %v1863
    %2530 = vmatpush1.msra.mxu0 %v1862
    %2531 = vmatprep.subr.mxu0 %v1870
    %2532 = vmatpush1.msra.mxu0 %v1869
    %2533 = vmatprep.subr.mxu0 %v1877
    %2534 = vmatpush1.msra.mxu0 %v1876
    %2535 = vmatprep.subr.mxu0 %v1884
    %2536 = vmatpush1.msra.mxu0 %v1883
    %2537 = vmatprep.subr.mxu0 %v1891
    %2538 = vmatpush1.msra.mxu0 %v1890
    %2539 = vmatprep.subr.mxu0 %v1898
    %2540 = vmatpush1.msra.mxu0 %v1897
    %2541 = vmatprep.subr.mxu0 %v1905
    %2542 = vmatpush1.msra.mxu0 %v1904
    %2543 = vmatprep.subr.mxu0 %v1912
    %2544 = vmatpush1.msra.mxu0 %v1911
    %2545 = vmatprep.subr.mxu0 %v1919
    %2546 = vmatpush1.msra.mxu0 %v1918
    %2547 = vmatprep.mubr.f32.mxu0 %v1694
    %2548 = vmatmul.mubr.f32.gmra.mrb[0].mxu0 %v1693
    %v2549 = vpop.f32.mrb[0].mxu0
    %v2550 = vadd.f32 %v2159, %v2549
    %v2551 = vpop.f32.mrb[0].mxu0
    %v2552 = vadd.f32 %v2163, %v2551
    %2553 = vdwg.mxu0
    %2554 = vmatprep.subr.mxu0 %v1926
    %2555 = vmatpush1.msra.mxu0 %v1925
    %2556 = vmatprep.subr.mxu0 %v1933
    %2557 = vmatpush1.msra.mxu0 %v1932
    %2558 = vmatprep.subr.mxu0 %v1940
    %2559 = vmatpush1.msra.mxu0 %v1939
    %2560 = vmatprep.subr.mxu0 %v1947
    %2561 = vmatpush1.msra.mxu0 %v1946
    %2562 = vmatprep.subr.mxu0 %v1954
    %2563 = vmatpush1.msra.mxu0 %v1953
    %2564 = vmatprep.subr.mxu0 %v1961
    %2565 = vmatpush1.msra.mxu0 %v1960
    %2566 = vmatprep.subr.mxu0 %v1968
    %2567 = vmatpush1.msra.mxu0 %v1967
    %2568 = vmatprep.subr.mxu0 %v1975
    %2569 = vmatpush1.msra.mxu0 %v1974
    %2570 = vmatprep.subr.mxu0 %v1982
    %2571 = vmatpush1.msra.mxu0 %v1981
    %2572 = vmatprep.subr.mxu0 %v1989
    %2573 = vmatpush1.msra.mxu0 %v1988
    %2574 = vmatprep.subr.mxu0 %v1996
    %2575 = vmatpush1.msra.mxu0 %v1995
    %2576 = vmatprep.subr.mxu0 %v2003
    %2577 = vmatpush1.msra.mxu0 %v2002
    %2578 = vmatprep.subr.mxu0 %v2010
    %2579 = vmatpush1.msra.mxu0 %v2009
    %2580 = vmatprep.subr.mxu0 %v2017
    %2581 = vmatpush1.msra.mxu0 %v2016
    %2582 = vmatprep.subr.mxu0 %v2024
    %2583 = vmatpush1.msra.mxu0 %v2023
    %2584 = vmatprep.subr.mxu0 %v2031
    %2585 = vmatpush1.msra.mxu0 %v2030
    %2586 = vmatprep.subr.mxu0 %v2038
    %2587 = vmatpush1.msra.mxu0 %v2037
    %2588 = vmatprep.subr.mxu0 %v2045
    %2589 = vmatpush1.msra.mxu0 %v2044
    %2590 = vmatprep.subr.mxu0 %v2052
    %2591 = vmatpush1.msra.mxu0 %v2051
    %2592 = vmatprep.subr.mxu0 %v2059
    %2593 = vmatpush1.msra.mxu0 %v2058
    %2594 = vmatprep.subr.mxu0 %v2066
    %2595 = vmatpush1.msra.mxu0 %v2065
    %2596 = vmatprep.subr.mxu0 %v2073
    %2597 = vmatpush1.msra.mxu0 %v2072
    %2598 = vmatprep.subr.mxu0 %v2080
    %2599 = vmatpush1.msra.mxu0 %v2079
    %2600 = vmatprep.subr.mxu0 %v2087
    %2601 = vmatpush1.msra.mxu0 %v2086
    %2602 = vmatprep.subr.mxu0 %v2094
    %2603 = vmatpush1.msra.mxu0 %v2093
    %2604 = vmatprep.subr.mxu0 %v2101
    %2605 = vmatpush1.msra.mxu0 %v2100
    %2606 = vmatprep.subr.mxu0 %v2108
    %2607 = vmatpush1.msra.mxu0 %v2107
    %2608 = vmatprep.subr.mxu0 %v2115
    %2609 = vmatpush1.msra.mxu0 %v2114
    %2610 = vmatprep.subr.mxu0 %v2122
    %2611 = vmatpush1.msra.mxu0 %v2121
    %2612 = vmatprep.subr.mxu0 %v2129
    %2613 = vmatpush1.msra.mxu0 %v2128
    %2614 = vmatprep.subr.mxu0 %v2194
    %2615 = vmatpush1.msra.mxu0 %v2191
    %2616 = vmatprep.subr.mxu0 0.0
    %2617 = vmatpush1.msra.mxu0 0.0
    %2618 = vmatprep.mubr.f32.mxu0 %v2176
    %2619 = vmatmul.mubr.f32.gmra.mrb[0].mxu0 %v1695
    %v2620 = vpop.f32.mrb[0].mxu0
    %v2621 = vadd.f32 %v2550, %v2620
    %v2622 = vpop.f32.mrb[0].mxu0
    %v2623 = vadd.f32 %v2552, %v2622
    %2624 = vdwg.mxu0
    %2625 = vmatprep.subr.mxu0 0.0
    %2626 = vmatpush1.msra.mxu0 %v1703
    %2627 = vmatprep.subr.mxu0 0.0
    %2628 = vmatpush1.msra.mxu0 %v1710
    %2629 = vmatprep.subr.mxu0 0.0
    %2630 = vmatpush1.msra.mxu0 %v1717
    %2631 = vmatprep.subr.mxu0 0.0
    %2632 = vmatpush1.msra.mxu0 %v1724
    %2633 = vmatprep.subr.mxu0 0.0
    %2634 = vmatpush1.msra.mxu0 %v1731
    %2635 = vmatprep.subr.mxu0 0.0
    %2636 = vmatpush1.msra.mxu0 %v1738
    %2637 = vmatprep.subr.mxu0 0.0
    %2638 = vmatpush1.msra.mxu0 %v1745
    %2639 = vmatprep.subr.mxu0 0.0
    %2640 = vmatpush1.msra.mxu0 %v1752
    %2641 = vmatprep.subr.mxu0 0.0
    %2642 = vmatpush1.msra.mxu0 %v1759
    %2643 = vmatprep.subr.mxu0 0.0
    %2644 = vmatpush1.msra.mxu0 %v1766
    %2645 = vmatprep.subr.mxu0 0.0
    %2646 = vmatpush1.msra.mxu0 %v1773
    %2647 = vmatprep.subr.mxu0 0.0
    %2648 = vmatpush1.msra.mxu0 %v1780
    %2649 = vmatprep.subr.mxu0 0.0
    %2650 = vmatpush1.msra.mxu0 %v1787
    %2651 = vmatprep.subr.mxu0 0.0
    %2652 = vmatpush1.msra.mxu0 %v1794
    %2653 = vmatprep.subr.mxu0 0.0
    %2654 = vmatpush1.msra.mxu0 %v1801
    %2655 = vmatprep.subr.mxu0 0.0
    %2656 = vmatpush1.msra.mxu0 %v1808
    %2657 = vmatprep.subr.mxu0 0.0
    %2658 = vmatpush1.msra.mxu0 %v1815
    %2659 = vmatprep.subr.mxu0 0.0
    %2660 = vmatpush1.msra.mxu0 %v1822
    %2661 = vmatprep.subr.mxu0 0.0
    %2662 = vmatpush1.msra.mxu0 %v1829
    %2663 = vmatprep.subr.mxu0 0.0
    %2664 = vmatpush1.msra.mxu0 %v1836
    %2665 = vmatprep.subr.mxu0 0.0
    %2666 = vmatpush1.msra.mxu0 %v1843
    %2667 = vmatprep.subr.mxu0 0.0
    %2668 = vmatpush1.msra.mxu0 %v1850
    %2669 = vmatprep.subr.mxu0 0.0
    %2670 = vmatpush1.msra.mxu0 %v1857
    %2671 = vmatprep.subr.mxu0 0.0
    %2672 = vmatpush1.msra.mxu0 %v1864
    %2673 = vmatprep.subr.mxu0 0.0
    %2674 = vmatpush1.msra.mxu0 %v1871
    %2675 = vmatprep.subr.mxu0 0.0
    %2676 = vmatpush1.msra.mxu0 %v1878
    %2677 = vmatprep.subr.mxu0 0.0
    %2678 = vmatpush1.msra.mxu0 %v1885
    %2679 = vmatprep.subr.mxu0 0.0
    %2680 = vmatpush1.msra.mxu0 %v1892
    %2681 = vmatprep.subr.mxu0 0.0
    %2682 = vmatpush1.msra.mxu0 %v1899
    %2683 = vmatprep.subr.mxu0 0.0
    %2684 = vmatpush1.msra.mxu0 %v1906
    %2685 = vmatprep.subr.mxu0 0.0
    %2686 = vmatpush1.msra.mxu0 %v1913
    %2687 = vmatprep.subr.mxu0 0.0
    %2688 = vmatpush1.msra.mxu0 %v1920
    %2689 = vmatprep.mubr.f32.mxu0 %v1694
    %2690 = vmatmul.mubr.f32.gmra.mrb[0].mxu0 %v1693
    %v2691 = vpop.f32.mrb[0].mxu0
    %v2692 = vadd.f32 %v2167, %v2691
    %v2693 = vpop.f32.mrb[0].mxu0
    %2694 = vdwg.mxu0
    %2695 = vmatprep.subr.mxu0 0.0
    %2696 = vmatpush1.msra.mxu0 %v1927
    %2697 = vmatprep.subr.mxu0 0.0
    %2698 = vmatpush1.msra.mxu0 %v1934
    %2699 = vmatprep.subr.mxu0 0.0
    %2700 = vmatpush1.msra.mxu0 %v1941
    %2701 = vmatprep.subr.mxu0 0.0
    %2702 = vmatpush1.msra.mxu0 %v1948
    %2703 = vmatprep.subr.mxu0 0.0
    %2704 = vmatpush1.msra.mxu0 %v1955
    %2705 = vmatprep.subr.mxu0 0.0
    %2706 = vmatpush1.msra.mxu0 %v1962
    %2707 = vmatprep.subr.mxu0 0.0
    %2708 = vmatpush1.msra.mxu0 %v1969
    %2709 = vmatprep.subr.mxu0 0.0
    %2710 = vmatpush1.msra.mxu0 %v1976
    %2711 = vmatprep.subr.mxu0 0.0
    %2712 = vmatpush1.msra.mxu0 %v1983
    %2713 = vmatprep.subr.mxu0 0.0
    %2714 = vmatpush1.msra.mxu0 %v1990
    %2715 = vmatprep.subr.mxu0 0.0
    %2716 = vmatpush1.msra.mxu0 %v1997
    %2717 = vmatprep.subr.mxu0 0.0
    %2718 = vmatpush1.msra.mxu0 %v2004
    %2719 = vmatprep.subr.mxu0 0.0
    %2720 = vmatpush1.msra.mxu0 %v2011
    %2721 = vmatprep.subr.mxu0 0.0
    %2722 = vmatpush1.msra.mxu0 %v2018
    %2723 = vmatprep.subr.mxu0 0.0
    %2724 = vmatpush1.msra.mxu0 %v2025
    %2725 = vmatprep.subr.mxu0 0.0
    %2726 = vmatpush1.msra.mxu0 %v2032
    %2727 = vmatprep.subr.mxu0 0.0
    %2728 = vmatpush1.msra.mxu0 %v2039
    %2729 = vmatprep.subr.mxu0 0.0
    %2730 = vmatpush1.msra.mxu0 %v2046
    %2731 = vmatprep.subr.mxu0 0.0
    %2732 = vmatpush1.msra.mxu0 %v2053
    %2733 = vmatprep.subr.mxu0 0.0
    %2734 = vmatpush1.msra.mxu0 %v2060
    %2735 = vmatprep.subr.mxu0 0.0
    %2736 = vmatpush1.msra.mxu0 %v2067
    %2737 = vmatprep.subr.mxu0 0.0
    %2738 = vmatpush1.msra.mxu0 %v2074
    %2739 = vmatprep.subr.mxu0 0.0
    %2740 = vmatpush1.msra.mxu0 %v2081
    %2741 = vmatprep.subr.mxu0 0.0
    %2742 = vmatpush1.msra.mxu0 %v2088
    %2743 = vmatprep.subr.mxu0 0.0
    %2744 = vmatpush1.msra.mxu0 %v2095
    %2745 = vmatprep.subr.mxu0 0.0
    %2746 = vmatpush1.msra.mxu0 %v2102
    %2747 = vmatprep.subr.mxu0 0.0
    %2748 = vmatpush1.msra.mxu0 %v2109
    %2749 = vmatprep.subr.mxu0 0.0
    %2750 = vmatpush1.msra.mxu0 %v2116
    %2751 = vmatprep.subr.mxu0 0.0
    %2752 = vmatpush1.msra.mxu0 %v2123
    %2753 = vmatprep.subr.mxu0 0.0
    %2754 = vmatpush1.msra.mxu0 %v2130
    %2755 = vmatprep.subr.mxu0 0.0
    %2756 = vmatpush1.msra.mxu0 %v2197
    %2757 = vmatprep.subr.mxu0 0.0
    %2758 = vmatpush1.msra.mxu0 0.0
    %2759 = vmatprep.mubr.f32.mxu0 %v2176
    %2760 = vmatmul.mubr.f32.gmra.mrb[0].mxu0 %v1695
    %v2761 = vpop.f32.mrb[0].mxu0
    %v2762 = vadd.f32 %v2692, %v2761
    %v2763 = vpop.f32.mrb[0].mxu0
    %2764 = vdwg.mxu0
    %v2765 = vmax.f32 %v2337, 0.0
    %v2766 = vmax.f32 %v2339, 0.0
    %v2767 = vmax.f32 %v2479, 0.0
    %v2768 = vmax.f32 %v2481, 0.0
    %v2769 = vmax.f32 %v2621, 0.0
    %v2770 = vmax.f32 %v2623, 0.0
    %v2771 = vmax.f32 %v2762, 0.0
    %v2779 = vcombine.low %v2765, %v2766
    %v2780 = vcombine.low %v2767, %v2768
    %v2782 = vunpack.c.l.s4 1983009808
    %v2783 = vunpack.c.0.s8 %v2782
    %v2784 = vlaneseq
    %v2785 = vshrl.u32 %v2784, 7
    %v2786 = vsub.s32 %v2783, %v2785
    %v2787 = vrot.slane %v2779, %v2786
    %v2789 = vunpack.c.l.s4 1983009808
    %v2790 = vunpack.c.0.s8 %v2789
    %v2791 = vlaneseq
    %v2792 = vshrl.u32 %v2791, 7
    %v2793 = vsub.s32 %v2790, %v2792
    %v2794 = vrot.slane %v2780, %v2793
    %v2795 = vcombine.low %v2787, %v2794
    %v2796 = vcombine.low %v2769, %v2770
    %v2798 = vunpack.c.l.s4 1983009808
    %v2799 = vunpack.c.0.s8 %v2798
    %v2800 = vlaneseq
    %v2801 = vshrl.u32 %v2800, 7
    %v2802 = vsub.s32 %v2799, %v2801
    %v2803 = vrot.slane %v2796, %v2802
    %v2805 = vunpack.c.l.s4 1983009808
    %v2806 = vunpack.c.0.s8 %v2805
    %v2807 = vlaneseq
    %v2808 = vshrl.u32 %v2807, 7
    %v2809 = vsub.s32 %v2806, %v2808
    %v2810 = vrot.slane %v2771, %v2809
    %v2811 = vcombine.low %v2803, %v2810
    %2814 = vst [vmem:[#allocation2] sm:$0xff] %v2795
    %vm2815 = vcmask 1041408
    %vm2816 = vcmask 1043458
    %vm2817 = vmor %vm2816, %vm2815
    %vm2818 = vcmask 128004
    %vm2819 = vmor %vm2818, %vm2817
    %2820 = vst.msk [vmem:[#allocation2 + $0x8] sm:$0x3f] %vm2819, %v2811
    // Predicated region
    $region50: #{vae_forward.1} parent=1 // pred_check
      _
    $region51: #{vae_forward.1} parent=1 // pred_check_branch
      %2822 = sbr.rel (0) target = $region53
    $region52: #{vae_forward.1} parent=1 // pred_region
      %s2824 = ssub.s32 224, 224
      %2825 = vsyncadd [#allocation3], %s2824
      %s2827 = sshll.u32 [#allocation2], 4
      %s2828 = int_to_ptr.vmem [resolvable:$true] %s2827
      %2830 = dma.vmem_to_hbm [thread:$0]  %s2828, 224, %s12, [#allocation3]
    $region53: #{vae_forward.1} parent=1 // pred_fallthru
      _
    // Predicated region
    $region54: #{vae_forward.1} parent=1 // pred_check
      _
    $region55: #{vae_forward.1} parent=1 // pred_check_branch
      %2832 = sbr.rel (0) target = $region57
    $region56: #{vae_forward.1} parent=1 // pred_region
      %2833 = dma.done [#allocation3], 224
    $region57: #{vae_forward.1} parent=1 // pred_fallthru
      _
    %2834 = vsyncpa [#allocation3], 1

</llo_original>
